<compile_context>
chip_gen: v6e
topology: v6e:2x2x1
jax: 0.10.0
libtpu: 0.0.40
codegen_flags: <defaults>
</compile_context>

<pallas_src>
import jax
import jax.numpy as jnp
from jax import lax
from jax.experimental import pallas as pl
from jax.experimental.pallas import tpu as pltpu

DIM = 128        # original module: 512
SEQ = 128
BATCH = 4
B_PER_STEP = 2   # batch elements per grid step -> M = B_PER_STEP * SEQ = 256
KSIZE = 5
PAD = (KSIZE - 1) // 2
INTERIOR = 8     # interior start row in the padded scratch (sublane aligned)


def resblock_d_kernel(x_ref, w1_ref, b1_ref, w2_ref, b2_ref, o_ref, pad_ref):
    """Two batch elements per grid step.

    x_ref  : (NB, L, C)        f32 input tile (NLC layout)
    w*_ref : (K*C, C)          bf16 stacked per-tap matrices, W[t*C + ci, co]
    b*_ref : (1, C)            f32 biases
    o_ref  : (NB, L, C)        output tile
    pad_ref: (NB, L + 16, C)   bf16 scratch, interior at rows [8, 8+L),
                               shared by both convs, halos zeroed once.
    """
    NB, L, C = x_ref.shape

    # Zero only the halo bands, only on the first grid step (interior rows are
    # fully overwritten every conv; scratch persists across grid iterations).
    @pl.when(pl.program_id(0) == 0)
    def _zero_halos():
        pad_ref[:, 0:INTERIOR, :] = jnp.zeros((NB, INTERIOR, C), jnp.bfloat16)
        pad_ref[:, INTERIOR + L:INTERIOR + L + 8, :] = jnp.zeros(
            (NB, 8, C), jnp.bfloat16)

    def relu_conv(act_f32, w_ref, b_ref):
        # ReLU in f32, single f32->bf16 cast on the aligned interior store.
        pad_ref[:, INTERIOR:INTERIOR + L, :] = (
            jnp.maximum(act_f32, 0.0).astype(jnp.bfloat16))
        # im2col: K shifted slices (each stacking the NB batch elements along
        # rows) concatenated along channels -> one wide-K bf16 matmul with
        # f32 accumulation on the MXU, M = NB*L rows.
        cols = []
        for t in range(KSIZE):
            tap = pad_ref[:, pl.ds(INTERIOR - PAD + t, L), :]      # (NB, L, C)
            cols.append(tap.reshape(NB * L, C))
        im2col = jnp.concatenate(cols, axis=1)                     # (NB*L, K*C)
        y = jnp.dot(im2col, w_ref[...],
                    preferred_element_type=jnp.float32)            # (NB*L, C)
        return (y + b_ref[0]).reshape(NB, L, C)

    h1 = relu_conv(x_ref[...], w1_ref, b1_ref)
    h2 = relu_conv(h1, w2_ref, b2_ref)

    # Residual epilogue in f32: re-read x from VMEM here (keeps it out of
    # vregs across the two convs).
    o_ref[...] = (x_ref[...] + 0.3 * h2).astype(o_ref.dtype)


def resblock_d(x_nlc, w1_stacked, b1, w2_stacked, b2):
    B, L, C = x_nlc.shape
    KC = w1_stacked.shape[0]
    nb = B_PER_STEP
    assert B % nb == 0

    flops = 4 * B * L * KC * C                 # 2 convs, 2 flops / MAC
    bytes_accessed = (2 * B * L * C * 4        # activations in + out (f32)
                      + 2 * KC * C * 2         # two bf16 weight stacks
                      + 2 * C * 4)             # biases

    return pl.pallas_call(
        resblock_d_kernel,
        out_shape=jax.ShapeDtypeStruct((B, L, C), x_nlc.dtype),
        grid_spec=pltpu.PrefetchScalarGridSpec(
            num_scalar_prefetch=0,
            grid=(B // nb,),
            in_specs=[
                pl.BlockSpec((nb, L, C), lambda b: (b, 0, 0)),   # x
                pl.BlockSpec((KC, C),    lambda b: (0, 0)),      # w1 stacked
                pl.BlockSpec((1, C),     lambda b: (0, 0)),      # b1
                pl.BlockSpec((KC, C),    lambda b: (0, 0)),      # w2 stacked
                pl.BlockSpec((1, C),     lambda b: (0, 0)),      # b2
            ],
            out_specs=pl.BlockSpec((nb, L, C), lambda b: (b, 0, 0)),
            scratch_shapes=[
                pltpu.VMEM((nb, L + 2 * INTERIOR, C), jnp.bfloat16),
            ],
        ),
        compiler_params=pltpu.CompilerParams(
            dimension_semantics=("parallel",)),
        cost_estimate=pl.CostEstimate(flops=flops, transcendentals=0,
                                      bytes_accessed=bytes_accessed),
    )(x_nlc, w1_stacked, b1.reshape(1, C), w2_stacked, b2.reshape(1, C))


def reference(x_ncl, w1_oik, b1, w2_oik, b2):
    """Pure-JAX f32 reference in PyTorch's NCL layout."""
    def conv1d(h, w, b):
        y = lax.conv_general_dilated(
            h, w, window_strides=(1,), padding=[(PAD, PAD)],
            dimension_numbers=("NCH", "OIH", "NCH"))
        return y + b[None, :, None]
    h = jnp.maximum(x_ncl, 0.0)
    h = conv1d(h, w1_oik, b1)
    h = jnp.maximum(h, 0.0)
    h = conv1d(h, w2_oik, b2)
    return x_ncl + 0.3 * h


if __name__ == "__main__":
    key = jax.random.PRNGKey(0)
    kx, kw1, kb1, kw2, kb2 = jax.random.split(key, 5)

    # input in PyTorch layout (N, C, L)
    x_ncl = jax.random.normal(kx, (BATCH, DIM, SEQ), dtype=jnp.float32)

    # Conv1d default init: uniform(-bound, bound), bound = 1/sqrt(C_in * K)
    bound = 1.0 / (DIM * KSIZE) ** 0.5
    w1_oik = jax.random.uniform(kw1, (DIM, DIM, KSIZE), jnp.float32, -bound, bound)
    b1 = jax.random.uniform(kb1, (DIM,), jnp.float32, -bound, bound)
    w2_oik = jax.random.uniform(kw2, (DIM, DIM, KSIZE), jnp.float32, -bound, bound)
    b2 = jax.random.uniform(kb2, (DIM,), jnp.float32, -bound, bound)

    # kernel layouts: x -> NLC, weights -> stacked (K*C_in, C_out) in bf16
    x_nlc = jnp.transpose(x_ncl, (0, 2, 1))
    w1_stacked = jnp.transpose(w1_oik, (2, 1, 0)).reshape(KSIZE * DIM, DIM)
    w2_stacked = jnp.transpose(w2_oik, (2, 1, 0)).reshape(KSIZE * DIM, DIM)
    w1_stacked = w1_stacked.astype(jnp.bfloat16)
    w2_stacked = w2_stacked.astype(jnp.bfloat16)

    out_nlc = jax.block_until_ready(
        resblock_d(x_nlc, w1_stacked, b1, w2_stacked, b2))
    out_ncl = jnp.transpose(out_nlc, (0, 2, 1))

    ref = reference(x_ncl, w1_oik, b1, w2_oik, b2)
    max_err = float(jnp.max(jnp.abs(out_ncl - ref)))
    # bf16 matmul operands vs f32 reference -> loosened tolerance
    assert jnp.allclose(out_ncl, ref, atol=3e-2, rtol=3e-2), max_err

    print("KERNEL_OK")
</pallas_src>

<mosaic_0001>
module attributes {stable_mosaic.version = 11 : i64} {
  func.func @resblock_d_kernel(%arg0: i32, %arg1: memref<2x128x128xf32, #tpu.memory_space<vmem>>, %arg2: memref<640x128xbf16, #tpu.memory_space<vmem>>, %arg3: memref<1x128xf32, #tpu.memory_space<vmem>>, %arg4: memref<640x128xbf16, #tpu.memory_space<vmem>>, %arg5: memref<1x128xf32, #tpu.memory_space<vmem>>, %arg6: memref<2x128x128xf32, #tpu.memory_space<vmem>>, %arg7: memref<2x144x128xbf16, #tpu.memory_space<vmem>>) attributes {dimension_semantics = [#tpu.dimension_semantics<parallel>], iteration_bounds = array<i64: 2>, scalar_prefetch = 0 : i64, scratch_operands = 1 : i64, tpu.core_type = #tpu.core_type<tc>, window_params = [{transform_indices = @transform_0, window_bounds = array<i64: 2, 128, 128>}, {pipeline_mode = #tpu.pipeline_mode<synchronous>, transform_indices = @transform_1, window_bounds = array<i64: 640, 128>}, {pipeline_mode = #tpu.pipeline_mode<synchronous>, transform_indices = @transform_2, window_bounds = array<i64: 1, 128>}, {pipeline_mode = #tpu.pipeline_mode<synchronous>, transform_indices = @transform_3, window_bounds = array<i64: 640, 128>}, {pipeline_mode = #tpu.pipeline_mode<synchronous>, transform_indices = @transform_4, window_bounds = array<i64: 1, 128>}, {transform_indices = @transform_5, window_bounds = array<i64: 2, 128, 128>}]} {
    %c0_i32 = arith.constant 0 : i32
    %0 = arith.cmpi eq, %arg0, %c0_i32 : i32
    %1 = arith.extui %0 : i1 to i32
    %c0_i32_0 = arith.constant 0 : i32
    %2 = arith.cmpi ne, %1, %c0_i32_0 : i32
    scf.if %2 {
      %cst_52 = arith.constant 0.000000e+00 : bf16
      %55 = vector.broadcast %cst_52 : bf16 to vector<2x8x128xbf16>
      %c0_53 = arith.constant 0 : index
      %c0_54 = arith.constant 0 : index
      %c0_55 = arith.constant 0 : index
      %56 = vector.load %arg7[%c0_53, %c0_54, %c0_55] : memref<2x144x128xbf16, #tpu.memory_space<vmem>>, vector<2x8x128xbf16>
      tpu.vector_store %arg7[%c0_53, %c0_54, %c0_55], %55 {strides = array<i32>} : memref<2x144x128xbf16, #tpu.memory_space<vmem>>, vector<2x8x128xbf16>,
      %cst_56 = arith.constant 0.000000e+00 : bf16
      %57 = vector.broadcast %cst_56 : bf16 to vector<2x8x128xbf16>
      %c0_57 = arith.constant 0 : index
      %c136 = arith.constant 136 : index
      %c0_58 = arith.constant 0 : index
      %58 = vector.load %arg7[%c0_57, %c136, %c0_58] : memref<2x144x128xbf16, #tpu.memory_space<vmem>>, vector<2x8x128xbf16>
      tpu.vector_store %arg7[%c0_57, %c136, %c0_58], %57 {strides = array<i32>} : memref<2x144x128xbf16, #tpu.memory_space<vmem>>, vector<2x8x128xbf16>,
    } else {
    }
    %c0 = arith.constant 0 : index
    %c0_1 = arith.constant 0 : index
    %c0_2 = arith.constant 0 : index
    %3 = vector.load %arg1[%c0, %c0_1, %c0_2] : memref<2x128x128xf32, #tpu.memory_space<vmem>>, vector<2x128x128xf32>
    %cst = arith.constant 0.000000e+00 : f32
    %4 = vector.broadcast %cst : f32 to vector<2x128x128xf32>
    %5 = arith.maximumf %3, %4 : vector<2x128x128xf32>
    %6 = arith.truncf %5 : vector<2x128x128xf32> to vector<2x128x128xbf16>
    %c0_3 = arith.constant 0 : index
    %c8 = arith.constant 8 : index
    %c0_4 = arith.constant 0 : index
    %7 = vector.load %arg7[%c0_3, %c8, %c0_4] : memref<2x144x128xbf16, #tpu.memory_space<vmem>>, vector<2x128x128xbf16>
    tpu.vector_store %arg7[%c0_3, %c8, %c0_4], %6 {strides = array<i32>} : memref<2x144x128xbf16, #tpu.memory_space<vmem>>, vector<2x128x128xbf16>,
    %c0_5 = arith.constant 0 : index
    %c6 = arith.constant 6 : index
    %c0_6 = arith.constant 0 : index
    %8 = vector.load %arg7[%c0_5, %c6, %c0_6] : memref<2x144x128xbf16, #tpu.memory_space<vmem>>, vector<2x128x128xbf16>
    %9 = vector.shape_cast %8 : vector<2x128x128xbf16> to vector<256x128xbf16>
    %c0_7 = arith.constant 0 : index
    %c7 = arith.constant 7 : index
    %c0_8 = arith.constant 0 : index
    %10 = vector.load %arg7[%c0_7, %c7, %c0_8] : memref<2x144x128xbf16, #tpu.memory_space<vmem>>, vector<2x128x128xbf16>
    %11 = vector.shape_cast %10 : vector<2x128x128xbf16> to vector<256x128xbf16>
    %c0_9 = arith.constant 0 : index
    %c8_10 = arith.constant 8 : index
    %c0_11 = arith.constant 0 : index
    %12 = vector.load %arg7[%c0_9, %c8_10, %c0_11] : memref<2x144x128xbf16, #tpu.memory_space<vmem>>, vector<2x128x128xbf16>
    %13 = vector.shape_cast %12 : vector<2x128x128xbf16> to vector<256x128xbf16>
    %c0_12 = arith.constant 0 : index
    %c9 = arith.constant 9 : index
    %c0_13 = arith.constant 0 : index
    %14 = vector.load %arg7[%c0_12, %c9, %c0_13] : memref<2x144x128xbf16, #tpu.memory_space<vmem>>, vector<2x128x128xbf16>
    %15 = vector.shape_cast %14 : vector<2x128x128xbf16> to vector<256x128xbf16>
    %c0_14 = arith.constant 0 : index
    %c10 = arith.constant 10 : index
    %c0_15 = arith.constant 0 : index
    %16 = vector.load %arg7[%c0_14, %c10, %c0_15] : memref<2x144x128xbf16, #tpu.memory_space<vmem>>, vector<2x128x128xbf16>
    %17 = vector.shape_cast %16 : vector<2x128x128xbf16> to vector<256x128xbf16>
    %18 = tpu.concatenate %9, %11, %13, %15, %17 in 1 : vector<256x128xbf16>, vector<256x128xbf16>, vector<256x128xbf16>, vector<256x128xbf16>, vector<256x128xbf16> -> vector<256x640xbf16>
    %c0_16 = arith.constant 0 : index
    %c0_17 = arith.constant 0 : index
    %19 = vector.load %arg2[%c0_16, %c0_17] : memref<640x128xbf16, #tpu.memory_space<vmem>>, vector<640x128xbf16>
    %cst_18 = arith.constant dense<0.000000e+00> : vector<256x128xf32>
    %20 = tpu.matmul %18, %19, %cst_18 {dimension_numbers = #tpu.dot_dimension_numbers<[1], [0], [0], [1], [0, 0, 1, 1], [], []>} : vector<256x640xbf16>, vector<640x128xbf16>, vector<256x128xf32> -> vector<256x128xf32>
    %c0_19 = arith.constant 0 : index
    %c0_20 = arith.constant 0 : index
    %21 = vector.load %arg3[%c0_19, %c0_20] : memref<1x128xf32, #tpu.memory_space<vmem>>, vector<1x128xf32>
    %22 = vector.shape_cast %21 : vector<1x128xf32> to vector<128xf32>
    %23 = vector.shape_cast %22 : vector<128xf32> to vector<1x128xf32>
    %24 = vector.broadcast %23 : vector<1x128xf32> to vector<256x128xf32>
    %25 = arith.addf %20, %24 : vector<256x128xf32>
    %26 = vector.shape_cast %25 : vector<256x128xf32> to vector<2x128x128xf32>
    %cst_21 = arith.constant 0.000000e+00 : f32
    %27 = vector.broadcast %cst_21 : f32 to vector<2x128x128xf32>
    %28 = arith.maximumf %26, %27 : vector<2x128x128xf32>
    %29 = arith.truncf %28 : vector<2x128x128xf32> to vector<2x128x128xbf16>
    %c0_22 = arith.constant 0 : index
    %c8_23 = arith.constant 8 : index
    %c0_24 = arith.constant 0 : index
    %30 = vector.load %arg7[%c0_22, %c8_23, %c0_24] : memref<2x144x128xbf16, #tpu.memory_space<vmem>>, vector<2x128x128xbf16>
    tpu.vector_store %arg7[%c0_22, %c8_23, %c0_24], %29 {strides = array<i32>} : memref<2x144x128xbf16, #tpu.memory_space<vmem>>, vector<2x128x128xbf16>,
    %c0_25 = arith.constant 0 : index
    %c6_26 = arith.constant 6 : index
    %c0_27 = arith.constant 0 : index
    %31 = vector.load %arg7[%c0_25, %c6_26, %c0_27] : memref<2x144x128xbf16, #tpu.memory_space<vmem>>, vector<2x128x128xbf16>
    %32 = vector.shape_cast %31 : vector<2x128x128xbf16> to vector<256x128xbf16>
    %c0_28 = arith.constant 0 : index
    %c7_29 = arith.constant 7 : index
    %c0_30 = arith.constant 0 : index
    %33 = vector.load %arg7[%c0_28, %c7_29, %c0_30] : memref<2x144x128xbf16, #tpu.memory_space<vmem>>, vector<2x128x128xbf16>
    %34 = vector.shape_cast %33 : vector<2x128x128xbf16> to vector<256x128xbf16>
    %c0_31 = arith.constant 0 : index
    %c8_32 = arith.constant 8 : index
    %c0_33 = arith.constant 0 : index
    %35 = vector.load %arg7[%c0_31, %c8_32, %c0_33] : memref<2x144x128xbf16, #tpu.memory_space<vmem>>, vector<2x128x128xbf16>
    %36 = vector.shape_cast %35 : vector<2x128x128xbf16> to vector<256x128xbf16>
    %c0_34 = arith.constant 0 : index
    %c9_35 = arith.constant 9 : index
    %c0_36 = arith.constant 0 : index
    %37 = vector.load %arg7[%c0_34, %c9_35, %c0_36] : memref<2x144x128xbf16, #tpu.memory_space<vmem>>, vector<2x128x128xbf16>
    %38 = vector.shape_cast %37 : vector<2x128x128xbf16> to vector<256x128xbf16>
    %c0_37 = arith.constant 0 : index
    %c10_38 = arith.constant 10 : index
    %c0_39 = arith.constant 0 : index
    %39 = vector.load %arg7[%c0_37, %c10_38, %c0_39] : memref<2x144x128xbf16, #tpu.memory_space<vmem>>, vector<2x128x128xbf16>
    %40 = vector.shape_cast %39 : vector<2x128x128xbf16> to vector<256x128xbf16>
    %41 = tpu.concatenate %32, %34, %36, %38, %40 in 1 : vector<256x128xbf16>, vector<256x128xbf16>, vector<256x128xbf16>, vector<256x128xbf16>, vector<256x128xbf16> -> vector<256x640xbf16>
    %c0_40 = arith.constant 0 : index
    %c0_41 = arith.constant 0 : index
    %42 = vector.load %arg4[%c0_40, %c0_41] : memref<640x128xbf16, #tpu.memory_space<vmem>>, vector<640x128xbf16>
    %cst_42 = arith.constant dense<0.000000e+00> : vector<256x128xf32>
    %43 = tpu.matmul %41, %42, %cst_42 {dimension_numbers = #tpu.dot_dimension_numbers<[1], [0], [0], [1], [0, 0, 1, 1], [], []>} : vector<256x640xbf16>, vector<640x128xbf16>, vector<256x128xf32> -> vector<256x128xf32>
    %c0_43 = arith.constant 0 : index
    %c0_44 = arith.constant 0 : index
    %44 = vector.load %arg5[%c0_43, %c0_44] : memref<1x128xf32, #tpu.memory_space<vmem>>, vector<1x128xf32>
    %45 = vector.shape_cast %44 : vector<1x128xf32> to vector<128xf32>
    %46 = vector.shape_cast %45 : vector<128xf32> to vector<1x128xf32>
    %47 = vector.broadcast %46 : vector<1x128xf32> to vector<256x128xf32>
    %48 = arith.addf %43, %47 : vector<256x128xf32>
    %49 = vector.shape_cast %48 : vector<256x128xf32> to vector<2x128x128xf32>
    %c0_45 = arith.constant 0 : index
    %c0_46 = arith.constant 0 : index
    %c0_47 = arith.constant 0 : index
    %50 = vector.load %arg1[%c0_45, %c0_46, %c0_47] : memref<2x128x128xf32, #tpu.memory_space<vmem>>, vector<2x128x128xf32>
    %cst_48 = arith.constant 3.000000e-01 : f32
    %51 = vector.broadcast %cst_48 : f32 to vector<2x128x128xf32>
    %52 = arith.mulf %51, %49 : vector<2x128x128xf32>
    %53 = arith.addf %50, %52 : vector<2x128x128xf32>
    %c0_49 = arith.constant 0 : index
    %c0_50 = arith.constant 0 : index
    %c0_51 = arith.constant 0 : index
    %54 = vector.load %arg6[%c0_49, %c0_50, %c0_51] : memref<2x128x128xf32, #tpu.memory_space<vmem>>, vector<2x128x128xf32>
    tpu.vector_store %arg6[%c0_49, %c0_50, %c0_51], %53 {strides = array<i32>} : memref<2x128x128xf32, #tpu.memory_space<vmem>>, vector<2x128x128xf32>,
    return
  }
  func.func @transform_0(%arg0: i32) -> (i32, i32, i32) {
    %c0_i32 = arith.constant 0 : i32
    %c0_i32_0 = arith.constant 0 : i32
    %c0_i32_1 = arith.constant 0 : i32
    return %arg0, %c0_i32, %c0_i32_0 : i32, i32, i32
  }
  func.func @transform_1(%arg0: i32) -> (i32, i32) {
    %c0_i32 = arith.constant 0 : i32
    %c0_i32_0 = arith.constant 0 : i32
    %c0_i32_1 = arith.constant 0 : i32
    return %c0_i32, %c0_i32_0 : i32, i32
  }
  func.func @transform_2(%arg0: i32) -> (i32, i32) {
    %c0_i32 = arith.constant 0 : i32
    %c0_i32_0 = arith.constant 0 : i32
    %c0_i32_1 = arith.constant 0 : i32
    return %c0_i32, %c0_i32_0 : i32, i32
  }
  func.func @transform_3(%arg0: i32) -> (i32, i32) {
    %c0_i32 = arith.constant 0 : i32
    %c0_i32_0 = arith.constant 0 : i32
    %c0_i32_1 = arith.constant 0 : i32
    return %c0_i32, %c0_i32_0 : i32, i32
  }
  func.func @transform_4(%arg0: i32) -> (i32, i32) {
    %c0_i32 = arith.constant 0 : i32
    %c0_i32_0 = arith.constant 0 : i32
    %c0_i32_1 = arith.constant 0 : i32
    return %c0_i32, %c0_i32_0 : i32, i32
  }
  func.func @transform_5(%arg0: i32) -> (i32, i32, i32) {
    %c0_i32 = arith.constant 0 : i32
    %c0_i32_0 = arith.constant 0 : i32
    %c0_i32_1 = arith.constant 0 : i32
    return %arg0, %c0_i32, %c0_i32_0 : i32, i32, i32
  }
}

</mosaic_0001>

<llo_original>
// kernel: tpu_custom_call.1
$region0: #{tpu_custom_call.1}
  #allocation0 [shape = 'u32[]', space=smem, size = 0x4, offset = 0x4, fixed_abs, tag = 'smem constant byte address 0x4 - core index']
  #allocation1 [shape = 'u32[144,128]{1,0:T(1,128)}', space=vmem, size = 0x12000, scoped, tag = 'internal scratch']
  #allocation2 [shape = 'bf16[2,144,128]{2,1,0:T(8,128)(2,1)}', space=vmem, size = 0x12000, scoped, tag = 'scratch operand']
  %s0 = inlined_call_operand.hbm [shape: f32[4,128,128], index: 0, kind: input, shape index: {}]
  %s1 = inlined_call_operand.hbm [shape: bf16[640,128], index: 1, kind: input, shape index: {}]
  %s2 = inlined_call_operand.vmem [shape: f32[1,128], index: 2, kind: input, shape index: {}]
  %s3 = inlined_call_operand.hbm [shape: bf16[640,128], index: 3, kind: input, shape index: {}]
  %s4 = inlined_call_operand.vmem [shape: f32[1,128], index: 4, kind: input, shape index: {}]
  %s5 = inlined_call_operand.hbm [shape: f32[4,128,128], index: 5, kind: output, shape index: {}]
  %s6 = sld [smem:[#allocation0]]
  $region69: #{tpu_custom_call.1} parent=0
    _
  %s8 = ssub.s32 1, %s6
  %s9 = scalar_select 0, %s8, %s6
  $region1: #{tpu_custom_call.1} parent=0
    #allocation3 [shape = 'u8[262144]{0}', space=vmem, size = 0x40000, scoped, tag = 'input window, operand 0']
    #allocation4 [shape = 's32[2]{0}', space=sflag, size = 0x8, scoped, tag = 'scoped memory for tpu_custom_call.1']
    #allocation5 [shape = 's32[2]{0}', space=sflag, size = 0x8, scoped, tag = 'scoped memory for tpu_custom_call.1']
    #allocation6 [shape = 'u8[163840]{0}', space=vmem, size = 0x28000, scoped, tag = 'input window, operand 1, single buffered']
    #allocation7 [shape = 's32[1]{0}', space=sflag, size = 0x4, scoped, tag = 'scoped memory for tpu_custom_call.1']
    #allocation8 [shape = 'u8[163840]{0}', space=vmem, size = 0x28000, scoped, tag = 'input window, operand 3, single buffered']
    #allocation9 [shape = 'u8[262144]{0}', space=vmem, size = 0x40000, scoped, tag = 'output window, operand 0']
    %10 = vsyncpa [#allocation4], 0
    %s11 = scalar_lea.sflag [#allocation4], 1
    %12 = vsyncpa %s11, 0
    %13 = vsyncpa [#allocation7], 0
    %14 = vsyncpa [#allocation5], 0
    %s15 = scalar_lea.sflag [#allocation5], 1
    %16 = vsyncpa %s15, 0
    loop: start=0, step=1, limit=4
    $region2: #{tpu_custom_call.1} parent=1 // loop_pre_header
      _
    $region3: #{tpu_custom_call.1} parent=1 // loop_header
      %s18 = sphi 0, %s22
      %p19 = scmp.ge.s32.totalorder %s18, 4
      %s28 = sphi 0, %s30
      %s31 = sphi 0, %s28
      %s32 = sphi 0, %s31
      %s48 = sphi 0, %s32
      %s52 = sphi 0, %s52
      %s54 = sphi 0, %s52
      %s55 = sphi 0, %s54
      %s69 = sphi 0, %s55
      %s73 = sphi 0, %s73
      %s75 = sphi 0, %s73
      %s76 = sphi 0, %s75
      %s90 = sphi 0, %s76
      %s94 = sphi 0, %s94
      %s96 = sphi 0, %s94
      %s97 = sphi 0, %s96
      %s111 = sphi 0, %s97
      %s115 = sphi 0, %s115
      %s117 = sphi 0, %s115
      %s118 = sphi 0, %s117
      %s132 = sphi 0, %s118
      %s138 = sphi 0, %s140
      %s141 = sphi 0, %s138
      %s142 = sphi 0, %s141
      %s158 = sphi 0, %s142
    $region4: #{tpu_custom_call.1} parent=1 // loop_header_branch
      %21 = sbr.rel (%p19) target = $region8
    $region5: #{tpu_custom_call.1} parent=1 // loop_body
      %s23 = ssub.s32 %s18, 1
      %s24 = ssub.s32 %s18, 2
      %s25 = sadd.s32 %s18, 1
      %s26 = ssub.s32 %s18, %s25
      %p27 = scmp.eq.s32.totalorder %s26, 0
      %s29 = sadd.s32 %s28, 1
      %s30 = scalar_select %p27, %s28, %s29
      %p33 = pneg %p27
      %p34 = scmp.eq.s32.totalorder %s18, 1
      %p35 = por %p33, %p34
      %p36 = scmp.ne.s32.totalorder %s28, %s31
      %p37 = scmp.eq.s32.totalorder %s18, 0
      %p38 = por %p36, %p37
      %p39 = scmp.ne.s32.totalorder %s28, %s31
      %p40 = scmp.eq.s32.totalorder %s23, 1
      %p41 = por %p39, %p40
      %p42 = scmp.ne.s32.totalorder %s31, %s32
      %p43 = scmp.eq.s32.totalorder %s23, 0
      %p44 = por %p42, %p43
      %p45 = scmp.ne.s32.totalorder %s31, %s32
      %p46 = scmp.eq.s32.totalorder %s24, 1
      %p47 = por %p45, %p46
      %p49 = scmp.ne.s32.totalorder %s32, %s48
      %p50 = scmp.eq.s32.totalorder %s24, 0
      %p51 = por %p49, %p50
      %s53 = sadd.s32 %s52, 1
      %p56 = scmp.eq.s32.totalorder %s18, 1
      %p57 = scmp.ne.s32.totalorder %s52, %s54
      %p58 = scmp.eq.s32.totalorder %s18, 0
      %p59 = por %p57, %p58
      %p60 = scmp.ne.s32.totalorder %s52, %s54
      %p61 = scmp.eq.s32.totalorder %s23, 1
      %p62 = por %p60, %p61
      %p63 = scmp.ne.s32.totalorder %s54, %s55
      %p64 = scmp.eq.s32.totalorder %s23, 0
      %p65 = por %p63, %p64
      %p66 = scmp.ne.s32.totalorder %s54, %s55
      %p67 = scmp.eq.s32.totalorder %s24, 1
      %p68 = por %p66, %p67
      %p70 = scmp.ne.s32.totalorder %s55, %s69
      %p71 = scmp.eq.s32.totalorder %s24, 0
      %p72 = por %p70, %p71
      %s74 = sadd.s32 %s73, 1
      %p77 = scmp.eq.s32.totalorder %s18, 1
      %p78 = scmp.ne.s32.totalorder %s73, %s75
      %p79 = scmp.eq.s32.totalorder %s18, 0
      %p80 = por %p78, %p79
      %p81 = scmp.ne.s32.totalorder %s73, %s75
      %p82 = scmp.eq.s32.totalorder %s23, 1
      %p83 = por %p81, %p82
      %p84 = scmp.ne.s32.totalorder %s75, %s76
      %p85 = scmp.eq.s32.totalorder %s23, 0
      %p86 = por %p84, %p85
      %p87 = scmp.ne.s32.totalorder %s75, %s76
      %p88 = scmp.eq.s32.totalorder %s24, 1
      %p89 = por %p87, %p88
      %p91 = scmp.ne.s32.totalorder %s76, %s90
      %p92 = scmp.eq.s32.totalorder %s24, 0
      %p93 = por %p91, %p92
      %s95 = sadd.s32 %s94, 1
      %p98 = scmp.eq.s32.totalorder %s18, 1
      %p99 = scmp.ne.s32.totalorder %s94, %s96
      %p100 = scmp.eq.s32.totalorder %s18, 0
      %p101 = por %p99, %p100
      %p102 = scmp.ne.s32.totalorder %s94, %s96
      %p103 = scmp.eq.s32.totalorder %s23, 1
      %p104 = por %p102, %p103
      %p105 = scmp.ne.s32.totalorder %s96, %s97
      %p106 = scmp.eq.s32.totalorder %s23, 0
      %p107 = por %p105, %p106
      %p108 = scmp.ne.s32.totalorder %s96, %s97
      %p109 = scmp.eq.s32.totalorder %s24, 1
      %p110 = por %p108, %p109
      %p112 = scmp.ne.s32.totalorder %s97, %s111
      %p113 = scmp.eq.s32.totalorder %s24, 0
      %p114 = por %p112, %p113
      %s116 = sadd.s32 %s115, 1
      %p119 = scmp.eq.s32.totalorder %s18, 1
      %p120 = scmp.ne.s32.totalorder %s115, %s117
      %p121 = scmp.eq.s32.totalorder %s18, 0
      %p122 = por %p120, %p121
      %p123 = scmp.ne.s32.totalorder %s115, %s117
      %p124 = scmp.eq.s32.totalorder %s23, 1
      %p125 = por %p123, %p124
      %p126 = scmp.ne.s32.totalorder %s117, %s118
      %p127 = scmp.eq.s32.totalorder %s23, 0
      %p128 = por %p126, %p127
      %p129 = scmp.ne.s32.totalorder %s117, %s118
      %p130 = scmp.eq.s32.totalorder %s24, 1
      %p131 = por %p129, %p130
      %p133 = scmp.ne.s32.totalorder %s118, %s132
      %p134 = scmp.eq.s32.totalorder %s24, 0
      %p135 = por %p133, %p134
      %s136 = ssub.s32 %s18, %s25
      %p137 = scmp.eq.s32.totalorder %s136, 0
      %s139 = sadd.s32 %s138, 1
      %s140 = scalar_select %p137, %s138, %s139
      %p143 = pneg %p137
      %p144 = scmp.eq.s32.totalorder %s18, 1
      %p145 = por %p143, %p144
      %p146 = scmp.ne.s32.totalorder %s138, %s141
      %p147 = scmp.eq.s32.totalorder %s18, 0
      %p148 = por %p146, %p147
      %p149 = scmp.ne.s32.totalorder %s138, %s141
      %p150 = scmp.eq.s32.totalorder %s23, 1
      %p151 = por %p149, %p150
      %p152 = scmp.ne.s32.totalorder %s141, %s142
      %p153 = scmp.eq.s32.totalorder %s23, 0
      %p154 = por %p152, %p153
      %p155 = scmp.ne.s32.totalorder %s141, %s142
      %p156 = scmp.eq.s32.totalorder %s24, 1
      %p157 = por %p155, %p156
      %p159 = scmp.ne.s32.totalorder %s142, %s158
      %p160 = scmp.eq.s32.totalorder %s24, 0
      %p161 = por %p159, %p160
      %p162 = scmp.le.s32.totalorder 1, %s18
      %p163 = scmp.lt.s32.totalorder %s18, 3
      %p164 = pnand %p162, %p163
      %p165 = pneg %p164
      // Predicated region
      $region9: #{tpu_custom_call.1} parent=5 // pred_check
        _
      $region10: #{tpu_custom_call.1} parent=5 // pred_check_branch
        %167 = sbr.rel (%p164) target = $region12
      $region11: #{tpu_custom_call.1} parent=5 // pred_region
        %s168 = ssub.s32 %s18, 1
        // Predicated region
        $region13: #{tpu_custom_call.1} parent=11 // pred_check
          %p169 = pneg %p65
        $region14: #{tpu_custom_call.1} parent=11 // pred_check_branch
          %171 = sbr.rel (%p169) target = $region16
        $region15: #{tpu_custom_call.1} parent=11 // pred_region
          %s173 = ssub.s32 5120, 5120
          %174 = vsyncadd [#allocation7], %s173
          %s175 = sshll.u32 [#allocation6], 4
          %s176 = int_to_ptr.vmem [resolvable:$true] %s175
          %181 = dma.hbm_to_vmem [thread:$0]  %s1, 5120, %s176, [#allocation7], 64, 64, 4
        $region16: #{tpu_custom_call.1} parent=11 // pred_fallthru
          _
        // Predicated region
        $region17: #{tpu_custom_call.1} parent=11 // pred_check
          %p182 = pneg %p86
        $region18: #{tpu_custom_call.1} parent=11 // pred_check_branch
          %184 = sbr.rel (%p182) target = $region20
        $region19: #{tpu_custom_call.1} parent=11 // pred_region
          _
        $region20: #{tpu_custom_call.1} parent=11 // pred_fallthru
          _
        // Predicated region
        $region21: #{tpu_custom_call.1} parent=11 // pred_check
          %p185 = pneg %p107
        $region22: #{tpu_custom_call.1} parent=11 // pred_check_branch
          %187 = sbr.rel (%p185) target = $region24
        $region23: #{tpu_custom_call.1} parent=11 // pred_region
          %s189 = ssub.s32 5120, 5120
          %190 = vsyncadd [#allocation7], %s189
          %s191 = sshll.u32 [#allocation8], 4
          %s192 = int_to_ptr.vmem [resolvable:$true] %s191
          %197 = dma.hbm_to_vmem [thread:$0]  %s3, 5120, %s192, [#allocation7], 64, 64, 4
        $region24: #{tpu_custom_call.1} parent=11 // pred_fallthru
          _
        // Predicated region
        $region25: #{tpu_custom_call.1} parent=11 // pred_check
          %p198 = pneg %p128
        $region26: #{tpu_custom_call.1} parent=11 // pred_check_branch
          %200 = sbr.rel (%p198) target = $region28
        $region27: #{tpu_custom_call.1} parent=11 // pred_region
          _
        $region28: #{tpu_custom_call.1} parent=11 // pred_fallthru
          _
      $region12: #{tpu_custom_call.1} parent=5 // pred_fallthru
        _
      %p201 = scmp.lt.s32.totalorder %s18, 2
      // Predicated region
      $region29: #{tpu_custom_call.1} parent=5 // pred_check
        %p202 = pneg %p201
      $region30: #{tpu_custom_call.1} parent=5 // pred_check_branch
        %204 = sbr.rel (%p202) target = $region32
      $region31: #{tpu_custom_call.1} parent=5 // pred_region
        // Predicated region
        $region33: #{tpu_custom_call.1} parent=31 // pred_check
          %p205 = pneg %p38
        $region34: #{tpu_custom_call.1} parent=31 // pred_check_branch
          %207 = sbr.rel (%p205) target = $region36
        $region35: #{tpu_custom_call.1} parent=31 // pred_region
          %s208 = sand.u32 %s28, 1
          %s209 = scalar_lea.sflag [#allocation4], %s208
          %s210 = sand.u32 %s28, 1
          %s211 = smul.addr %s210, 256
          %s212 = scalar_lea.vmem [#allocation3], %s211
          %s213 = smul.u32 2, %s18
          %s215 = ssub.s32 4096, 4096
          %216 = vsyncadd %s209, %s215
          %s217 = smul.addr %s213, 16
          %s218 = smul.addr %s217, 128
          %s219 = scalar_lea.hbm %s0, %s218
          %s220 = sshll.u32 %s212, 4
          %s221 = int_to_ptr.vmem [resolvable:$true] %s220
          %226 = dma.hbm_to_vmem [thread:$0]  %s219, 4096, %s221, %s209, 128, 128, 8
        $region36: #{tpu_custom_call.1} parent=31 // pred_fallthru
          _
      $region32: #{tpu_custom_call.1} parent=5 // pred_fallthru
        _
      %p227 = scmp.le.s32.totalorder 1, %s18
      %p228 = scmp.lt.s32.totalorder %s18, 3
      %p229 = pnand %p227, %p228
      %p230 = pneg %p229
      // Predicated region
      $region37: #{tpu_custom_call.1} parent=5 // pred_check
        _
      $region38: #{tpu_custom_call.1} parent=5 // pred_check_branch
        %232 = sbr.rel (%p229) target = $region40
      $region39: #{tpu_custom_call.1} parent=5 // pred_region
        %s233 = ssub.s32 %s18, 1
        %s234 = sand.u32 %s31, 1
        %s235 = scalar_lea.sflag [#allocation4], %s234
        %s236 = sand.u32 %s31, 1
        %s237 = smul.addr %s236, 256
        %s238 = scalar_lea.vmem [#allocation3], %s237
        // Predicated region
        $region41: #{tpu_custom_call.1} parent=39 // pred_check
          %p239 = pneg %p44
        $region42: #{tpu_custom_call.1} parent=39 // pred_check_branch
          %241 = sbr.rel (%p239) target = $region44
        $region43: #{tpu_custom_call.1} parent=39 // pred_region
          %242 = dma.done %s235, 4096
        $region44: #{tpu_custom_call.1} parent=39 // pred_fallthru
          _
        // Predicated region
        $region45: #{tpu_custom_call.1} parent=39 // pred_check
          %p243 = pneg %p65
        $region46: #{tpu_custom_call.1} parent=39 // pred_check_branch
          %245 = sbr.rel (%p243) target = $region48
        $region47: #{tpu_custom_call.1} parent=39 // pred_region
          %246 = dma.done [#allocation7], 5120
        $region48: #{tpu_custom_call.1} parent=39 // pred_fallthru
          _
        // Predicated region
        $region49: #{tpu_custom_call.1} parent=39 // pred_check
          %p247 = pneg %p107
        $region50: #{tpu_custom_call.1} parent=39 // pred_check_branch
          %249 = sbr.rel (%p247) target = $region52
        $region51: #{tpu_custom_call.1} parent=39 // pred_region
          %250 = dma.done [#allocation7], 5120
        $region52: #{tpu_custom_call.1} parent=39 // pred_fallthru
          _
        %s251 = sand.u32 %s31, 1
        %s252 = scalar_lea.sflag [#allocation4], %s251
        %s253 = sand.u32 %s31, 1
        %s254 = smul.addr %s253, 256
        %s255 = scalar_lea.vmem [#allocation3], %s254
        %p256 = pneg %p44
        %p257 = pneg %p41
        %p258 = pneg %p65
        %p259 = pneg %p62
        %p260 = pneg %p86
        %p261 = pneg %p83
        %p262 = pneg %p107
        %p263 = pneg %p104
        %p264 = pneg %p128
        %p265 = pneg %p125
        %p266 = pneg %p154
        %p267 = pneg %p151
        %s268 = sand.u32 %s141, 1
        %s269 = scalar_lea.sflag [#allocation5], %s268
        %s270 = sand.u32 %s141, 1
        %s271 = smul.addr %s270, 256
        %s272 = scalar_lea.vmem [#allocation9], %s271
        %s273 = smul.u32 2, %s23
        %s274 = smul.u32 2, %s23
        %p276 = scmp.eq.s32.totalorder %s23, 0
        // Predicated region
        $region53: #{tpu_custom_call.1} parent=39 // pred_check
          %p277 = pneg %p276
        $region54: #{tpu_custom_call.1} parent=39 // pred_check_branch
          %279 = sbr.rel (%p277) target = $region56
        $region55: #{tpu_custom_call.1} parent=39 // pred_region
          %280 = vst [vmem:[#allocation2] sm:$0xf] 0
          %281 = vst [vmem:[#allocation2 + $0x48] sm:$0xf] 0
          %282 = vst [vmem:[#allocation2 + $0x44] sm:$0xf] 0
          %283 = vst [vmem:[#allocation2 + $0x8c] sm:$0xf] 0
        $region56: #{tpu_custom_call.1} parent=39 // pred_fallthru
          _
        %v284 = vld [vmem:[%s238] sm:$0xff]
        %v285 = vld [vmem:[%s238 + $0x8] sm:$0xff]
        %v286 = vld [vmem:[%s238 + $0x10] sm:$0xff]
        %v287 = vld [vmem:[%s238 + $0x18] sm:$0xff]
        %v288 = vld [vmem:[%s238 + $0x20] sm:$0xff]
        %v289 = vld [vmem:[%s238 + $0x28] sm:$0xff]
        %v290 = vld [vmem:[%s238 + $0x30] sm:$0xff]
        %v291 = vld [vmem:[%s238 + $0x38] sm:$0xff]
        %v292 = vld [vmem:[%s238 + $0x40] sm:$0xff]
        %v293 = vld [vmem:[%s238 + $0x48] sm:$0xff]
        %v294 = vld [vmem:[%s238 + $0x50] sm:$0xff]
        %v295 = vld [vmem:[%s238 + $0x58] sm:$0xff]
        %v296 = vld [vmem:[%s238 + $0x60] sm:$0xff]
        %v297 = vld [vmem:[%s238 + $0x68] sm:$0xff]
        %v298 = vld [vmem:[%s238 + $0x70] sm:$0xff]
        %v299 = vld [vmem:[%s238 + $0x78] sm:$0xff]
        %v300 = vld [vmem:[%s238 + $0x80] sm:$0xff]
        %v301 = vld [vmem:[%s238 + $0x88] sm:$0xff]
        %v302 = vld [vmem:[%s238 + $0x90] sm:$0xff]
        %v303 = vld [vmem:[%s238 + $0x98] sm:$0xff]
        %v304 = vld [vmem:[%s238 + $0xa0] sm:$0xff]
        %v305 = vld [vmem:[%s238 + $0xa8] sm:$0xff]
        %v306 = vld [vmem:[%s238 + $0xb0] sm:$0xff]
        %v307 = vld [vmem:[%s238 + $0xb8] sm:$0xff]
        %v308 = vld [vmem:[%s238 + $0xc0] sm:$0xff]
        %v309 = vld [vmem:[%s238 + $0xc8] sm:$0xff]
        %v310 = vld [vmem:[%s238 + $0xd0] sm:$0xff]
        %v311 = vld [vmem:[%s238 + $0xd8] sm:$0xff]
        %v312 = vld [vmem:[%s238 + $0xe0] sm:$0xff]
        %v313 = vld [vmem:[%s238 + $0xe8] sm:$0xff]
        %v314 = vld [vmem:[%s238 + $0xf0] sm:$0xff]
        %v315 = vld [vmem:[%s238 + $0xf8] sm:$0xff]
        %v316 = vmax.f32 %v284, 0.0
        %v317 = vmax.f32 %v285, 0.0
        %v318 = vmax.f32 %v286, 0.0
        %v319 = vmax.f32 %v287, 0.0
        %v320 = vmax.f32 %v288, 0.0
        %v321 = vmax.f32 %v289, 0.0
        %v322 = vmax.f32 %v290, 0.0
        %v323 = vmax.f32 %v291, 0.0
        %v324 = vmax.f32 %v292, 0.0
        %v325 = vmax.f32 %v293, 0.0
        %v326 = vmax.f32 %v294, 0.0
        %v327 = vmax.f32 %v295, 0.0
        %v328 = vmax.f32 %v296, 0.0
        %v329 = vmax.f32 %v297, 0.0
        %v330 = vmax.f32 %v298, 0.0
        %v331 = vmax.f32 %v299, 0.0
        %v332 = vmax.f32 %v300, 0.0
        %v333 = vmax.f32 %v301, 0.0
        %v334 = vmax.f32 %v302, 0.0
        %v335 = vmax.f32 %v303, 0.0
        %v336 = vmax.f32 %v304, 0.0
        %v337 = vmax.f32 %v305, 0.0
        %v338 = vmax.f32 %v306, 0.0
        %v339 = vmax.f32 %v307, 0.0
        %v340 = vmax.f32 %v308, 0.0
        %v341 = vmax.f32 %v309, 0.0
        %v342 = vmax.f32 %v310, 0.0
        %v343 = vmax.f32 %v311, 0.0
        %v344 = vmax.f32 %v312, 0.0
        %v345 = vmax.f32 %v313, 0.0
        %v346 = vmax.f32 %v314, 0.0
        %v347 = vmax.f32 %v315, 0.0
        %v348 = vpack.c.bf16 %v317, %v316
        %v349 = vpack.c.bf16 %v319, %v318
        %v350 = vpack.c.bf16 %v321, %v320
        %v351 = vpack.c.bf16 %v323, %v322
        %v352 = vpack.c.bf16 %v325, %v324
        %v353 = vpack.c.bf16 %v327, %v326
        %v354 = vpack.c.bf16 %v329, %v328
        %v355 = vpack.c.bf16 %v331, %v330
        %v356 = vpack.c.bf16 %v333, %v332
        %v357 = vpack.c.bf16 %v335, %v334
        %v358 = vpack.c.bf16 %v337, %v336
        %v359 = vpack.c.bf16 %v339, %v338
        %v360 = vpack.c.bf16 %v341, %v340
        %v361 = vpack.c.bf16 %v343, %v342
        %v362 = vpack.c.bf16 %v345, %v344
        %v363 = vpack.c.bf16 %v347, %v346
        %v380 = vunpack.c.l.b16 %v348
        %v381 = vunpack.c.h.b16 %v348
        %v382 = vunpack.c.l.b16 %v349
        %v383 = vunpack.c.h.b16 %v349
        %v384 = vunpack.c.l.b16 %v350
        %v385 = vunpack.c.h.b16 %v350
        %v386 = vunpack.c.l.b16 %v351
        %v387 = vunpack.c.h.b16 %v351
        %v388 = vunpack.c.l.b16 %v352
        %v389 = vunpack.c.h.b16 %v352
        %v390 = vunpack.c.l.b16 %v353
        %v391 = vunpack.c.h.b16 %v353
        %v392 = vunpack.c.l.b16 %v354
        %v393 = vunpack.c.h.b16 %v354
        %v394 = vunpack.c.l.b16 %v355
        %v395 = vunpack.c.h.b16 %v355
        %v396 = vunpack.c.l.b16 %v356
        %v397 = vunpack.c.h.b16 %v356
        %v398 = vunpack.c.l.b16 %v357
        %v399 = vunpack.c.h.b16 %v357
        %v400 = vunpack.c.l.b16 %v358
        %v401 = vunpack.c.h.b16 %v358
        %v402 = vunpack.c.l.b16 %v359
        %v403 = vunpack.c.h.b16 %v359
        %v404 = vunpack.c.l.b16 %v360
        %v405 = vunpack.c.h.b16 %v360
        %v406 = vunpack.c.l.b16 %v361
        %v407 = vunpack.c.h.b16 %v361
        %v408 = vunpack.c.l.b16 %v362
        %v409 = vunpack.c.h.b16 %v362
        %v410 = vunpack.c.l.b16 %v363
        %v411 = vunpack.c.h.b16 %v363
        %v412 = vpack.c.b16 %v380, %v380
        %v413 = vpack.c.b16 %v381, %v381
        %v414 = vpack.c.b16 %v382, %v382
        %v415 = vpack.c.b16 %v383, %v383
        %v416 = vpack.c.b16 %v384, %v384
        %v417 = vpack.c.b16 %v385, %v385
        %v418 = vpack.c.b16 %v386, %v386
        %v419 = vpack.c.b16 %v387, %v387
        %v420 = vpack.c.b16 %v388, %v388
        %v421 = vpack.c.b16 %v389, %v389
        %v422 = vpack.c.b16 %v390, %v390
        %v423 = vpack.c.b16 %v391, %v391
        %v424 = vpack.c.b16 %v392, %v392
        %v425 = vpack.c.b16 %v393, %v393
        %v426 = vpack.c.b16 %v394, %v394
        %v427 = vpack.c.b16 %v395, %v395
        %v428 = vpack.c.b16 %v396, %v396
        %v429 = vpack.c.b16 %v397, %v397
        %v430 = vpack.c.b16 %v398, %v398
        %v431 = vpack.c.b16 %v399, %v399
        %v432 = vpack.c.b16 %v400, %v400
        %v433 = vpack.c.b16 %v401, %v401
        %v434 = vpack.c.b16 %v402, %v402
        %v435 = vpack.c.b16 %v403, %v403
        %v436 = vpack.c.b16 %v404, %v404
        %v437 = vpack.c.b16 %v405, %v405
        %v438 = vpack.c.b16 %v406, %v406
        %v439 = vpack.c.b16 %v407, %v407
        %v440 = vpack.c.b16 %v408, %v408
        %v441 = vpack.c.b16 %v409, %v409
        %v442 = vpack.c.b16 %v410, %v410
        %v443 = vpack.c.b16 %v411, %v411
        %476 = vst [vmem:[#allocation2 + $0x4] sm:$0xf] %v412
        %477 = vst [vmem:[#allocation2 + $0x8] sm:$0xf] %v413
        %478 = vst [vmem:[#allocation2 + $0xc] sm:$0xf] %v414
        %479 = vst [vmem:[#allocation2 + $0x10] sm:$0xf] %v415
        %480 = vst [vmem:[#allocation2 + $0x14] sm:$0xf] %v416
        %481 = vst [vmem:[#allocation2 + $0x18] sm:$0xf] %v417
        %482 = vst [vmem:[#allocation2 + $0x1c] sm:$0xf] %v418
        %483 = vst [vmem:[#allocation2 + $0x20] sm:$0xf] %v419
        %484 = vst [vmem:[#allocation2 + $0x24] sm:$0xf] %v420
        %485 = vst [vmem:[#allocation2 + $0x28] sm:$0xf] %v421
        %486 = vst [vmem:[#allocation2 + $0x2c] sm:$0xf] %v422
        %487 = vst [vmem:[#allocation2 + $0x30] sm:$0xf] %v423
        %488 = vst [vmem:[#allocation2 + $0x34] sm:$0xf] %v424
        %489 = vst [vmem:[#allocation2 + $0x38] sm:$0xf] %v425
        %490 = vst [vmem:[#allocation2 + $0x3c] sm:$0xf] %v426
        %491 = vst [vmem:[#allocation2 + $0x40] sm:$0xf] %v427
        %492 = vst [vmem:[#allocation2 + $0x4c] sm:$0xf] %v428
        %493 = vst [vmem:[#allocation2 + $0x50] sm:$0xf] %v429
        %494 = vst [vmem:[#allocation2 + $0x54] sm:$0xf] %v430
        %495 = vst [vmem:[#allocation2 + $0x58] sm:$0xf] %v431
        %496 = vst [vmem:[#allocation2 + $0x5c] sm:$0xf] %v432
        %497 = vst [vmem:[#allocation2 + $0x60] sm:$0xf] %v433
        %498 = vst [vmem:[#allocation2 + $0x64] sm:$0xf] %v434
        %499 = vst [vmem:[#allocation2 + $0x68] sm:$0xf] %v435
        %500 = vst [vmem:[#allocation2 + $0x6c] sm:$0xf] %v436
        %501 = vst [vmem:[#allocation2 + $0x70] sm:$0xf] %v437
        %502 = vst [vmem:[#allocation2 + $0x74] sm:$0xf] %v438
        %503 = vst [vmem:[#allocation2 + $0x78] sm:$0xf] %v439
        %504 = vst [vmem:[#allocation2 + $0x7c] sm:$0xf] %v440
        %505 = vst [vmem:[#allocation2 + $0x80] sm:$0xf] %v441
        %506 = vst [vmem:[#allocation2 + $0x84] sm:$0xf] %v442
        %507 = vst [vmem:[#allocation2 + $0x88] sm:$0xf] %v443
        %v508 = vld [vmem:[#allocation2] sm:$0x8]
        %v509 = vld [vmem:[#allocation2 + $0x4] sm:$0xf]
        %v510 = vld [vmem:[#allocation2 + $0x8] sm:$0xf]
        %v511 = vld [vmem:[#allocation2 + $0xc] sm:$0xf]
        %v512 = vld [vmem:[#allocation2 + $0x10] sm:$0xf]
        %v513 = vld [vmem:[#allocation2 + $0x14] sm:$0xf]
        %v514 = vld [vmem:[#allocation2 + $0x18] sm:$0xf]
        %v515 = vld [vmem:[#allocation2 + $0x1c] sm:$0xf]
        %v516 = vld [vmem:[#allocation2 + $0x20] sm:$0xf]
        %v517 = vld [vmem:[#allocation2 + $0x24] sm:$0xf]
        %v518 = vld [vmem:[#allocation2 + $0x28] sm:$0xf]
        %v519 = vld [vmem:[#allocation2 + $0x2c] sm:$0xf]
        %v520 = vld [vmem:[#allocation2 + $0x30] sm:$0xf]
        %v521 = vld [vmem:[#allocation2 + $0x34] sm:$0xf]
        %v522 = vld [vmem:[#allocation2 + $0x38] sm:$0xf]
        %v523 = vld [vmem:[#allocation2 + $0x3c] sm:$0xf]
        %v524 = vld [vmem:[#allocation2 + $0x40] sm:$0x7]
        %v525 = vld [vmem:[#allocation2 + $0x48] sm:$0x8]
        %v526 = vld [vmem:[#allocation2 + $0x4c] sm:$0xf]
        %v527 = vld [vmem:[#allocation2 + $0x50] sm:$0xf]
        %v528 = vld [vmem:[#allocation2 + $0x54] sm:$0xf]
        %v529 = vld [vmem:[#allocation2 + $0x58] sm:$0xf]
        %v530 = vld [vmem:[#allocation2 + $0x5c] sm:$0xf]
        %v531 = vld [vmem:[#allocation2 + $0x60] sm:$0xf]
        %v532 = vld [vmem:[#allocation2 + $0x64] sm:$0xf]
        %v533 = vld [vmem:[#allocation2 + $0x68] sm:$0xf]
        %v534 = vld [vmem:[#allocation2 + $0x6c] sm:$0xf]
        %v535 = vld [vmem:[#allocation2 + $0x70] sm:$0xf]
        %v536 = vld [vmem:[#allocation2 + $0x74] sm:$0xf]
        %v537 = vld [vmem:[#allocation2 + $0x78] sm:$0xf]
        %v538 = vld [vmem:[#allocation2 + $0x7c] sm:$0xf]
        %v539 = vld [vmem:[#allocation2 + $0x80] sm:$0xf]
        %v540 = vld [vmem:[#allocation2 + $0x84] sm:$0xf]
        %v541 = vld [vmem:[#allocation2 + $0x88] sm:$0x7]
        %vm576 = vcmask 1040384
        %vm577 = vcmask 1044484
        %vm578 = vmor %vm576, %vm577
        %v579 = vrot.slane %v508, 7
        %v580 = vrot.slane %v579, 4
        %v581 = vrot.slane %v509, 7
        %v582 = vsel %vm578, %v580, %v581
        %v583 = vrot.slane %v581, 4
        %v584 = vrot.slane %v510, 7
        %v585 = vsel %vm578, %v583, %v584
        %v586 = vrot.slane %v584, 4
        %v587 = vrot.slane %v511, 7
        %v588 = vsel %vm578, %v586, %v587
        %v589 = vrot.slane %v587, 4
        %v590 = vrot.slane %v512, 7
        %v591 = vsel %vm578, %v589, %v590
        %v592 = vrot.slane %v590, 4
        %v593 = vrot.slane %v513, 7
        %v594 = vsel %vm578, %v592, %v593
        %v595 = vrot.slane %v593, 4
        %v596 = vrot.slane %v514, 7
        %v597 = vsel %vm578, %v595, %v596
        %v598 = vrot.slane %v596, 4
        %v599 = vrot.slane %v515, 7
        %v600 = vsel %vm578, %v598, %v599
        %v601 = vrot.slane %v599, 4
        %v602 = vrot.slane %v516, 7
        %v603 = vsel %vm578, %v601, %v602
        %v604 = vrot.slane %v602, 4
        %v605 = vrot.slane %v517, 7
        %v606 = vsel %vm578, %v604, %v605
        %v607 = vrot.slane %v605, 4
        %v608 = vrot.slane %v518, 7
        %v609 = vsel %vm578, %v607, %v608
        %v610 = vrot.slane %v608, 4
        %v611 = vrot.slane %v519, 7
        %v612 = vsel %vm578, %v610, %v611
        %v613 = vrot.slane %v611, 4
        %v614 = vrot.slane %v520, 7
        %v615 = vsel %vm578, %v613, %v614
        %v616 = vrot.slane %v614, 4
        %v617 = vrot.slane %v521, 7
        %v618 = vsel %vm578, %v616, %v617
        %v619 = vrot.slane %v617, 4
        %v620 = vrot.slane %v522, 7
        %v621 = vsel %vm578, %v619, %v620
        %v622 = vrot.slane %v620, 4
        %v623 = vrot.slane %v523, 7
        %v624 = vsel %vm578, %v622, %v623
        %v625 = vrot.slane %v623, 4
        %v626 = vrot.slane %v524, 7
        %v627 = vsel %vm578, %v625, %v626
        %v628 = vrot.slane %v525, 7
        %v629 = vrot.slane %v628, 4
        %v630 = vrot.slane %v526, 7
        %v631 = vsel %vm578, %v629, %v630
        %v632 = vrot.slane %v630, 4
        %v633 = vrot.slane %v527, 7
        %v634 = vsel %vm578, %v632, %v633
        %v635 = vrot.slane %v633, 4
        %v636 = vrot.slane %v528, 7
        %v637 = vsel %vm578, %v635, %v636
        %v638 = vrot.slane %v636, 4
        %v639 = vrot.slane %v529, 7
        %v640 = vsel %vm578, %v638, %v639
        %v641 = vrot.slane %v639, 4
        %v642 = vrot.slane %v530, 7
        %v643 = vsel %vm578, %v641, %v642
        %v644 = vrot.slane %v642, 4
        %v645 = vrot.slane %v531, 7
        %v646 = vsel %vm578, %v644, %v645
        %v647 = vrot.slane %v645, 4
        %v648 = vrot.slane %v532, 7
        %v649 = vsel %vm578, %v647, %v648
        %v650 = vrot.slane %v648, 4
        %v651 = vrot.slane %v533, 7
        %v652 = vsel %vm578, %v650, %v651
        %v653 = vrot.slane %v651, 4
        %v654 = vrot.slane %v534, 7
        %v655 = vsel %vm578, %v653, %v654
        %v656 = vrot.slane %v654, 4
        %v657 = vrot.slane %v535, 7
        %v658 = vsel %vm578, %v656, %v657
        %v659 = vrot.slane %v657, 4
        %v660 = vrot.slane %v536, 7
        %v661 = vsel %vm578, %v659, %v660
        %v662 = vrot.slane %v660, 4
        %v663 = vrot.slane %v537, 7
        %v664 = vsel %vm578, %v662, %v663
        %v665 = vrot.slane %v663, 4
        %v666 = vrot.slane %v538, 7
        %v667 = vsel %vm578, %v665, %v666
        %v668 = vrot.slane %v666, 4
        %v669 = vrot.slane %v539, 7
        %v670 = vsel %vm578, %v668, %v669
        %v671 = vrot.slane %v669, 4
        %v672 = vrot.slane %v540, 7
        %v673 = vsel %vm578, %v671, %v672
        %v674 = vrot.slane %v672, 4
        %v675 = vrot.slane %v541, 7
        %v676 = vsel %vm578, %v674, %v675
        %v677 = vld [vmem:[#allocation2 + $0x40] sm:$0xf]
        %v678 = vld [vmem:[#allocation2 + $0x88] sm:$0xf]
        %vm679 = vsmask.f32 256
        %vm680 = vsmask.f32 4368
        %vm681 = vmor %vm679, %vm680
        %v683 = vshrl.u32 %v508, 16
        %v685 = vrot.slane %v683, 7
        %v686 = vrot.slane %v685, 4
        %v688 = vshrl.u32 %v509, 16
        %v690 = vrot.slane %v688, 7
        %v691 = vshll.u32 %v509, 16
        %v693 = vor.u32 %v690, %v691
        %v694 = vsel %vm681, %v686, %v693
        %v695 = vrot.slane %v690, 4
        %v697 = vshrl.u32 %v510, 16
        %v699 = vrot.slane %v697, 7
        %v700 = vshll.u32 %v510, 16
        %v702 = vor.u32 %v699, %v700
        %v703 = vsel %vm681, %v695, %v702
        %v704 = vrot.slane %v699, 4
        %v706 = vshrl.u32 %v511, 16
        %v708 = vrot.slane %v706, 7
        %v709 = vshll.u32 %v511, 16
        %v711 = vor.u32 %v708, %v709
        %v712 = vsel %vm681, %v704, %v711
        %v713 = vrot.slane %v708, 4
        %v715 = vshrl.u32 %v512, 16
        %v717 = vrot.slane %v715, 7
        %v718 = vshll.u32 %v512, 16
        %v720 = vor.u32 %v717, %v718
        %v721 = vsel %vm681, %v713, %v720
        %v722 = vrot.slane %v717, 4
        %v724 = vshrl.u32 %v513, 16
        %v726 = vrot.slane %v724, 7
        %v727 = vshll.u32 %v513, 16
        %v729 = vor.u32 %v726, %v727
        %v730 = vsel %vm681, %v722, %v729
        %v731 = vrot.slane %v726, 4
        %v733 = vshrl.u32 %v514, 16
        %v735 = vrot.slane %v733, 7
        %v736 = vshll.u32 %v514, 16
        %v738 = vor.u32 %v735, %v736
        %v739 = vsel %vm681, %v731, %v738
        %v740 = vrot.slane %v735, 4
        %v742 = vshrl.u32 %v515, 16
        %v744 = vrot.slane %v742, 7
        %v745 = vshll.u32 %v515, 16
        %v747 = vor.u32 %v744, %v745
        %v748 = vsel %vm681, %v740, %v747
        %v749 = vrot.slane %v744, 4
        %v751 = vshrl.u32 %v516, 16
        %v753 = vrot.slane %v751, 7
        %v754 = vshll.u32 %v516, 16
        %v756 = vor.u32 %v753, %v754
        %v757 = vsel %vm681, %v749, %v756
        %v758 = vrot.slane %v753, 4
        %v760 = vshrl.u32 %v517, 16
        %v762 = vrot.slane %v760, 7
        %v763 = vshll.u32 %v517, 16
        %v765 = vor.u32 %v762, %v763
        %v766 = vsel %vm681, %v758, %v765
        %v767 = vrot.slane %v762, 4
        %v769 = vshrl.u32 %v518, 16
        %v771 = vrot.slane %v769, 7
        %v772 = vshll.u32 %v518, 16
        %v774 = vor.u32 %v771, %v772
        %v775 = vsel %vm681, %v767, %v774
        %v776 = vrot.slane %v771, 4
        %v778 = vshrl.u32 %v519, 16
        %v780 = vrot.slane %v778, 7
        %v781 = vshll.u32 %v519, 16
        %v783 = vor.u32 %v780, %v781
        %v784 = vsel %vm681, %v776, %v783
        %v785 = vrot.slane %v780, 4
        %v787 = vshrl.u32 %v520, 16
        %v789 = vrot.slane %v787, 7
        %v790 = vshll.u32 %v520, 16
        %v792 = vor.u32 %v789, %v790
        %v793 = vsel %vm681, %v785, %v792
        %v794 = vrot.slane %v789, 4
        %v796 = vshrl.u32 %v521, 16
        %v798 = vrot.slane %v796, 7
        %v799 = vshll.u32 %v521, 16
        %v801 = vor.u32 %v798, %v799
        %v802 = vsel %vm681, %v794, %v801
        %v803 = vrot.slane %v798, 4
        %v805 = vshrl.u32 %v522, 16
        %v807 = vrot.slane %v805, 7
        %v808 = vshll.u32 %v522, 16
        %v810 = vor.u32 %v807, %v808
        %v811 = vsel %vm681, %v803, %v810
        %v812 = vrot.slane %v807, 4
        %v814 = vshrl.u32 %v523, 16
        %v816 = vrot.slane %v814, 7
        %v817 = vshll.u32 %v523, 16
        %v819 = vor.u32 %v816, %v817
        %v820 = vsel %vm681, %v812, %v819
        %v821 = vrot.slane %v816, 4
        %v823 = vshrl.u32 %v677, 16
        %v825 = vrot.slane %v823, 7
        %v826 = vshll.u32 %v677, 16
        %v828 = vor.u32 %v825, %v826
        %v829 = vsel %vm681, %v821, %v828
        %v831 = vshrl.u32 %v525, 16
        %v833 = vrot.slane %v831, 7
        %v834 = vrot.slane %v833, 4
        %v836 = vshrl.u32 %v526, 16
        %v838 = vrot.slane %v836, 7
        %v839 = vshll.u32 %v526, 16
        %v841 = vor.u32 %v838, %v839
        %v842 = vsel %vm681, %v834, %v841
        %v843 = vrot.slane %v838, 4
        %v845 = vshrl.u32 %v527, 16
        %v847 = vrot.slane %v845, 7
        %v848 = vshll.u32 %v527, 16
        %v850 = vor.u32 %v847, %v848
        %v851 = vsel %vm681, %v843, %v850
        %v852 = vrot.slane %v847, 4
        %v854 = vshrl.u32 %v528, 16
        %v856 = vrot.slane %v854, 7
        %v857 = vshll.u32 %v528, 16
        %v859 = vor.u32 %v856, %v857
        %v860 = vsel %vm681, %v852, %v859
        %v861 = vrot.slane %v856, 4
        %v863 = vshrl.u32 %v529, 16
        %v865 = vrot.slane %v863, 7
        %v866 = vshll.u32 %v529, 16
        %v868 = vor.u32 %v865, %v866
        %v869 = vsel %vm681, %v861, %v868
        %v870 = vrot.slane %v865, 4
        %v872 = vshrl.u32 %v530, 16
        %v874 = vrot.slane %v872, 7
        %v875 = vshll.u32 %v530, 16
        %v877 = vor.u32 %v874, %v875
        %v878 = vsel %vm681, %v870, %v877
        %v879 = vrot.slane %v874, 4
        %v881 = vshrl.u32 %v531, 16
        %v883 = vrot.slane %v881, 7
        %v884 = vshll.u32 %v531, 16
        %v886 = vor.u32 %v883, %v884
        %v887 = vsel %vm681, %v879, %v886
        %v888 = vrot.slane %v883, 4
        %v890 = vshrl.u32 %v532, 16
        %v892 = vrot.slane %v890, 7
        %v893 = vshll.u32 %v532, 16
        %v895 = vor.u32 %v892, %v893
        %v896 = vsel %vm681, %v888, %v895
        %v897 = vrot.slane %v892, 4
        %v899 = vshrl.u32 %v533, 16
        %v901 = vrot.slane %v899, 7
        %v902 = vshll.u32 %v533, 16
        %v904 = vor.u32 %v901, %v902
        %v905 = vsel %vm681, %v897, %v904
        %v906 = vrot.slane %v901, 4
        %v908 = vshrl.u32 %v534, 16
        %v910 = vrot.slane %v908, 7
        %v911 = vshll.u32 %v534, 16
        %v913 = vor.u32 %v910, %v911
        %v914 = vsel %vm681, %v906, %v913
        %v915 = vrot.slane %v910, 4
        %v917 = vshrl.u32 %v535, 16
        %v919 = vrot.slane %v917, 7
        %v920 = vshll.u32 %v535, 16
        %v922 = vor.u32 %v919, %v920
        %v923 = vsel %vm681, %v915, %v922
        %v924 = vrot.slane %v919, 4
        %v926 = vshrl.u32 %v536, 16
        %v928 = vrot.slane %v926, 7
        %v929 = vshll.u32 %v536, 16
        %v931 = vor.u32 %v928, %v929
        %v932 = vsel %vm681, %v924, %v931
        %v933 = vrot.slane %v928, 4
        %v935 = vshrl.u32 %v537, 16
        %v937 = vrot.slane %v935, 7
        %v938 = vshll.u32 %v537, 16
        %v940 = vor.u32 %v937, %v938
        %v941 = vsel %vm681, %v933, %v940
        %v942 = vrot.slane %v937, 4
        %v944 = vshrl.u32 %v538, 16
        %v946 = vrot.slane %v944, 7
        %v947 = vshll.u32 %v538, 16
        %v949 = vor.u32 %v946, %v947
        %v950 = vsel %vm681, %v942, %v949
        %v951 = vrot.slane %v946, 4
        %v953 = vshrl.u32 %v539, 16
        %v955 = vrot.slane %v953, 7
        %v956 = vshll.u32 %v539, 16
        %v958 = vor.u32 %v955, %v956
        %v959 = vsel %vm681, %v951, %v958
        %v960 = vrot.slane %v955, 4
        %v962 = vshrl.u32 %v540, 16
        %v964 = vrot.slane %v962, 7
        %v965 = vshll.u32 %v540, 16
        %v967 = vor.u32 %v964, %v965
        %v968 = vsel %vm681, %v960, %v967
        %v969 = vrot.slane %v964, 4
        %v971 = vshrl.u32 %v678, 16
        %v973 = vrot.slane %v971, 7
        %v974 = vshll.u32 %v678, 16
        %v976 = vor.u32 %v973, %v974
        %v977 = vsel %vm681, %v969, %v976
        %v978 = vld [vmem:[#allocation2 + $0x4] sm:$0xf]
        %v979 = vld [vmem:[#allocation2 + $0x8] sm:$0xf]
        %v980 = vld [vmem:[#allocation2 + $0xc] sm:$0xf]
        %v981 = vld [vmem:[#allocation2 + $0x10] sm:$0xf]
        %v982 = vld [vmem:[#allocation2 + $0x14] sm:$0xf]
        %v983 = vld [vmem:[#allocation2 + $0x18] sm:$0xf]
        %v984 = vld [vmem:[#allocation2 + $0x1c] sm:$0xf]
        %v985 = vld [vmem:[#allocation2 + $0x20] sm:$0xf]
        %v986 = vld [vmem:[#allocation2 + $0x24] sm:$0xf]
        %v987 = vld [vmem:[#allocation2 + $0x28] sm:$0xf]
        %v988 = vld [vmem:[#allocation2 + $0x2c] sm:$0xf]
        %v989 = vld [vmem:[#allocation2 + $0x30] sm:$0xf]
        %v990 = vld [vmem:[#allocation2 + $0x34] sm:$0xf]
        %v991 = vld [vmem:[#allocation2 + $0x38] sm:$0xf]
        %v992 = vld [vmem:[#allocation2 + $0x3c] sm:$0xf]
        %v993 = vld [vmem:[#allocation2 + $0x40] sm:$0xf]
        %v994 = vld [vmem:[#allocation2 + $0x44] sm:$0x1]
        %v995 = vld [vmem:[#allocation2 + $0x4c] sm:$0xf]
        %v996 = vld [vmem:[#allocation2 + $0x50] sm:$0xf]
        %v997 = vld [vmem:[#allocation2 + $0x54] sm:$0xf]
        %v998 = vld [vmem:[#allocation2 + $0x58] sm:$0xf]
        %v999 = vld [vmem:[#allocation2 + $0x5c] sm:$0xf]
        %v1000 = vld [vmem:[#allocation2 + $0x60] sm:$0xf]
        %v1001 = vld [vmem:[#allocation2 + $0x64] sm:$0xf]
        %v1002 = vld [vmem:[#allocation2 + $0x68] sm:$0xf]
        %v1003 = vld [vmem:[#allocation2 + $0x6c] sm:$0xf]
        %v1004 = vld [vmem:[#allocation2 + $0x70] sm:$0xf]
        %v1005 = vld [vmem:[#allocation2 + $0x74] sm:$0xf]
        %v1006 = vld [vmem:[#allocation2 + $0x78] sm:$0xf]
        %v1007 = vld [vmem:[#allocation2 + $0x7c] sm:$0xf]
        %v1008 = vld [vmem:[#allocation2 + $0x80] sm:$0xf]
        %v1009 = vld [vmem:[#allocation2 + $0x84] sm:$0xf]
        %v1010 = vld [vmem:[#allocation2 + $0x88] sm:$0xf]
        %v1011 = vld [vmem:[#allocation2 + $0x8c] sm:$0x1]
        %vm1012 = vsmask.f32 3328
        %vm1013 = vsmask.f32 7440
        %vm1014 = vmor %vm1012, %vm1013
        %v1016 = vshrl.u32 %v978, 16
        %v1018 = vrot.slane %v1016, 4
        %v1019 = vshll.u32 %v978, 16
        %v1021 = vrot.slane %v1019, 5
        %v1022 = vor.u32 %v1018, %v1021
        %v1023 = vrot.slane %v1022, 4
        %v1025 = vshll.u32 %v979, 16
        %v1027 = vrot.slane %v1025, 5
        %v1028 = vsel %vm1014, %v1023, %v1027
        %v1029 = vshrl.u32 %v979, 16
        %v1031 = vrot.slane %v1029, 4
        %v1032 = vor.u32 %v1031, %v1027
        %v1033 = vrot.slane %v1032, 4
        %v1035 = vshll.u32 %v980, 16
        %v1037 = vrot.slane %v1035, 5
        %v1038 = vsel %vm1014, %v1033, %v1037
        %v1039 = vshrl.u32 %v980, 16
        %v1041 = vrot.slane %v1039, 4
        %v1042 = vor.u32 %v1041, %v1037
        %v1043 = vrot.slane %v1042, 4
        %v1045 = vshll.u32 %v981, 16
        %v1047 = vrot.slane %v1045, 5
        %v1048 = vsel %vm1014, %v1043, %v1047
        %v1049 = vshrl.u32 %v981, 16
        %v1051 = vrot.slane %v1049, 4
        %v1052 = vor.u32 %v1051, %v1047
        %v1053 = vrot.slane %v1052, 4
        %v1055 = vshll.u32 %v982, 16
        %v1057 = vrot.slane %v1055, 5
        %v1058 = vsel %vm1014, %v1053, %v1057
        %v1059 = vshrl.u32 %v982, 16
        %v1061 = vrot.slane %v1059, 4
        %v1062 = vor.u32 %v1061, %v1057
        %v1063 = vrot.slane %v1062, 4
        %v1065 = vshll.u32 %v983, 16
        %v1067 = vrot.slane %v1065, 5
        %v1068 = vsel %vm1014, %v1063, %v1067
        %v1069 = vshrl.u32 %v983, 16
        %v1071 = vrot.slane %v1069, 4
        %v1072 = vor.u32 %v1071, %v1067
        %v1073 = vrot.slane %v1072, 4
        %v1075 = vshll.u32 %v984, 16
        %v1077 = vrot.slane %v1075, 5
        %v1078 = vsel %vm1014, %v1073, %v1077
        %v1079 = vshrl.u32 %v984, 16
        %v1081 = vrot.slane %v1079, 4
        %v1082 = vor.u32 %v1081, %v1077
        %v1083 = vrot.slane %v1082, 4
        %v1085 = vshll.u32 %v985, 16
        %v1087 = vrot.slane %v1085, 5
        %v1088 = vsel %vm1014, %v1083, %v1087
        %v1089 = vshrl.u32 %v985, 16
        %v1091 = vrot.slane %v1089, 4
        %v1092 = vor.u32 %v1091, %v1087
        %v1093 = vrot.slane %v1092, 4
        %v1095 = vshll.u32 %v986, 16
        %v1097 = vrot.slane %v1095, 5
        %v1098 = vsel %vm1014, %v1093, %v1097
        %v1099 = vshrl.u32 %v986, 16
        %v1101 = vrot.slane %v1099, 4
        %v1102 = vor.u32 %v1101, %v1097
        %v1103 = vrot.slane %v1102, 4
        %v1105 = vshll.u32 %v987, 16
        %v1107 = vrot.slane %v1105, 5
        %v1108 = vsel %vm1014, %v1103, %v1107
        %v1109 = vshrl.u32 %v987, 16
        %v1111 = vrot.slane %v1109, 4
        %v1112 = vor.u32 %v1111, %v1107
        %v1113 = vrot.slane %v1112, 4
        %v1115 = vshll.u32 %v988, 16
        %v1117 = vrot.slane %v1115, 5
        %v1118 = vsel %vm1014, %v1113, %v1117
        %v1119 = vshrl.u32 %v988, 16
        %v1121 = vrot.slane %v1119, 4
        %v1122 = vor.u32 %v1121, %v1117
        %v1123 = vrot.slane %v1122, 4
        %v1125 = vshll.u32 %v989, 16
        %v1127 = vrot.slane %v1125, 5
        %v1128 = vsel %vm1014, %v1123, %v1127
        %v1129 = vshrl.u32 %v989, 16
        %v1131 = vrot.slane %v1129, 4
        %v1132 = vor.u32 %v1131, %v1127
        %v1133 = vrot.slane %v1132, 4
        %v1135 = vshll.u32 %v990, 16
        %v1137 = vrot.slane %v1135, 5
        %v1138 = vsel %vm1014, %v1133, %v1137
        %v1139 = vshrl.u32 %v990, 16
        %v1141 = vrot.slane %v1139, 4
        %v1142 = vor.u32 %v1141, %v1137
        %v1143 = vrot.slane %v1142, 4
        %v1145 = vshll.u32 %v991, 16
        %v1147 = vrot.slane %v1145, 5
        %v1148 = vsel %vm1014, %v1143, %v1147
        %v1149 = vshrl.u32 %v991, 16
        %v1151 = vrot.slane %v1149, 4
        %v1152 = vor.u32 %v1151, %v1147
        %v1153 = vrot.slane %v1152, 4
        %v1155 = vshll.u32 %v992, 16
        %v1157 = vrot.slane %v1155, 5
        %v1158 = vsel %vm1014, %v1153, %v1157
        %v1159 = vshrl.u32 %v992, 16
        %v1161 = vrot.slane %v1159, 4
        %v1162 = vor.u32 %v1161, %v1157
        %v1163 = vrot.slane %v1162, 4
        %v1165 = vshll.u32 %v993, 16
        %v1167 = vrot.slane %v1165, 5
        %v1168 = vsel %vm1014, %v1163, %v1167
        %v1169 = vshrl.u32 %v993, 16
        %v1171 = vrot.slane %v1169, 4
        %v1172 = vor.u32 %v1171, %v1167
        %v1173 = vrot.slane %v1172, 4
        %v1175 = vshll.u32 %v994, 16
        %v1177 = vrot.slane %v1175, 5
        %v1178 = vsel %vm1014, %v1173, %v1177
        %v1180 = vshrl.u32 %v995, 16
        %v1182 = vrot.slane %v1180, 4
        %v1183 = vshll.u32 %v995, 16
        %v1185 = vrot.slane %v1183, 5
        %v1186 = vor.u32 %v1182, %v1185
        %v1187 = vrot.slane %v1186, 4
        %v1189 = vshll.u32 %v996, 16
        %v1191 = vrot.slane %v1189, 5
        %v1192 = vsel %vm1014, %v1187, %v1191
        %v1193 = vshrl.u32 %v996, 16
        %v1195 = vrot.slane %v1193, 4
        %v1196 = vor.u32 %v1195, %v1191
        %v1197 = vrot.slane %v1196, 4
        %v1199 = vshll.u32 %v997, 16
        %v1201 = vrot.slane %v1199, 5
        %v1202 = vsel %vm1014, %v1197, %v1201
        %v1203 = vshrl.u32 %v997, 16
        %v1205 = vrot.slane %v1203, 4
        %v1206 = vor.u32 %v1205, %v1201
        %v1207 = vrot.slane %v1206, 4
        %v1209 = vshll.u32 %v998, 16
        %v1211 = vrot.slane %v1209, 5
        %v1212 = vsel %vm1014, %v1207, %v1211
        %v1213 = vshrl.u32 %v998, 16
        %v1215 = vrot.slane %v1213, 4
        %v1216 = vor.u32 %v1215, %v1211
        %v1217 = vrot.slane %v1216, 4
        %v1219 = vshll.u32 %v999, 16
        %v1221 = vrot.slane %v1219, 5
        %v1222 = vsel %vm1014, %v1217, %v1221
        %v1223 = vshrl.u32 %v999, 16
        %v1225 = vrot.slane %v1223, 4
        %v1226 = vor.u32 %v1225, %v1221
        %v1227 = vrot.slane %v1226, 4
        %v1229 = vshll.u32 %v1000, 16
        %v1231 = vrot.slane %v1229, 5
        %v1232 = vsel %vm1014, %v1227, %v1231
        %v1233 = vshrl.u32 %v1000, 16
        %v1235 = vrot.slane %v1233, 4
        %v1236 = vor.u32 %v1235, %v1231
        %v1237 = vrot.slane %v1236, 4
        %v1239 = vshll.u32 %v1001, 16
        %v1241 = vrot.slane %v1239, 5
        %v1242 = vsel %vm1014, %v1237, %v1241
        %v1243 = vshrl.u32 %v1001, 16
        %v1245 = vrot.slane %v1243, 4
        %v1246 = vor.u32 %v1245, %v1241
        %v1247 = vrot.slane %v1246, 4
        %v1249 = vshll.u32 %v1002, 16
        %v1251 = vrot.slane %v1249, 5
        %v1252 = vsel %vm1014, %v1247, %v1251
        %v1253 = vshrl.u32 %v1002, 16
        %v1255 = vrot.slane %v1253, 4
        %v1256 = vor.u32 %v1255, %v1251
        %v1257 = vrot.slane %v1256, 4
        %v1259 = vshll.u32 %v1003, 16
        %v1261 = vrot.slane %v1259, 5
        %v1262 = vsel %vm1014, %v1257, %v1261
        %v1263 = vshrl.u32 %v1003, 16
        %v1265 = vrot.slane %v1263, 4
        %v1266 = vor.u32 %v1265, %v1261
        %v1267 = vrot.slane %v1266, 4
        %v1269 = vshll.u32 %v1004, 16
        %v1271 = vrot.slane %v1269, 5
        %v1272 = vsel %vm1014, %v1267, %v1271
        %v1273 = vshrl.u32 %v1004, 16
        %v1275 = vrot.slane %v1273, 4
        %v1276 = vor.u32 %v1275, %v1271
        %v1277 = vrot.slane %v1276, 4
        %v1279 = vshll.u32 %v1005, 16
        %v1281 = vrot.slane %v1279, 5
        %v1282 = vsel %vm1014, %v1277, %v1281
        %v1283 = vshrl.u32 %v1005, 16
        %v1285 = vrot.slane %v1283, 4
        %v1286 = vor.u32 %v1285, %v1281
        %v1287 = vrot.slane %v1286, 4
        %v1289 = vshll.u32 %v1006, 16
        %v1291 = vrot.slane %v1289, 5
        %v1292 = vsel %vm1014, %v1287, %v1291
        %v1293 = vshrl.u32 %v1006, 16
        %v1295 = vrot.slane %v1293, 4
        %v1296 = vor.u32 %v1295, %v1291
        %v1297 = vrot.slane %v1296, 4
        %v1299 = vshll.u32 %v1007, 16
        %v1301 = vrot.slane %v1299, 5
        %v1302 = vsel %vm1014, %v1297, %v1301
        %v1303 = vshrl.u32 %v1007, 16
        %v1305 = vrot.slane %v1303, 4
        %v1306 = vor.u32 %v1305, %v1301
        %v1307 = vrot.slane %v1306, 4
        %v1309 = vshll.u32 %v1008, 16
        %v1311 = vrot.slane %v1309, 5
        %v1312 = vsel %vm1014, %v1307, %v1311
        %v1313 = vshrl.u32 %v1008, 16
        %v1315 = vrot.slane %v1313, 4
        %v1316 = vor.u32 %v1315, %v1311
        %v1317 = vrot.slane %v1316, 4
        %v1319 = vshll.u32 %v1009, 16
        %v1321 = vrot.slane %v1319, 5
        %v1322 = vsel %vm1014, %v1317, %v1321
        %v1323 = vshrl.u32 %v1009, 16
        %v1325 = vrot.slane %v1323, 4
        %v1326 = vor.u32 %v1325, %v1321
        %v1327 = vrot.slane %v1326, 4
        %v1329 = vshll.u32 %v1010, 16
        %v1331 = vrot.slane %v1329, 5
        %v1332 = vsel %vm1014, %v1327, %v1331
        %v1333 = vshrl.u32 %v1010, 16
        %v1335 = vrot.slane %v1333, 4
        %v1336 = vor.u32 %v1335, %v1331
        %v1337 = vrot.slane %v1336, 4
        %v1339 = vshll.u32 %v1011, 16
        %v1341 = vrot.slane %v1339, 5
        %v1342 = vsel %vm1014, %v1337, %v1341
        %v1343 = vld [vmem:[#allocation2 + $0x4] sm:$0xe]
        %v1344 = vld [vmem:[#allocation2 + $0x4c] sm:$0xe]
        %vm1379 = vcmask 1042432
        %vm1380 = vcmask 1046532
        %vm1381 = vmor %vm1379, %vm1380
        %v1382 = vrot.slane %v1343, 5
        %v1383 = vrot.slane %v1382, 4
        %v1384 = vrot.slane %v979, 5
        %v1385 = vsel %vm1381, %v1383, %v1384
        %v1386 = vrot.slane %v1384, 4
        %v1387 = vrot.slane %v980, 5
        %v1388 = vsel %vm1381, %v1386, %v1387
        %v1389 = vrot.slane %v1387, 4
        %v1390 = vrot.slane %v981, 5
        %v1391 = vsel %vm1381, %v1389, %v1390
        %v1392 = vrot.slane %v1390, 4
        %v1393 = vrot.slane %v982, 5
        %v1394 = vsel %vm1381, %v1392, %v1393
        %v1395 = vrot.slane %v1393, 4
        %v1396 = vrot.slane %v983, 5
        %v1397 = vsel %vm1381, %v1395, %v1396
        %v1398 = vrot.slane %v1396, 4
        %v1399 = vrot.slane %v984, 5
        %v1400 = vsel %vm1381, %v1398, %v1399
        %v1401 = vrot.slane %v1399, 4
        %v1402 = vrot.slane %v985, 5
        %v1403 = vsel %vm1381, %v1401, %v1402
        %v1404 = vrot.slane %v1402, 4
        %v1405 = vrot.slane %v986, 5
        %v1406 = vsel %vm1381, %v1404, %v1405
        %v1407 = vrot.slane %v1405, 4
        %v1408 = vrot.slane %v987, 5
        %v1409 = vsel %vm1381, %v1407, %v1408
        %v1410 = vrot.slane %v1408, 4
        %v1411 = vrot.slane %v988, 5
        %v1412 = vsel %vm1381, %v1410, %v1411
        %v1413 = vrot.slane %v1411, 4
        %v1414 = vrot.slane %v989, 5
        %v1415 = vsel %vm1381, %v1413, %v1414
        %v1416 = vrot.slane %v1414, 4
        %v1417 = vrot.slane %v990, 5
        %v1418 = vsel %vm1381, %v1416, %v1417
        %v1419 = vrot.slane %v1417, 4
        %v1420 = vrot.slane %v991, 5
        %v1421 = vsel %vm1381, %v1419, %v1420
        %v1422 = vrot.slane %v1420, 4
        %v1423 = vrot.slane %v992, 5
        %v1424 = vsel %vm1381, %v1422, %v1423
        %v1425 = vrot.slane %v1423, 4
        %v1426 = vrot.slane %v993, 5
        %v1427 = vsel %vm1381, %v1425, %v1426
        %v1428 = vrot.slane %v1426, 4
        %v1429 = vrot.slane %v994, 5
        %v1430 = vsel %vm1381, %v1428, %v1429
        %v1431 = vrot.slane %v1344, 5
        %v1432 = vrot.slane %v1431, 4
        %v1433 = vrot.slane %v996, 5
        %v1434 = vsel %vm1381, %v1432, %v1433
        %v1435 = vrot.slane %v1433, 4
        %v1436 = vrot.slane %v997, 5
        %v1437 = vsel %vm1381, %v1435, %v1436
        %v1438 = vrot.slane %v1436, 4
        %v1439 = vrot.slane %v998, 5
        %v1440 = vsel %vm1381, %v1438, %v1439
        %v1441 = vrot.slane %v1439, 4
        %v1442 = vrot.slane %v999, 5
        %v1443 = vsel %vm1381, %v1441, %v1442
        %v1444 = vrot.slane %v1442, 4
        %v1445 = vrot.slane %v1000, 5
        %v1446 = vsel %vm1381, %v1444, %v1445
        %v1447 = vrot.slane %v1445, 4
        %v1448 = vrot.slane %v1001, 5
        %v1449 = vsel %vm1381, %v1447, %v1448
        %v1450 = vrot.slane %v1448, 4
        %v1451 = vrot.slane %v1002, 5
        %v1452 = vsel %vm1381, %v1450, %v1451
        %v1453 = vrot.slane %v1451, 4
        %v1454 = vrot.slane %v1003, 5
        %v1455 = vsel %vm1381, %v1453, %v1454
        %v1456 = vrot.slane %v1454, 4
        %v1457 = vrot.slane %v1004, 5
        %v1458 = vsel %vm1381, %v1456, %v1457
        %v1459 = vrot.slane %v1457, 4
        %v1460 = vrot.slane %v1005, 5
        %v1461 = vsel %vm1381, %v1459, %v1460
        %v1462 = vrot.slane %v1460, 4
        %v1463 = vrot.slane %v1006, 5
        %v1464 = vsel %vm1381, %v1462, %v1463
        %v1465 = vrot.slane %v1463, 4
        %v1466 = vrot.slane %v1007, 5
        %v1467 = vsel %vm1381, %v1465, %v1466
        %v1468 = vrot.slane %v1466, 4
        %v1469 = vrot.slane %v1008, 5
        %v1470 = vsel %vm1381, %v1468, %v1469
        %v1471 = vrot.slane %v1469, 4
        %v1472 = vrot.slane %v1009, 5
        %v1473 = vsel %vm1381, %v1471, %v1472
        %v1474 = vrot.slane %v1472, 4
        %v1475 = vrot.slane %v1010, 5
        %v1476 = vsel %vm1381, %v1474, %v1475
        %v1477 = vrot.slane %v1475, 4
        %v1478 = vrot.slane %v1011, 5
        %v1479 = vsel %vm1381, %v1477, %v1478
        %v1480 = vunpack.c.l.b16 %v582
        %v1481 = vunpack.c.l.b16 %v585
        %v1482 = vunpack.c.l.b16 %v588
        %v1483 = vunpack.c.l.b16 %v591
        %v1484 = vunpack.c.l.b16 %v594
        %v1485 = vunpack.c.l.b16 %v597
        %v1486 = vunpack.c.l.b16 %v600
        %v1487 = vunpack.c.l.b16 %v603
        %v1488 = vunpack.c.l.b16 %v606
        %v1489 = vunpack.c.l.b16 %v609
        %v1490 = vunpack.c.l.b16 %v612
        %v1491 = vunpack.c.l.b16 %v615
        %v1492 = vunpack.c.l.b16 %v618
        %v1493 = vunpack.c.l.b16 %v621
        %v1494 = vunpack.c.l.b16 %v624
        %v1495 = vunpack.c.l.b16 %v627
        %v1496 = vunpack.c.l.b16 %v631
        %v1497 = vunpack.c.l.b16 %v634
        %v1498 = vunpack.c.l.b16 %v637
        %v1499 = vunpack.c.l.b16 %v640
        %v1500 = vunpack.c.l.b16 %v643
        %v1501 = vunpack.c.l.b16 %v646
        %v1502 = vunpack.c.l.b16 %v649
        %v1503 = vunpack.c.l.b16 %v652
        %v1504 = vunpack.c.l.b16 %v655
        %v1505 = vunpack.c.l.b16 %v658
        %v1506 = vunpack.c.l.b16 %v661
        %v1507 = vunpack.c.l.b16 %v664
        %v1508 = vunpack.c.l.b16 %v667
        %v1509 = vunpack.c.l.b16 %v670
        %v1510 = vunpack.c.l.b16 %v673
        %v1511 = vunpack.c.l.b16 %v676
        %v1512 = vpack.c.b16 %v1481, %v1480
        %v1513 = vpack.c.b16 %v1483, %v1482
        %v1514 = vpack.c.b16 %v1485, %v1484
        %v1515 = vpack.c.b16 %v1487, %v1486
        %v1516 = vpack.c.b16 %v1489, %v1488
        %v1517 = vpack.c.b16 %v1491, %v1490
        %v1518 = vpack.c.b16 %v1493, %v1492
        %v1519 = vpack.c.b16 %v1495, %v1494
        %v1520 = vpack.c.b16 %v1497, %v1496
        %v1521 = vpack.c.b16 %v1499, %v1498
        %v1522 = vpack.c.b16 %v1501, %v1500
        %v1523 = vpack.c.b16 %v1503, %v1502
        %v1524 = vpack.c.b16 %v1505, %v1504
        %v1525 = vpack.c.b16 %v1507, %v1506
        %v1526 = vpack.c.b16 %v1509, %v1508
        %v1527 = vpack.c.b16 %v1511, %v1510
        %v1544 = vunpack.c.l.b16 %v694
        %v1545 = vunpack.c.l.b16 %v703
        %v1546 = vunpack.c.l.b16 %v712
        %v1547 = vunpack.c.l.b16 %v721
        %v1548 = vunpack.c.l.b16 %v730
        %v1549 = vunpack.c.l.b16 %v739
        %v1550 = vunpack.c.l.b16 %v748
        %v1551 = vunpack.c.l.b16 %v757
        %v1552 = vunpack.c.l.b16 %v766
        %v1553 = vunpack.c.l.b16 %v775
        %v1554 = vunpack.c.l.b16 %v784
        %v1555 = vunpack.c.l.b16 %v793
        %v1556 = vunpack.c.l.b16 %v802
        %v1557 = vunpack.c.l.b16 %v811
        %v1558 = vunpack.c.l.b16 %v820
        %v1559 = vunpack.c.l.b16 %v829
        %v1560 = vunpack.c.l.b16 %v842
        %v1561 = vunpack.c.l.b16 %v851
        %v1562 = vunpack.c.l.b16 %v860
        %v1563 = vunpack.c.l.b16 %v869
        %v1564 = vunpack.c.l.b16 %v878
        %v1565 = vunpack.c.l.b16 %v887
        %v1566 = vunpack.c.l.b16 %v896
        %v1567 = vunpack.c.l.b16 %v905
        %v1568 = vunpack.c.l.b16 %v914
        %v1569 = vunpack.c.l.b16 %v923
        %v1570 = vunpack.c.l.b16 %v932
        %v1571 = vunpack.c.l.b16 %v941
        %v1572 = vunpack.c.l.b16 %v950
        %v1573 = vunpack.c.l.b16 %v959
        %v1574 = vunpack.c.l.b16 %v968
        %v1575 = vunpack.c.l.b16 %v977
        %v1576 = vpack.c.b16 %v1545, %v1544
        %v1577 = vpack.c.b16 %v1547, %v1546
        %v1578 = vpack.c.b16 %v1549, %v1548
        %v1579 = vpack.c.b16 %v1551, %v1550
        %v1580 = vpack.c.b16 %v1553, %v1552
        %v1581 = vpack.c.b16 %v1555, %v1554
        %v1582 = vpack.c.b16 %v1557, %v1556
        %v1583 = vpack.c.b16 %v1559, %v1558
        %v1584 = vpack.c.b16 %v1561, %v1560
        %v1585 = vpack.c.b16 %v1563, %v1562
        %v1586 = vpack.c.b16 %v1565, %v1564
        %v1587 = vpack.c.b16 %v1567, %v1566
        %v1588 = vpack.c.b16 %v1569, %v1568
        %v1589 = vpack.c.b16 %v1571, %v1570
        %v1590 = vpack.c.b16 %v1573, %v1572
        %v1591 = vpack.c.b16 %v1575, %v1574
        %v1610 = vunpack.c.l.b16 %v509
        %v1611 = vunpack.c.l.b16 %v510
        %v1612 = vunpack.c.l.b16 %v511
        %v1613 = vunpack.c.l.b16 %v512
        %v1614 = vunpack.c.l.b16 %v513
        %v1615 = vunpack.c.l.b16 %v514
        %v1616 = vunpack.c.l.b16 %v515
        %v1617 = vunpack.c.l.b16 %v516
        %v1618 = vunpack.c.l.b16 %v517
        %v1619 = vunpack.c.l.b16 %v518
        %v1620 = vunpack.c.l.b16 %v519
        %v1621 = vunpack.c.l.b16 %v520
        %v1622 = vunpack.c.l.b16 %v521
        %v1623 = vunpack.c.l.b16 %v522
        %v1624 = vunpack.c.l.b16 %v523
        %v1625 = vunpack.c.l.b16 %v677
        %v1626 = vunpack.c.l.b16 %v526
        %v1627 = vunpack.c.l.b16 %v527
        %v1628 = vunpack.c.l.b16 %v528
        %v1629 = vunpack.c.l.b16 %v529
        %v1630 = vunpack.c.l.b16 %v530
        %v1631 = vunpack.c.l.b16 %v531
        %v1632 = vunpack.c.l.b16 %v532
        %v1633 = vunpack.c.l.b16 %v533
        %v1634 = vunpack.c.l.b16 %v534
        %v1635 = vunpack.c.l.b16 %v535
        %v1636 = vunpack.c.l.b16 %v536
        %v1637 = vunpack.c.l.b16 %v537
        %v1638 = vunpack.c.l.b16 %v538
        %v1639 = vunpack.c.l.b16 %v539
        %v1640 = vunpack.c.l.b16 %v540
        %v1641 = vunpack.c.l.b16 %v678
        %v1642 = vpack.c.b16 %v1611, %v1610
        %v1643 = vpack.c.b16 %v1613, %v1612
        %v1644 = vpack.c.b16 %v1615, %v1614
        %v1645 = vpack.c.b16 %v1617, %v1616
        %v1646 = vpack.c.b16 %v1619, %v1618
        %v1647 = vpack.c.b16 %v1621, %v1620
        %v1648 = vpack.c.b16 %v1623, %v1622
        %v1649 = vpack.c.b16 %v1625, %v1624
        %v1650 = vpack.c.b16 %v1627, %v1626
        %v1651 = vpack.c.b16 %v1629, %v1628
        %v1652 = vpack.c.b16 %v1631, %v1630
        %v1653 = vpack.c.b16 %v1633, %v1632
        %v1654 = vpack.c.b16 %v1635, %v1634
        %v1655 = vpack.c.b16 %v1637, %v1636
        %v1656 = vpack.c.b16 %v1639, %v1638
        %v1657 = vpack.c.b16 %v1641, %v1640
        %v1674 = vunpack.c.l.b16 %v1028
        %v1675 = vunpack.c.l.b16 %v1038
        %v1676 = vunpack.c.l.b16 %v1048
        %v1677 = vunpack.c.l.b16 %v1058
        %v1678 = vunpack.c.l.b16 %v1068
        %v1679 = vunpack.c.l.b16 %v1078
        %v1680 = vunpack.c.l.b16 %v1088
        %v1681 = vunpack.c.l.b16 %v1098
        %v1682 = vunpack.c.l.b16 %v1108
        %v1683 = vunpack.c.l.b16 %v1118
        %v1684 = vunpack.c.l.b16 %v1128
        %v1685 = vunpack.c.l.b16 %v1138
        %v1686 = vunpack.c.l.b16 %v1148
        %v1687 = vunpack.c.l.b16 %v1158
        %v1688 = vunpack.c.l.b16 %v1168
        %v1689 = vunpack.c.l.b16 %v1178
        %v1690 = vunpack.c.l.b16 %v1192
        %v1691 = vunpack.c.l.b16 %v1202
        %v1692 = vunpack.c.l.b16 %v1212
        %v1693 = vunpack.c.l.b16 %v1222
        %v1694 = vunpack.c.l.b16 %v1232
        %v1695 = vunpack.c.l.b16 %v1242
        %v1696 = vunpack.c.l.b16 %v1252
        %v1697 = vunpack.c.l.b16 %v1262
        %v1698 = vunpack.c.l.b16 %v1272
        %v1699 = vunpack.c.l.b16 %v1282
        %v1700 = vunpack.c.l.b16 %v1292
        %v1701 = vunpack.c.l.b16 %v1302
        %v1702 = vunpack.c.l.b16 %v1312
        %v1703 = vunpack.c.l.b16 %v1322
        %v1704 = vunpack.c.l.b16 %v1332
        %v1705 = vunpack.c.l.b16 %v1342
        %v1706 = vpack.c.b16 %v1675, %v1674
        %v1707 = vpack.c.b16 %v1677, %v1676
        %v1708 = vpack.c.b16 %v1679, %v1678
        %v1709 = vpack.c.b16 %v1681, %v1680
        %v1710 = vpack.c.b16 %v1683, %v1682
        %v1711 = vpack.c.b16 %v1685, %v1684
        %v1712 = vpack.c.b16 %v1687, %v1686
        %v1713 = vpack.c.b16 %v1689, %v1688
        %v1714 = vpack.c.b16 %v1691, %v1690
        %v1715 = vpack.c.b16 %v1693, %v1692
        %v1716 = vpack.c.b16 %v1695, %v1694
        %v1717 = vpack.c.b16 %v1697, %v1696
        %v1718 = vpack.c.b16 %v1699, %v1698
        %v1719 = vpack.c.b16 %v1701, %v1700
        %v1720 = vpack.c.b16 %v1703, %v1702
        %v1721 = vpack.c.b16 %v1705, %v1704
        %v1738 = vunpack.c.l.b16 %v1385
        %v1739 = vunpack.c.l.b16 %v1388
        %v1740 = vunpack.c.l.b16 %v1391
        %v1741 = vunpack.c.l.b16 %v1394
        %v1742 = vunpack.c.l.b16 %v1397
        %v1743 = vunpack.c.l.b16 %v1400
        %v1744 = vunpack.c.l.b16 %v1403
        %v1745 = vunpack.c.l.b16 %v1406
        %v1746 = vunpack.c.l.b16 %v1409
        %v1747 = vunpack.c.l.b16 %v1412
        %v1748 = vunpack.c.l.b16 %v1415
        %v1749 = vunpack.c.l.b16 %v1418
        %v1750 = vunpack.c.l.b16 %v1421
        %v1751 = vunpack.c.l.b16 %v1424
        %v1752 = vunpack.c.l.b16 %v1427
        %v1753 = vunpack.c.l.b16 %v1430
        %v1754 = vunpack.c.l.b16 %v1434
        %v1755 = vunpack.c.l.b16 %v1437
        %v1756 = vunpack.c.l.b16 %v1440
        %v1757 = vunpack.c.l.b16 %v1443
        %v1758 = vunpack.c.l.b16 %v1446
        %v1759 = vunpack.c.l.b16 %v1449
        %v1760 = vunpack.c.l.b16 %v1452
        %v1761 = vunpack.c.l.b16 %v1455
        %v1762 = vunpack.c.l.b16 %v1458
        %v1763 = vunpack.c.l.b16 %v1461
        %v1764 = vunpack.c.l.b16 %v1464
        %v1765 = vunpack.c.l.b16 %v1467
        %v1766 = vunpack.c.l.b16 %v1470
        %v1767 = vunpack.c.l.b16 %v1473
        %v1768 = vunpack.c.l.b16 %v1476
        %v1769 = vunpack.c.l.b16 %v1479
        %v1770 = vpack.c.b16 %v1739, %v1738
        %v1771 = vpack.c.b16 %v1741, %v1740
        %v1772 = vpack.c.b16 %v1743, %v1742
        %v1773 = vpack.c.b16 %v1745, %v1744
        %v1774 = vpack.c.b16 %v1747, %v1746
        %v1775 = vpack.c.b16 %v1749, %v1748
        %v1776 = vpack.c.b16 %v1751, %v1750
        %v1777 = vpack.c.b16 %v1753, %v1752
        %v1778 = vpack.c.b16 %v1755, %v1754
        %v1779 = vpack.c.b16 %v1757, %v1756
        %v1780 = vpack.c.b16 %v1759, %v1758
        %v1781 = vpack.c.b16 %v1761, %v1760
        %v1782 = vpack.c.b16 %v1763, %v1762
        %v1783 = vpack.c.b16 %v1765, %v1764
        %v1784 = vpack.c.b16 %v1767, %v1766
        %v1785 = vpack.c.b16 %v1769, %v1768
        %v1802 = vld [vmem:[#allocation6] sm:$0xf]
        %v1803 = vld [vmem:[#allocation6 + $0x4] sm:$0xf]
        %v1804 = vld [vmem:[#allocation6 + $0x8] sm:$0xf]
        %v1805 = vld [vmem:[#allocation6 + $0xc] sm:$0xf]
        %v1806 = vld [vmem:[#allocation6 + $0x10] sm:$0xf]
        %v1807 = vld [vmem:[#allocation6 + $0x14] sm:$0xf]
        %v1808 = vld [vmem:[#allocation6 + $0x18] sm:$0xf]
        %v1809 = vld [vmem:[#allocation6 + $0x1c] sm:$0xf]
        %v1810 = vld [vmem:[#allocation6 + $0x20] sm:$0xf]
        %v1811 = vld [vmem:[#allocation6 + $0x24] sm:$0xf]
        %v1812 = vld [vmem:[#allocation6 + $0x28] sm:$0xf]
        %v1813 = vld [vmem:[#allocation6 + $0x2c] sm:$0xf]
        %v1814 = vld [vmem:[#allocation6 + $0x30] sm:$0xf]
        %v1815 = vld [vmem:[#allocation6 + $0x34] sm:$0xf]
        %v1816 = vld [vmem:[#allocation6 + $0x38] sm:$0xf]
        %v1817 = vld [vmem:[#allocation6 + $0x3c] sm:$0xf]
        %v1818 = vld [vmem:[#allocation6 + $0x40] sm:$0xf]
        %v1819 = vld [vmem:[#allocation6 + $0x44] sm:$0xf]
        %v1820 = vld [vmem:[#allocation6 + $0x48] sm:$0xf]
        %v1821 = vld [vmem:[#allocation6 + $0x4c] sm:$0xf]
        %v1822 = vld [vmem:[#allocation6 + $0x50] sm:$0xf]
        %v1823 = vld [vmem:[#allocation6 + $0x54] sm:$0xf]
        %v1824 = vld [vmem:[#allocation6 + $0x58] sm:$0xf]
        %v1825 = vld [vmem:[#allocation6 + $0x5c] sm:$0xf]
        %v1826 = vld [vmem:[#allocation6 + $0x60] sm:$0xf]
        %v1827 = vld [vmem:[#allocation6 + $0x64] sm:$0xf]
        %v1828 = vld [vmem:[#allocation6 + $0x68] sm:$0xf]
        %v1829 = vld [vmem:[#allocation6 + $0x6c] sm:$0xf]
        %v1830 = vld [vmem:[#allocation6 + $0x70] sm:$0xf]
        %v1831 = vld [vmem:[#allocation6 + $0x74] sm:$0xf]
        %v1832 = vld [vmem:[#allocation6 + $0x78] sm:$0xf]
        %v1833 = vld [vmem:[#allocation6 + $0x7c] sm:$0xf]
        %v1834 = vld [vmem:[#allocation6 + $0x80] sm:$0xf]
        %v1835 = vld [vmem:[#allocation6 + $0x84] sm:$0xf]
        %v1836 = vld [vmem:[#allocation6 + $0x88] sm:$0xf]
        %v1837 = vld [vmem:[#allocation6 + $0x8c] sm:$0xf]
        %v1838 = vld [vmem:[#allocation6 + $0x90] sm:$0xf]
        %v1839 = vld [vmem:[#allocation6 + $0x94] sm:$0xf]
        %v1840 = vld [vmem:[#allocation6 + $0x98] sm:$0xf]
        %v1841 = vld [vmem:[#allocation6 + $0x9c] sm:$0xf]
        %v1842 = vld [vmem:[#allocation6 + $0xa0] sm:$0xf]
        %v1843 = vld [vmem:[#allocation6 + $0xa4] sm:$0xf]
        %v1844 = vld [vmem:[#allocation6 + $0xa8] sm:$0xf]
        %v1845 = vld [vmem:[#allocation6 + $0xac] sm:$0xf]
        %v1846 = vld [vmem:[#allocation6 + $0xb0] sm:$0xf]
        %v1847 = vld [vmem:[#allocation6 + $0xb4] sm:$0xf]
        %v1848 = vld [vmem:[#allocation6 + $0xb8] sm:$0xf]
        %v1849 = vld [vmem:[#allocation6 + $0xbc] sm:$0xf]
        %v1850 = vld [vmem:[#allocation6 + $0xc0] sm:$0xf]
        %v1851 = vld [vmem:[#allocation6 + $0xc4] sm:$0xf]
        %v1852 = vld [vmem:[#allocation6 + $0xc8] sm:$0xf]
        %v1853 = vld [vmem:[#allocation6 + $0xcc] sm:$0xf]
        %v1854 = vld [vmem:[#allocation6 + $0xd0] sm:$0xf]
        %v1855 = vld [vmem:[#allocation6 + $0xd4] sm:$0xf]
        %v1856 = vld [vmem:[#allocation6 + $0xd8] sm:$0xf]
        %v1857 = vld [vmem:[#allocation6 + $0xdc] sm:$0xf]
        %v1858 = vld [vmem:[#allocation6 + $0xe0] sm:$0xf]
        %v1859 = vld [vmem:[#allocation6 + $0xe4] sm:$0xf]
        %v1860 = vld [vmem:[#allocation6 + $0xe8] sm:$0xf]
        %v1861 = vld [vmem:[#allocation6 + $0xec] sm:$0xf]
        %v1862 = vld [vmem:[#allocation6 + $0xf0] sm:$0xf]
        %v1863 = vld [vmem:[#allocation6 + $0xf4] sm:$0xf]
        %v1864 = vld [vmem:[#allocation6 + $0xf8] sm:$0xf]
        %v1865 = vld [vmem:[#allocation6 + $0xfc] sm:$0xf]
        %v1866 = vld [vmem:[#allocation6 + $0x100] sm:$0xf]
        %v1867 = vld [vmem:[#allocation6 + $0x104] sm:$0xf]
        %v1868 = vld [vmem:[#allocation6 + $0x108] sm:$0xf]
        %v1869 = vld [vmem:[#allocation6 + $0x10c] sm:$0xf]
        %v1870 = vld [vmem:[#allocation6 + $0x110] sm:$0xf]
        %v1871 = vld [vmem:[#allocation6 + $0x114] sm:$0xf]
        %v1872 = vld [vmem:[#allocation6 + $0x118] sm:$0xf]
        %v1873 = vld [vmem:[#allocation6 + $0x11c] sm:$0xf]
        %v1874 = vld [vmem:[#allocation6 + $0x120] sm:$0xf]
        %v1875 = vld [vmem:[#allocation6 + $0x124] sm:$0xf]
        %v1876 = vld [vmem:[#allocation6 + $0x128] sm:$0xf]
        %v1877 = vld [vmem:[#allocation6 + $0x12c] sm:$0xf]
        %v1878 = vld [vmem:[#allocation6 + $0x130] sm:$0xf]
        %v1879 = vld [vmem:[#allocation6 + $0x134] sm:$0xf]
        %v1880 = vld [vmem:[#allocation6 + $0x138] sm:$0xf]
        %v1881 = vld [vmem:[#allocation6 + $0x13c] sm:$0xf]
        %v1882 = vld [vmem:[%s2] sm:$0x1]
        %v1884 = vlaneseq
        %v1885 = vshrl.u32 %v1884, 7
        %v1886 = vsub.s32 0, %v1885
        %v1887 = vrot.slane %v1882, %v1886
        %v1969 = vunpack.c.l.b16 %v1802
        %v1970 = vunpack.c.l.b16 %v1803
        %v1971 = vunpack.c.l.b16 %v1804
        %v1972 = vunpack.c.l.b16 %v1805
        %v1973 = vunpack.c.l.b16 %v1806
        %v1974 = vunpack.c.l.b16 %v1807
        %v1975 = vunpack.c.l.b16 %v1808
        %v1976 = vunpack.c.l.b16 %v1809
        %v1977 = vunpack.c.l.b16 %v1810
        %v1978 = vunpack.c.l.b16 %v1811
        %v1979 = vunpack.c.l.b16 %v1812
        %v1980 = vunpack.c.l.b16 %v1813
        %v1981 = vunpack.c.l.b16 %v1814
        %v1982 = vunpack.c.l.b16 %v1815
        %v1983 = vunpack.c.l.b16 %v1816
        %v1984 = vunpack.c.l.b16 %v1817
        %v1985 = vunpack.c.l.b16 %v1818
        %v1986 = vunpack.c.l.b16 %v1819
        %v1987 = vunpack.c.l.b16 %v1820
        %v1988 = vunpack.c.l.b16 %v1821
        %v1989 = vunpack.c.l.b16 %v1822
        %v1990 = vunpack.c.l.b16 %v1823
        %v1991 = vunpack.c.l.b16 %v1824
        %v1992 = vunpack.c.l.b16 %v1825
        %v1993 = vunpack.c.l.b16 %v1826
        %v1994 = vunpack.c.l.b16 %v1827
        %v1995 = vunpack.c.l.b16 %v1828
        %v1996 = vunpack.c.l.b16 %v1829
        %v1997 = vunpack.c.l.b16 %v1830
        %v1998 = vunpack.c.l.b16 %v1831
        %v1999 = vunpack.c.l.b16 %v1832
        %v2000 = vunpack.c.l.b16 %v1833
        %v2001 = vunpack.c.l.b16 %v1834
        %v2002 = vunpack.c.l.b16 %v1835
        %v2003 = vunpack.c.l.b16 %v1836
        %v2004 = vunpack.c.l.b16 %v1837
        %v2005 = vunpack.c.l.b16 %v1838
        %v2006 = vunpack.c.l.b16 %v1839
        %v2007 = vunpack.c.l.b16 %v1840
        %v2008 = vunpack.c.l.b16 %v1841
        %v2009 = vunpack.c.l.b16 %v1842
        %v2010 = vunpack.c.l.b16 %v1843
        %v2011 = vunpack.c.l.b16 %v1844
        %v2012 = vunpack.c.l.b16 %v1845
        %v2013 = vunpack.c.l.b16 %v1846
        %v2014 = vunpack.c.l.b16 %v1847
        %v2015 = vunpack.c.l.b16 %v1848
        %v2016 = vunpack.c.l.b16 %v1849
        %v2017 = vunpack.c.l.b16 %v1850
        %v2018 = vunpack.c.l.b16 %v1851
        %v2019 = vunpack.c.l.b16 %v1852
        %v2020 = vunpack.c.l.b16 %v1853
        %v2021 = vunpack.c.l.b16 %v1854
        %v2022 = vunpack.c.l.b16 %v1855
        %v2023 = vunpack.c.l.b16 %v1856
        %v2024 = vunpack.c.l.b16 %v1857
        %v2025 = vunpack.c.l.b16 %v1858
        %v2026 = vunpack.c.l.b16 %v1859
        %v2027 = vunpack.c.l.b16 %v1860
        %v2028 = vunpack.c.l.b16 %v1861
        %v2029 = vunpack.c.l.b16 %v1862
        %v2030 = vunpack.c.l.b16 %v1863
        %v2031 = vunpack.c.l.b16 %v1864
        %v2032 = vunpack.c.l.b16 %v1865
        %v2033 = vunpack.c.l.b16 %v1866
        %v2034 = vunpack.c.l.b16 %v1867
        %v2035 = vunpack.c.l.b16 %v1868
        %v2036 = vunpack.c.l.b16 %v1869
        %v2037 = vunpack.c.l.b16 %v1870
        %v2038 = vunpack.c.l.b16 %v1871
        %v2039 = vunpack.c.l.b16 %v1872
        %v2040 = vunpack.c.l.b16 %v1873
        %v2041 = vunpack.c.l.b16 %v1874
        %v2042 = vunpack.c.l.b16 %v1875
        %v2043 = vunpack.c.l.b16 %v1876
        %v2044 = vunpack.c.l.b16 %v1877
        %v2045 = vunpack.c.l.b16 %v1878
        %v2046 = vunpack.c.l.b16 %v1879
        %v2047 = vunpack.c.l.b16 %v1880
        %v2048 = vunpack.c.l.b16 %v1881
        %v2049 = vpack.c.b16 %v1970, %v1969
        %v2050 = vpack.c.b16 %v1972, %v1971
        %v2051 = vpack.c.b16 %v1974, %v1973
        %v2052 = vpack.c.b16 %v1976, %v1975
        %v2053 = vpack.c.b16 %v1978, %v1977
        %v2054 = vpack.c.b16 %v1980, %v1979
        %v2055 = vpack.c.b16 %v1982, %v1981
        %v2056 = vpack.c.b16 %v1984, %v1983
        %v2057 = vpack.c.b16 %v1986, %v1985
        %v2058 = vpack.c.b16 %v1988, %v1987
        %v2059 = vpack.c.b16 %v1990, %v1989
        %v2060 = vpack.c.b16 %v1992, %v1991
        %v2061 = vpack.c.b16 %v1994, %v1993
        %v2062 = vpack.c.b16 %v1996, %v1995
        %v2063 = vpack.c.b16 %v1998, %v1997
        %v2064 = vpack.c.b16 %v2000, %v1999
        %v2065 = vpack.c.b16 %v2002, %v2001
        %v2066 = vpack.c.b16 %v2004, %v2003
        %v2067 = vpack.c.b16 %v2006, %v2005
        %v2068 = vpack.c.b16 %v2008, %v2007
        %v2069 = vpack.c.b16 %v2010, %v2009
        %v2070 = vpack.c.b16 %v2012, %v2011
        %v2071 = vpack.c.b16 %v2014, %v2013
        %v2072 = vpack.c.b16 %v2016, %v2015
        %v2073 = vpack.c.b16 %v2018, %v2017
        %v2074 = vpack.c.b16 %v2020, %v2019
        %v2075 = vpack.c.b16 %v2022, %v2021
        %v2076 = vpack.c.b16 %v2024, %v2023
        %v2077 = vpack.c.b16 %v2026, %v2025
        %v2078 = vpack.c.b16 %v2028, %v2027
        %v2079 = vpack.c.b16 %v2030, %v2029
        %v2080 = vpack.c.b16 %v2032, %v2031
        %v2081 = vpack.c.b16 %v2034, %v2033
        %v2082 = vpack.c.b16 %v2036, %v2035
        %v2083 = vpack.c.b16 %v2038, %v2037
        %v2084 = vpack.c.b16 %v2040, %v2039
        %v2085 = vpack.c.b16 %v2042, %v2041
        %v2086 = vpack.c.b16 %v2044, %v2043
        %v2087 = vpack.c.b16 %v2046, %v2045
        %v2088 = vpack.c.b16 %v2048, %v2047
        %2129 = vmatprep.subr.bf16.mxu0 0
        %2130 = vmatpush1.bf16.msra.mxu0 %v2056
        %2131 = vmatprep.subr.bf16.mxu0 0
        %2132 = vmatpush1.bf16.msra.mxu0 %v2055
        %2133 = vmatprep.subr.bf16.mxu0 0
        %2134 = vmatpush1.bf16.msra.mxu0 %v2054
        %2135 = vmatprep.subr.bf16.mxu0 0
        %2136 = vmatpush1.bf16.msra.mxu0 %v2053
        %2137 = vmatprep.subr.bf16.mxu0 0
        %2138 = vmatpush1.bf16.msra.mxu0 %v2052
        %2139 = vmatprep.subr.bf16.mxu0 0
        %2140 = vmatpush1.bf16.msra.mxu0 %v2051
        %2141 = vmatprep.subr.bf16.mxu0 0
        %2142 = vmatpush1.bf16.msra.mxu0 %v2050
        %2143 = vmatprep.subr.bf16.mxu0 0
        %2144 = vmatpush1.bf16.msra.mxu0 %v2049
        %2145 = vmatprep.subr.bf16.mxu0 0
        %2146 = vmatpush2.bf16.msra.mxu0 %v2064
        %2147 = vmatprep.subr.bf16.mxu0 0
        %2148 = vmatpush2.bf16.msra.mxu0 %v2063
        %2149 = vmatprep.subr.bf16.mxu0 0
        %2150 = vmatpush2.bf16.msra.mxu0 %v2062
        %2151 = vmatprep.subr.bf16.mxu0 0
        %2152 = vmatpush2.bf16.msra.mxu0 %v2061
        %2153 = vmatprep.subr.bf16.mxu0 0
        %2154 = vmatpush2.bf16.msra.mxu0 %v2060
        %2155 = vmatprep.subr.bf16.mxu0 0
        %2156 = vmatpush2.bf16.msra.mxu0 %v2059
        %2157 = vmatprep.subr.bf16.mxu0 0
        %2158 = vmatpush2.bf16.msra.mxu0 %v2058
        %2159 = vmatprep.subr.bf16.mxu0 0
        %2160 = vmatpush2.bf16.msra.mxu0 %v2057
        %2161 = vmatprep.mubr.bf16.mxu0 %v1576
        %2162 = vmatmul.mubr.bf16.gmra.mxu0 %v1512
        %v2163 = vpop.f32.mrf.mxu0
        %v2164 = vadd.f32 %v1887, %v2163
        %v2165 = vpop.f32.mrf.mxu0
        %v2166 = vpop.f32.mrf.mxu0
        %v2167 = vadd.f32 %v1887, %v2166
        %v2168 = vpop.f32.mrf.mxu0
        %2169 = vmatprep.mubr.bf16.mxu0 %v1577
        %2170 = vmatmul.mubr.bf16.gmra.mxu0 %v1513
        %v2171 = vpop.f32.mrf.mxu0
        %v2172 = vadd.f32 %v1887, %v2171
        %v2173 = vpop.f32.mrf.mxu0
        %v2174 = vpop.f32.mrf.mxu0
        %v2175 = vadd.f32 %v1887, %v2174
        %v2176 = vpop.f32.mrf.mxu0
        %2177 = vmatprep.mubr.bf16.mxu0 %v1578
        %2178 = vmatmul.mubr.bf16.gmra.mxu0 %v1514
        %v2179 = vpop.f32.mrf.mxu0
        %v2180 = vadd.f32 %v1887, %v2179
        %v2181 = vpop.f32.mrf.mxu0
        %v2182 = vpop.f32.mrf.mxu0
        %v2183 = vadd.f32 %v1887, %v2182
        %v2184 = vpop.f32.mrf.mxu0
        %2185 = vmatprep.mubr.bf16.mxu0 %v1579
        %2186 = vmatmul.mubr.bf16.gmra.mxu0 %v1515
        %v2187 = vpop.f32.mrf.mxu0
        %v2188 = vadd.f32 %v1887, %v2187
        %v2189 = vpop.f32.mrf.mxu0
        %v2190 = vpop.f32.mrf.mxu0
        %v2191 = vadd.f32 %v1887, %v2190
        %v2192 = vpop.f32.mrf.mxu0
        %2193 = vmatprep.mubr.bf16.mxu0 %v1580
        %2194 = vmatmul.mubr.bf16.gmra.mxu0 %v1516
        %v2195 = vpop.f32.mrf.mxu0
        %v2196 = vadd.f32 %v1887, %v2195
        %v2197 = vpop.f32.mrf.mxu0
        %v2198 = vpop.f32.mrf.mxu0
        %v2199 = vadd.f32 %v1887, %v2198
        %v2200 = vpop.f32.mrf.mxu0
        %2201 = vmatprep.mubr.bf16.mxu0 %v1581
        %2202 = vmatmul.mubr.bf16.gmra.mxu0 %v1517
        %v2203 = vpop.f32.mrf.mxu0
        %v2204 = vadd.f32 %v1887, %v2203
        %v2205 = vpop.f32.mrf.mxu0
        %v2206 = vpop.f32.mrf.mxu0
        %v2207 = vadd.f32 %v1887, %v2206
        %v2208 = vpop.f32.mrf.mxu0
        %2209 = vmatprep.mubr.bf16.mxu0 %v1582
        %2210 = vmatmul.mubr.bf16.gmra.mxu0 %v1518
        %v2211 = vpop.f32.mrf.mxu0
        %v2212 = vadd.f32 %v1887, %v2211
        %v2213 = vpop.f32.mrf.mxu0
        %v2214 = vpop.f32.mrf.mxu0
        %v2215 = vadd.f32 %v1887, %v2214
        %v2216 = vpop.f32.mrf.mxu0
        %2217 = vmatprep.mubr.bf16.mxu0 %v1583
        %2218 = vmatmul.mubr.bf16.gmra.mxu0 %v1519
        %v2219 = vpop.f32.mrf.mxu0
        %v2220 = vadd.f32 %v1887, %v2219
        %v2221 = vpop.f32.mrf.mxu0
        %v2222 = vpop.f32.mrf.mxu0
        %v2223 = vadd.f32 %v1887, %v2222
        %v2224 = vpop.f32.mrf.mxu0
        %2225 = vmatprep.mubr.bf16.mxu0 %v1584
        %2226 = vmatmul.mubr.bf16.gmra.mxu0 %v1520
        %v2227 = vpop.f32.mrf.mxu0
        %v2228 = vadd.f32 %v1887, %v2227
        %v2229 = vpop.f32.mrf.mxu0
        %v2230 = vpop.f32.mrf.mxu0
        %v2231 = vadd.f32 %v1887, %v2230
        %v2232 = vpop.f32.mrf.mxu0
        %2233 = vmatprep.mubr.bf16.mxu0 %v1585
        %2234 = vmatmul.mubr.bf16.gmra.mxu0 %v1521
        %v2235 = vpop.f32.mrf.mxu0
        %v2236 = vadd.f32 %v1887, %v2235
        %v2237 = vpop.f32.mrf.mxu0
        %v2238 = vpop.f32.mrf.mxu0
        %v2239 = vadd.f32 %v1887, %v2238
        %v2240 = vpop.f32.mrf.mxu0
        %2241 = vmatprep.mubr.bf16.mxu0 %v1586
        %2242 = vmatmul.mubr.bf16.gmra.mxu0 %v1522
        %v2243 = vpop.f32.mrf.mxu0
        %v2244 = vadd.f32 %v1887, %v2243
        %v2245 = vpop.f32.mrf.mxu0
        %v2246 = vpop.f32.mrf.mxu0
        %v2247 = vadd.f32 %v1887, %v2246
        %v2248 = vpop.f32.mrf.mxu0
        %2249 = vmatprep.mubr.bf16.mxu0 %v1587
        %2250 = vmatmul.mubr.bf16.gmra.mxu0 %v1523
        %v2251 = vpop.f32.mrf.mxu0
        %v2252 = vadd.f32 %v1887, %v2251
        %v2253 = vpop.f32.mrf.mxu0
        %v2254 = vpop.f32.mrf.mxu0
        %v2255 = vadd.f32 %v1887, %v2254
        %v2256 = vpop.f32.mrf.mxu0
        %2257 = vmatprep.mubr.bf16.mxu0 %v1588
        %2258 = vmatmul.mubr.bf16.gmra.mxu0 %v1524
        %v2259 = vpop.f32.mrf.mxu0
        %v2260 = vadd.f32 %v1887, %v2259
        %v2261 = vpop.f32.mrf.mxu0
        %v2262 = vpop.f32.mrf.mxu0
        %v2263 = vadd.f32 %v1887, %v2262
        %v2264 = vpop.f32.mrf.mxu0
        %2265 = vmatprep.mubr.bf16.mxu0 %v1589
        %2266 = vmatmul.mubr.bf16.gmra.mxu0 %v1525
        %v2267 = vpop.f32.mrf.mxu0
        %v2268 = vadd.f32 %v1887, %v2267
        %v2269 = vpop.f32.mrf.mxu0
        %v2270 = vpop.f32.mrf.mxu0
        %v2271 = vadd.f32 %v1887, %v2270
        %v2272 = vpop.f32.mrf.mxu0
        %2273 = vmatprep.mubr.bf16.mxu0 %v1590
        %2274 = vmatmul.mubr.bf16.gmra.mxu0 %v1526
        %v2275 = vpop.f32.mrf.mxu0
        %v2276 = vadd.f32 %v1887, %v2275
        %v2277 = vpop.f32.mrf.mxu0
        %v2278 = vpop.f32.mrf.mxu0
        %v2279 = vadd.f32 %v1887, %v2278
        %v2280 = vpop.f32.mrf.mxu0
        %2281 = vmatprep.mubr.bf16.mxu0 %v1591
        %2282 = vmatmul.mubr.bf16.gmra.mxu0 %v1527
        %v2283 = vpop.f32.mrf.mxu0
        %v2284 = vadd.f32 %v1887, %v2283
        %v2285 = vpop.f32.mrf.mxu0
        %v2286 = vpop.f32.mrf.mxu0
        %v2287 = vadd.f32 %v1887, %v2286
        %v2288 = vpop.f32.mrf.mxu0
        %2289 = vdwg.mxu0
        %2290 = vmatprep.subr.bf16.mxu0 0
        %2291 = vmatpush1.bf16.msra.mxu0 %v2072
        %2292 = vmatprep.subr.bf16.mxu0 0
        %2293 = vmatpush1.bf16.msra.mxu0 %v2071
        %2294 = vmatprep.subr.bf16.mxu0 0
        %2295 = vmatpush1.bf16.msra.mxu0 %v2070
        %2296 = vmatprep.subr.bf16.mxu0 0
        %2297 = vmatpush1.bf16.msra.mxu0 %v2069
        %2298 = vmatprep.subr.bf16.mxu0 0
        %2299 = vmatpush1.bf16.msra.mxu0 %v2068
        %2300 = vmatprep.subr.bf16.mxu0 0
        %2301 = vmatpush1.bf16.msra.mxu0 %v2067
        %2302 = vmatprep.subr.bf16.mxu0 0
        %2303 = vmatpush1.bf16.msra.mxu0 %v2066
        %2304 = vmatprep.subr.bf16.mxu0 0
        %2305 = vmatpush1.bf16.msra.mxu0 %v2065
        %2306 = vmatprep.subr.bf16.mxu0 0
        %2307 = vmatpush2.bf16.msra.mxu0 %v2080
        %2308 = vmatprep.subr.bf16.mxu0 0
        %2309 = vmatpush2.bf16.msra.mxu0 %v2079
        %2310 = vmatprep.subr.bf16.mxu0 0
        %2311 = vmatpush2.bf16.msra.mxu0 %v2078
        %2312 = vmatprep.subr.bf16.mxu0 0
        %2313 = vmatpush2.bf16.msra.mxu0 %v2077
        %2314 = vmatprep.subr.bf16.mxu0 0
        %2315 = vmatpush2.bf16.msra.mxu0 %v2076
        %2316 = vmatprep.subr.bf16.mxu0 0
        %2317 = vmatpush2.bf16.msra.mxu0 %v2075
        %2318 = vmatprep.subr.bf16.mxu0 0
        %2319 = vmatpush2.bf16.msra.mxu0 %v2074
        %2320 = vmatprep.subr.bf16.mxu0 0
        %2321 = vmatpush2.bf16.msra.mxu0 %v2073
        %2322 = vmatprep.mubr.bf16.mxu0 %v1706
        %2323 = vmatmul.mubr.bf16.gmra.mxu0 %v1642
        %v2324 = vpop.f32.mrf.mxu0
        %v2325 = vadd.f32 %v2164, %v2324
        %v2326 = vpop.f32.mrf.mxu0
        %v2327 = vpop.f32.mrf.mxu0
        %v2328 = vadd.f32 %v2167, %v2327
        %v2329 = vpop.f32.mrf.mxu0
        %2330 = vmatprep.mubr.bf16.mxu0 %v1707
        %2331 = vmatmul.mubr.bf16.gmra.mxu0 %v1643
        %v2332 = vpop.f32.mrf.mxu0
        %v2333 = vadd.f32 %v2172, %v2332
        %v2334 = vpop.f32.mrf.mxu0
        %v2335 = vpop.f32.mrf.mxu0
        %v2336 = vadd.f32 %v2175, %v2335
        %v2337 = vpop.f32.mrf.mxu0
        %2338 = vmatprep.mubr.bf16.mxu0 %v1708
        %2339 = vmatmul.mubr.bf16.gmra.mxu0 %v1644
        %v2340 = vpop.f32.mrf.mxu0
        %v2341 = vadd.f32 %v2180, %v2340
        %v2342 = vpop.f32.mrf.mxu0
        %v2343 = vpop.f32.mrf.mxu0
        %v2344 = vadd.f32 %v2183, %v2343
        %v2345 = vpop.f32.mrf.mxu0
        %2346 = vmatprep.mubr.bf16.mxu0 %v1709
        %2347 = vmatmul.mubr.bf16.gmra.mxu0 %v1645
        %v2348 = vpop.f32.mrf.mxu0
        %v2349 = vadd.f32 %v2188, %v2348
        %v2350 = vpop.f32.mrf.mxu0
        %v2351 = vpop.f32.mrf.mxu0
        %v2352 = vadd.f32 %v2191, %v2351
        %v2353 = vpop.f32.mrf.mxu0
        %2354 = vmatprep.mubr.bf16.mxu0 %v1710
        %2355 = vmatmul.mubr.bf16.gmra.mxu0 %v1646
        %v2356 = vpop.f32.mrf.mxu0
        %v2357 = vadd.f32 %v2196, %v2356
        %v2358 = vpop.f32.mrf.mxu0
        %v2359 = vpop.f32.mrf.mxu0
        %v2360 = vadd.f32 %v2199, %v2359
        %v2361 = vpop.f32.mrf.mxu0
        %2362 = vmatprep.mubr.bf16.mxu0 %v1711
        %2363 = vmatmul.mubr.bf16.gmra.mxu0 %v1647
        %v2364 = vpop.f32.mrf.mxu0
        %v2365 = vadd.f32 %v2204, %v2364
        %v2366 = vpop.f32.mrf.mxu0
        %v2367 = vpop.f32.mrf.mxu0
        %v2368 = vadd.f32 %v2207, %v2367
        %v2369 = vpop.f32.mrf.mxu0
        %2370 = vmatprep.mubr.bf16.mxu0 %v1712
        %2371 = vmatmul.mubr.bf16.gmra.mxu0 %v1648
        %v2372 = vpop.f32.mrf.mxu0
        %v2373 = vadd.f32 %v2212, %v2372
        %v2374 = vpop.f32.mrf.mxu0
        %v2375 = vpop.f32.mrf.mxu0
        %v2376 = vadd.f32 %v2215, %v2375
        %v2377 = vpop.f32.mrf.mxu0
        %2378 = vmatprep.mubr.bf16.mxu0 %v1713
        %2379 = vmatmul.mubr.bf16.gmra.mxu0 %v1649
        %v2380 = vpop.f32.mrf.mxu0
        %v2381 = vadd.f32 %v2220, %v2380
        %v2382 = vpop.f32.mrf.mxu0
        %v2383 = vpop.f32.mrf.mxu0
        %v2384 = vadd.f32 %v2223, %v2383
        %v2385 = vpop.f32.mrf.mxu0
        %2386 = vmatprep.mubr.bf16.mxu0 %v1714
        %2387 = vmatmul.mubr.bf16.gmra.mxu0 %v1650
        %v2388 = vpop.f32.mrf.mxu0
        %v2389 = vadd.f32 %v2228, %v2388
        %v2390 = vpop.f32.mrf.mxu0
        %v2391 = vpop.f32.mrf.mxu0
        %v2392 = vadd.f32 %v2231, %v2391
        %v2393 = vpop.f32.mrf.mxu0
        %2394 = vmatprep.mubr.bf16.mxu0 %v1715
        %2395 = vmatmul.mubr.bf16.gmra.mxu0 %v1651
        %v2396 = vpop.f32.mrf.mxu0
        %v2397 = vadd.f32 %v2236, %v2396
        %v2398 = vpop.f32.mrf.mxu0
        %v2399 = vpop.f32.mrf.mxu0
        %v2400 = vadd.f32 %v2239, %v2399
        %v2401 = vpop.f32.mrf.mxu0
        %2402 = vmatprep.mubr.bf16.mxu0 %v1716
        %2403 = vmatmul.mubr.bf16.gmra.mxu0 %v1652
        %v2404 = vpop.f32.mrf.mxu0
        %v2405 = vadd.f32 %v2244, %v2404
        %v2406 = vpop.f32.mrf.mxu0
        %v2407 = vpop.f32.mrf.mxu0
        %v2408 = vadd.f32 %v2247, %v2407
        %v2409 = vpop.f32.mrf.mxu0
        %2410 = vmatprep.mubr.bf16.mxu0 %v1717
        %2411 = vmatmul.mubr.bf16.gmra.mxu0 %v1653
        %v2412 = vpop.f32.mrf.mxu0
        %v2413 = vadd.f32 %v2252, %v2412
        %v2414 = vpop.f32.mrf.mxu0
        %v2415 = vpop.f32.mrf.mxu0
        %v2416 = vadd.f32 %v2255, %v2415
        %v2417 = vpop.f32.mrf.mxu0
        %2418 = vmatprep.mubr.bf16.mxu0 %v1718
        %2419 = vmatmul.mubr.bf16.gmra.mxu0 %v1654
        %v2420 = vpop.f32.mrf.mxu0
        %v2421 = vadd.f32 %v2260, %v2420
        %v2422 = vpop.f32.mrf.mxu0
        %v2423 = vpop.f32.mrf.mxu0
        %v2424 = vadd.f32 %v2263, %v2423
        %v2425 = vpop.f32.mrf.mxu0
        %2426 = vmatprep.mubr.bf16.mxu0 %v1719
        %2427 = vmatmul.mubr.bf16.gmra.mxu0 %v1655
        %v2428 = vpop.f32.mrf.mxu0
        %v2429 = vadd.f32 %v2268, %v2428
        %v2430 = vpop.f32.mrf.mxu0
        %v2431 = vpop.f32.mrf.mxu0
        %v2432 = vadd.f32 %v2271, %v2431
        %v2433 = vpop.f32.mrf.mxu0
        %2434 = vmatprep.mubr.bf16.mxu0 %v1720
        %2435 = vmatmul.mubr.bf16.gmra.mxu0 %v1656
        %v2436 = vpop.f32.mrf.mxu0
        %v2437 = vadd.f32 %v2276, %v2436
        %v2438 = vpop.f32.mrf.mxu0
        %v2439 = vpop.f32.mrf.mxu0
        %v2440 = vadd.f32 %v2279, %v2439
        %v2441 = vpop.f32.mrf.mxu0
        %2442 = vmatprep.mubr.bf16.mxu0 %v1721
        %2443 = vmatmul.mubr.bf16.gmra.mxu0 %v1657
        %v2444 = vpop.f32.mrf.mxu0
        %v2445 = vadd.f32 %v2284, %v2444
        %v2446 = vpop.f32.mrf.mxu0
        %v2447 = vpop.f32.mrf.mxu0
        %v2448 = vadd.f32 %v2287, %v2447
        %v2449 = vpop.f32.mrf.mxu0
        %2450 = vdwg.mxu0
        %2451 = vmatprep.subr.bf16.mxu0 0
        %2452 = vmatpush1.bf16.msra.mxu0 %v2088
        %2453 = vmatprep.subr.bf16.mxu0 0
        %2454 = vmatpush1.bf16.msra.mxu0 %v2087
        %2455 = vmatprep.subr.bf16.mxu0 0
        %2456 = vmatpush1.bf16.msra.mxu0 %v2086
        %2457 = vmatprep.subr.bf16.mxu0 0
        %2458 = vmatpush1.bf16.msra.mxu0 %v2085
        %2459 = vmatprep.subr.bf16.mxu0 0
        %2460 = vmatpush1.bf16.msra.mxu0 %v2084
        %2461 = vmatprep.subr.bf16.mxu0 0
        %2462 = vmatpush1.bf16.msra.mxu0 %v2083
        %2463 = vmatprep.subr.bf16.mxu0 0
        %2464 = vmatpush1.bf16.msra.mxu0 %v2082
        %2465 = vmatprep.subr.bf16.mxu0 0
        %2466 = vmatpush1.bf16.msra.mxu0 %v2081
        %2467 = vmatprep.subr.bf16.mxu0 0
        %2468 = vmatpush2.bf16.msra.mxu0 0
        %2469 = vmatprep.subr.bf16.mxu0 0
        %2470 = vmatpush2.bf16.msra.mxu0 0
        %2471 = vmatprep.subr.bf16.mxu0 0
        %2472 = vmatpush2.bf16.msra.mxu0 0
        %2473 = vmatprep.subr.bf16.mxu0 0
        %2474 = vmatpush2.bf16.msra.mxu0 0
        %2475 = vmatprep.subr.bf16.mxu0 0
        %2476 = vmatpush2.bf16.msra.mxu0 0
        %2477 = vmatprep.subr.bf16.mxu0 0
        %2478 = vmatpush2.bf16.msra.mxu0 0
        %2479 = vmatprep.subr.bf16.mxu0 0
        %2480 = vmatpush2.bf16.msra.mxu0 0
        %2481 = vmatprep.subr.bf16.mxu0 0
        %2482 = vmatpush2.bf16.msra.mxu0 0
        %2483 = vmatprep.mubr.bf16.mxu0 0
        %2484 = vmatmul.mubr.bf16.gmra.mxu0 %v1770
        %v2485 = vpop.f32.mrf.mxu0
        %v2486 = vadd.f32 %v2325, %v2485
        %v2487 = vpop.f32.mrf.mxu0
        %v2488 = vpop.f32.mrf.mxu0
        %v2489 = vadd.f32 %v2328, %v2488
        %v2490 = vpop.f32.mrf.mxu0
        %2491 = vmatprep.mubr.bf16.mxu0 0
        %2492 = vmatmul.mubr.bf16.gmra.mxu0 %v1771
        %v2493 = vpop.f32.mrf.mxu0
        %v2494 = vadd.f32 %v2333, %v2493
        %v2495 = vpop.f32.mrf.mxu0
        %v2496 = vpop.f32.mrf.mxu0
        %v2497 = vadd.f32 %v2336, %v2496
        %v2498 = vpop.f32.mrf.mxu0
        %2499 = vmatprep.mubr.bf16.mxu0 0
        %2500 = vmatmul.mubr.bf16.gmra.mxu0 %v1772
        %v2501 = vpop.f32.mrf.mxu0
        %v2502 = vadd.f32 %v2341, %v2501
        %v2503 = vpop.f32.mrf.mxu0
        %v2504 = vpop.f32.mrf.mxu0
        %v2505 = vadd.f32 %v2344, %v2504
        %v2506 = vpop.f32.mrf.mxu0
        %2507 = vmatprep.mubr.bf16.mxu0 0
        %2508 = vmatmul.mubr.bf16.gmra.mxu0 %v1773
        %v2509 = vpop.f32.mrf.mxu0
        %v2510 = vadd.f32 %v2349, %v2509
        %v2511 = vpop.f32.mrf.mxu0
        %v2512 = vpop.f32.mrf.mxu0
        %v2513 = vadd.f32 %v2352, %v2512
        %v2514 = vpop.f32.mrf.mxu0
        %2515 = vmatprep.mubr.bf16.mxu0 0
        %2516 = vmatmul.mubr.bf16.gmra.mxu0 %v1774
        %v2517 = vpop.f32.mrf.mxu0
        %v2518 = vadd.f32 %v2357, %v2517
        %v2519 = vpop.f32.mrf.mxu0
        %v2520 = vpop.f32.mrf.mxu0
        %v2521 = vadd.f32 %v2360, %v2520
        %v2522 = vpop.f32.mrf.mxu0
        %2523 = vmatprep.mubr.bf16.mxu0 0
        %2524 = vmatmul.mubr.bf16.gmra.mxu0 %v1775
        %v2525 = vpop.f32.mrf.mxu0
        %v2526 = vadd.f32 %v2365, %v2525
        %v2527 = vpop.f32.mrf.mxu0
        %v2528 = vpop.f32.mrf.mxu0
        %v2529 = vadd.f32 %v2368, %v2528
        %v2530 = vpop.f32.mrf.mxu0
        %2531 = vmatprep.mubr.bf16.mxu0 0
        %2532 = vmatmul.mubr.bf16.gmra.mxu0 %v1776
        %v2533 = vpop.f32.mrf.mxu0
        %v2534 = vadd.f32 %v2373, %v2533
        %v2535 = vpop.f32.mrf.mxu0
        %v2536 = vpop.f32.mrf.mxu0
        %v2537 = vadd.f32 %v2376, %v2536
        %v2538 = vpop.f32.mrf.mxu0
        %2539 = vmatprep.mubr.bf16.mxu0 0
        %2540 = vmatmul.mubr.bf16.gmra.mxu0 %v1777
        %v2541 = vpop.f32.mrf.mxu0
        %v2542 = vadd.f32 %v2381, %v2541
        %v2543 = vpop.f32.mrf.mxu0
        %v2544 = vpop.f32.mrf.mxu0
        %v2545 = vadd.f32 %v2384, %v2544
        %v2546 = vpop.f32.mrf.mxu0
        %2547 = vmatprep.mubr.bf16.mxu0 0
        %2548 = vmatmul.mubr.bf16.gmra.mxu0 %v1778
        %v2549 = vpop.f32.mrf.mxu0
        %v2550 = vadd.f32 %v2389, %v2549
        %v2551 = vpop.f32.mrf.mxu0
        %v2552 = vpop.f32.mrf.mxu0
        %v2553 = vadd.f32 %v2392, %v2552
        %v2554 = vpop.f32.mrf.mxu0
        %2555 = vmatprep.mubr.bf16.mxu0 0
        %2556 = vmatmul.mubr.bf16.gmra.mxu0 %v1779
        %v2557 = vpop.f32.mrf.mxu0
        %v2558 = vadd.f32 %v2397, %v2557
        %v2559 = vpop.f32.mrf.mxu0
        %v2560 = vpop.f32.mrf.mxu0
        %v2561 = vadd.f32 %v2400, %v2560
        %v2562 = vpop.f32.mrf.mxu0
        %2563 = vmatprep.mubr.bf16.mxu0 0
        %2564 = vmatmul.mubr.bf16.gmra.mxu0 %v1780
        %v2565 = vpop.f32.mrf.mxu0
        %v2566 = vadd.f32 %v2405, %v2565
        %v2567 = vpop.f32.mrf.mxu0
        %v2568 = vpop.f32.mrf.mxu0
        %v2569 = vadd.f32 %v2408, %v2568
        %v2570 = vpop.f32.mrf.mxu0
        %2571 = vmatprep.mubr.bf16.mxu0 0
        %2572 = vmatmul.mubr.bf16.gmra.mxu0 %v1781
        %v2573 = vpop.f32.mrf.mxu0
        %v2574 = vadd.f32 %v2413, %v2573
        %v2575 = vpop.f32.mrf.mxu0
        %v2576 = vpop.f32.mrf.mxu0
        %v2577 = vadd.f32 %v2416, %v2576
        %v2578 = vpop.f32.mrf.mxu0
        %2579 = vmatprep.mubr.bf16.mxu0 0
        %2580 = vmatmul.mubr.bf16.gmra.mxu0 %v1782
        %v2581 = vpop.f32.mrf.mxu0
        %v2582 = vadd.f32 %v2421, %v2581
        %v2583 = vpop.f32.mrf.mxu0
        %v2584 = vpop.f32.mrf.mxu0
        %v2585 = vadd.f32 %v2424, %v2584
        %v2586 = vpop.f32.mrf.mxu0
        %2587 = vmatprep.mubr.bf16.mxu0 0
        %2588 = vmatmul.mubr.bf16.gmra.mxu0 %v1783
        %v2589 = vpop.f32.mrf.mxu0
        %v2590 = vadd.f32 %v2429, %v2589
        %v2591 = vpop.f32.mrf.mxu0
        %v2592 = vpop.f32.mrf.mxu0
        %v2593 = vadd.f32 %v2432, %v2592
        %v2594 = vpop.f32.mrf.mxu0
        %2595 = vmatprep.mubr.bf16.mxu0 0
        %2596 = vmatmul.mubr.bf16.gmra.mxu0 %v1784
        %v2597 = vpop.f32.mrf.mxu0
        %v2598 = vadd.f32 %v2437, %v2597
        %v2599 = vpop.f32.mrf.mxu0
        %v2600 = vpop.f32.mrf.mxu0
        %v2601 = vadd.f32 %v2440, %v2600
        %v2602 = vpop.f32.mrf.mxu0
        %2603 = vmatprep.mubr.bf16.mxu0 0
        %2604 = vmatmul.mubr.bf16.gmra.mxu0 %v1785
        %v2605 = vpop.f32.mrf.mxu0
        %v2606 = vadd.f32 %v2445, %v2605
        %v2607 = vpop.f32.mrf.mxu0
        %v2608 = vpop.f32.mrf.mxu0
        %v2609 = vadd.f32 %v2448, %v2608
        %v2610 = vpop.f32.mrf.mxu0
        %2611 = vdwg.mxu0
        %v2612 = vmax.f32 %v2486, 0.0
        %v2613 = vmax.f32 %v2489, 0.0
        %v2614 = vmax.f32 %v2494, 0.0
        %v2615 = vmax.f32 %v2497, 0.0
        %v2616 = vmax.f32 %v2502, 0.0
        %v2617 = vmax.f32 %v2505, 0.0
        %v2618 = vmax.f32 %v2510, 0.0
        %v2619 = vmax.f32 %v2513, 0.0
        %v2620 = vmax.f32 %v2518, 0.0
        %v2621 = vmax.f32 %v2521, 0.0
        %v2622 = vmax.f32 %v2526, 0.0
        %v2623 = vmax.f32 %v2529, 0.0
        %v2624 = vmax.f32 %v2534, 0.0
        %v2625 = vmax.f32 %v2537, 0.0
        %v2626 = vmax.f32 %v2542, 0.0
        %v2627 = vmax.f32 %v2545, 0.0
        %v2628 = vmax.f32 %v2550, 0.0
        %v2629 = vmax.f32 %v2553, 0.0
        %v2630 = vmax.f32 %v2558, 0.0
        %v2631 = vmax.f32 %v2561, 0.0
        %v2632 = vmax.f32 %v2566, 0.0
        %v2633 = vmax.f32 %v2569, 0.0
        %v2634 = vmax.f32 %v2574, 0.0
        %v2635 = vmax.f32 %v2577, 0.0
        %v2636 = vmax.f32 %v2582, 0.0
        %v2637 = vmax.f32 %v2585, 0.0
        %v2638 = vmax.f32 %v2590, 0.0
        %v2639 = vmax.f32 %v2593, 0.0
        %v2640 = vmax.f32 %v2598, 0.0
        %v2641 = vmax.f32 %v2601, 0.0
        %v2642 = vmax.f32 %v2606, 0.0
        %v2643 = vmax.f32 %v2609, 0.0
        %v2644 = vpack.c.bf16 %v2613, %v2612
        %v2645 = vpack.c.bf16 %v2615, %v2614
        %v2646 = vpack.c.bf16 %v2617, %v2616
        %v2647 = vpack.c.bf16 %v2619, %v2618
        %v2648 = vpack.c.bf16 %v2621, %v2620
        %v2649 = vpack.c.bf16 %v2623, %v2622
        %v2650 = vpack.c.bf16 %v2625, %v2624
        %v2651 = vpack.c.bf16 %v2627, %v2626
        %v2652 = vpack.c.bf16 %v2629, %v2628
        %v2653 = vpack.c.bf16 %v2631, %v2630
        %v2654 = vpack.c.bf16 %v2633, %v2632
        %v2655 = vpack.c.bf16 %v2635, %v2634
        %v2656 = vpack.c.bf16 %v2637, %v2636
        %v2657 = vpack.c.bf16 %v2639, %v2638
        %v2658 = vpack.c.bf16 %v2641, %v2640
        %v2659 = vpack.c.bf16 %v2643, %v2642
        %v2676 = vunpack.c.l.b16 %v2644
        %v2677 = vunpack.c.h.b16 %v2644
        %v2678 = vunpack.c.l.b16 %v2645
        %v2679 = vunpack.c.h.b16 %v2645
        %v2680 = vunpack.c.l.b16 %v2646
        %v2681 = vunpack.c.h.b16 %v2646
        %v2682 = vunpack.c.l.b16 %v2647
        %v2683 = vunpack.c.h.b16 %v2647
        %v2684 = vunpack.c.l.b16 %v2648
        %v2685 = vunpack.c.h.b16 %v2648
        %v2686 = vunpack.c.l.b16 %v2649
        %v2687 = vunpack.c.h.b16 %v2649
        %v2688 = vunpack.c.l.b16 %v2650
        %v2689 = vunpack.c.h.b16 %v2650
        %v2690 = vunpack.c.l.b16 %v2651
        %v2691 = vunpack.c.h.b16 %v2651
        %v2692 = vunpack.c.l.b16 %v2652
        %v2693 = vunpack.c.h.b16 %v2652
        %v2694 = vunpack.c.l.b16 %v2653
        %v2695 = vunpack.c.h.b16 %v2653
        %v2696 = vunpack.c.l.b16 %v2654
        %v2697 = vunpack.c.h.b16 %v2654
        %v2698 = vunpack.c.l.b16 %v2655
        %v2699 = vunpack.c.h.b16 %v2655
        %v2700 = vunpack.c.l.b16 %v2656
        %v2701 = vunpack.c.h.b16 %v2656
        %v2702 = vunpack.c.l.b16 %v2657
        %v2703 = vunpack.c.h.b16 %v2657
        %v2704 = vunpack.c.l.b16 %v2658
        %v2705 = vunpack.c.h.b16 %v2658
        %v2706 = vunpack.c.l.b16 %v2659
        %v2707 = vunpack.c.h.b16 %v2659
        %v2708 = vpack.c.b16 %v2676, %v2676
        %v2709 = vpack.c.b16 %v2677, %v2677
        %v2710 = vpack.c.b16 %v2678, %v2678
        %v2711 = vpack.c.b16 %v2679, %v2679
        %v2712 = vpack.c.b16 %v2680, %v2680
        %v2713 = vpack.c.b16 %v2681, %v2681
        %v2714 = vpack.c.b16 %v2682, %v2682
        %v2715 = vpack.c.b16 %v2683, %v2683
        %v2716 = vpack.c.b16 %v2684, %v2684
        %v2717 = vpack.c.b16 %v2685, %v2685
        %v2718 = vpack.c.b16 %v2686, %v2686
        %v2719 = vpack.c.b16 %v2687, %v2687
        %v2720 = vpack.c.b16 %v2688, %v2688
        %v2721 = vpack.c.b16 %v2689, %v2689
        %v2722 = vpack.c.b16 %v2690, %v2690
        %v2723 = vpack.c.b16 %v2691, %v2691
        %v2724 = vpack.c.b16 %v2692, %v2692
        %v2725 = vpack.c.b16 %v2693, %v2693
        %v2726 = vpack.c.b16 %v2694, %v2694
        %v2727 = vpack.c.b16 %v2695, %v2695
        %v2728 = vpack.c.b16 %v2696, %v2696
        %v2729 = vpack.c.b16 %v2697, %v2697
        %v2730 = vpack.c.b16 %v2698, %v2698
        %v2731 = vpack.c.b16 %v2699, %v2699
        %v2732 = vpack.c.b16 %v2700, %v2700
        %v2733 = vpack.c.b16 %v2701, %v2701
        %v2734 = vpack.c.b16 %v2702, %v2702
        %v2735 = vpack.c.b16 %v2703, %v2703
        %v2736 = vpack.c.b16 %v2704, %v2704
        %v2737 = vpack.c.b16 %v2705, %v2705
        %v2738 = vpack.c.b16 %v2706, %v2706
        %v2739 = vpack.c.b16 %v2707, %v2707
        %2772 = vst [vmem:[#allocation2 + $0x4] sm:$0xf] %v2708
        %2773 = vst [vmem:[#allocation2 + $0x8] sm:$0xf] %v2709
        %2774 = vst [vmem:[#allocation2 + $0xc] sm:$0xf] %v2710
        %2775 = vst [vmem:[#allocation2 + $0x10] sm:$0xf] %v2711
        %2776 = vst [vmem:[#allocation2 + $0x14] sm:$0xf] %v2712
        %2777 = vst [vmem:[#allocation2 + $0x18] sm:$0xf] %v2713
        %2778 = vst [vmem:[#allocation2 + $0x1c] sm:$0xf] %v2714
        %2779 = vst [vmem:[#allocation2 + $0x20] sm:$0xf] %v2715
        %2780 = vst [vmem:[#allocation2 + $0x24] sm:$0xf] %v2716
        %2781 = vst [vmem:[#allocation2 + $0x28] sm:$0xf] %v2717
        %2782 = vst [vmem:[#allocation2 + $0x2c] sm:$0xf] %v2718
        %2783 = vst [vmem:[#allocation2 + $0x30] sm:$0xf] %v2719
        %2784 = vst [vmem:[#allocation2 + $0x34] sm:$0xf] %v2720
        %2785 = vst [vmem:[#allocation2 + $0x38] sm:$0xf] %v2721
        %2786 = vst [vmem:[#allocation2 + $0x3c] sm:$0xf] %v2722
        %2787 = vst [vmem:[#allocation2 + $0x40] sm:$0xf] %v2723
        %2788 = vst [vmem:[#allocation2 + $0x4c] sm:$0xf] %v2724
        %2789 = vst [vmem:[#allocation2 + $0x50] sm:$0xf] %v2725
        %2790 = vst [vmem:[#allocation2 + $0x54] sm:$0xf] %v2726
        %2791 = vst [vmem:[#allocation2 + $0x58] sm:$0xf] %v2727
        %2792 = vst [vmem:[#allocation2 + $0x5c] sm:$0xf] %v2728
        %2793 = vst [vmem:[#allocation2 + $0x60] sm:$0xf] %v2729
        %2794 = vst [vmem:[#allocation2 + $0x64] sm:$0xf] %v2730
        %2795 = vst [vmem:[#allocation2 + $0x68] sm:$0xf] %v2731
        %2796 = vst [vmem:[#allocation2 + $0x6c] sm:$0xf] %v2732
        %2797 = vst [vmem:[#allocation2 + $0x70] sm:$0xf] %v2733
        %2798 = vst [vmem:[#allocation2 + $0x74] sm:$0xf] %v2734
        %2799 = vst [vmem:[#allocation2 + $0x78] sm:$0xf] %v2735
        %2800 = vst [vmem:[#allocation2 + $0x7c] sm:$0xf] %v2736
        %2801 = vst [vmem:[#allocation2 + $0x80] sm:$0xf] %v2737
        %2802 = vst [vmem:[#allocation2 + $0x84] sm:$0xf] %v2738
        %2803 = vst [vmem:[#allocation2 + $0x88] sm:$0xf] %v2739
        %v2804 = vld [vmem:[#allocation2] sm:$0x8]
        %v2805 = vld [vmem:[#allocation2 + $0x4] sm:$0xf]
        %v2806 = vld [vmem:[#allocation2 + $0x8] sm:$0xf]
        %v2807 = vld [vmem:[#allocation2 + $0xc] sm:$0xf]
        %v2808 = vld [vmem:[#allocation2 + $0x10] sm:$0xf]
        %v2809 = vld [vmem:[#allocation2 + $0x14] sm:$0xf]
        %v2810 = vld [vmem:[#allocation2 + $0x18] sm:$0xf]
        %v2811 = vld [vmem:[#allocation2 + $0x1c] sm:$0xf]
        %v2812 = vld [vmem:[#allocation2 + $0x20] sm:$0xf]
        %v2813 = vld [vmem:[#allocation2 + $0x24] sm:$0xf]
        %v2814 = vld [vmem:[#allocation2 + $0x28] sm:$0xf]
        %v2815 = vld [vmem:[#allocation2 + $0x2c] sm:$0xf]
        %v2816 = vld [vmem:[#allocation2 + $0x30] sm:$0xf]
        %v2817 = vld [vmem:[#allocation2 + $0x34] sm:$0xf]
        %v2818 = vld [vmem:[#allocation2 + $0x38] sm:$0xf]
        %v2819 = vld [vmem:[#allocation2 + $0x3c] sm:$0xf]
        %v2820 = vld [vmem:[#allocation2 + $0x40] sm:$0x7]
        %v2821 = vld [vmem:[#allocation2 + $0x48] sm:$0x8]
        %v2822 = vld [vmem:[#allocation2 + $0x4c] sm:$0xf]
        %v2823 = vld [vmem:[#allocation2 + $0x50] sm:$0xf]
        %v2824 = vld [vmem:[#allocation2 + $0x54] sm:$0xf]
        %v2825 = vld [vmem:[#allocation2 + $0x58] sm:$0xf]
        %v2826 = vld [vmem:[#allocation2 + $0x5c] sm:$0xf]
        %v2827 = vld [vmem:[#allocation2 + $0x60] sm:$0xf]
        %v2828 = vld [vmem:[#allocation2 + $0x64] sm:$0xf]
        %v2829 = vld [vmem:[#allocation2 + $0x68] sm:$0xf]
        %v2830 = vld [vmem:[#allocation2 + $0x6c] sm:$0xf]
        %v2831 = vld [vmem:[#allocation2 + $0x70] sm:$0xf]
        %v2832 = vld [vmem:[#allocation2 + $0x74] sm:$0xf]
        %v2833 = vld [vmem:[#allocation2 + $0x78] sm:$0xf]
        %v2834 = vld [vmem:[#allocation2 + $0x7c] sm:$0xf]
        %v2835 = vld [vmem:[#allocation2 + $0x80] sm:$0xf]
        %v2836 = vld [vmem:[#allocation2 + $0x84] sm:$0xf]
        %v2837 = vld [vmem:[#allocation2 + $0x88] sm:$0x7]
        %v2872 = vrot.slane %v2804, 7
        %v2873 = vrot.slane %v2872, 4
        %v2874 = vrot.slane %v2805, 7
        %v2875 = vsel %vm578, %v2873, %v2874
        %v2876 = vrot.slane %v2874, 4
        %v2877 = vrot.slane %v2806, 7
        %v2878 = vsel %vm578, %v2876, %v2877
        %v2879 = vrot.slane %v2877, 4
        %v2880 = vrot.slane %v2807, 7
        %v2881 = vsel %vm578, %v2879, %v2880
        %v2882 = vrot.slane %v2880, 4
        %v2883 = vrot.slane %v2808, 7
        %v2884 = vsel %vm578, %v2882, %v2883
        %v2885 = vrot.slane %v2883, 4
        %v2886 = vrot.slane %v2809, 7
        %v2887 = vsel %vm578, %v2885, %v2886
        %v2888 = vrot.slane %v2886, 4
        %v2889 = vrot.slane %v2810, 7
        %v2890 = vsel %vm578, %v2888, %v2889
        %v2891 = vrot.slane %v2889, 4
        %v2892 = vrot.slane %v2811, 7
        %v2893 = vsel %vm578, %v2891, %v2892
        %v2894 = vrot.slane %v2892, 4
        %v2895 = vrot.slane %v2812, 7
        %v2896 = vsel %vm578, %v2894, %v2895
        %v2897 = vrot.slane %v2895, 4
        %v2898 = vrot.slane %v2813, 7
        %v2899 = vsel %vm578, %v2897, %v2898
        %v2900 = vrot.slane %v2898, 4
        %v2901 = vrot.slane %v2814, 7
        %v2902 = vsel %vm578, %v2900, %v2901
        %v2903 = vrot.slane %v2901, 4
        %v2904 = vrot.slane %v2815, 7
        %v2905 = vsel %vm578, %v2903, %v2904
        %v2906 = vrot.slane %v2904, 4
        %v2907 = vrot.slane %v2816, 7
        %v2908 = vsel %vm578, %v2906, %v2907
        %v2909 = vrot.slane %v2907, 4
        %v2910 = vrot.slane %v2817, 7
        %v2911 = vsel %vm578, %v2909, %v2910
        %v2912 = vrot.slane %v2910, 4
        %v2913 = vrot.slane %v2818, 7
        %v2914 = vsel %vm578, %v2912, %v2913
        %v2915 = vrot.slane %v2913, 4
        %v2916 = vrot.slane %v2819, 7
        %v2917 = vsel %vm578, %v2915, %v2916
        %v2918 = vrot.slane %v2916, 4
        %v2919 = vrot.slane %v2820, 7
        %v2920 = vsel %vm578, %v2918, %v2919
        %v2921 = vrot.slane %v2821, 7
        %v2922 = vrot.slane %v2921, 4
        %v2923 = vrot.slane %v2822, 7
        %v2924 = vsel %vm578, %v2922, %v2923
        %v2925 = vrot.slane %v2923, 4
        %v2926 = vrot.slane %v2823, 7
        %v2927 = vsel %vm578, %v2925, %v2926
        %v2928 = vrot.slane %v2926, 4
        %v2929 = vrot.slane %v2824, 7
        %v2930 = vsel %vm578, %v2928, %v2929
        %v2931 = vrot.slane %v2929, 4
        %v2932 = vrot.slane %v2825, 7
        %v2933 = vsel %vm578, %v2931, %v2932
        %v2934 = vrot.slane %v2932, 4
        %v2935 = vrot.slane %v2826, 7
        %v2936 = vsel %vm578, %v2934, %v2935
        %v2937 = vrot.slane %v2935, 4
        %v2938 = vrot.slane %v2827, 7
        %v2939 = vsel %vm578, %v2937, %v2938
        %v2940 = vrot.slane %v2938, 4
        %v2941 = vrot.slane %v2828, 7
        %v2942 = vsel %vm578, %v2940, %v2941
        %v2943 = vrot.slane %v2941, 4
        %v2944 = vrot.slane %v2829, 7
        %v2945 = vsel %vm578, %v2943, %v2944
        %v2946 = vrot.slane %v2944, 4
        %v2947 = vrot.slane %v2830, 7
        %v2948 = vsel %vm578, %v2946, %v2947
        %v2949 = vrot.slane %v2947, 4
        %v2950 = vrot.slane %v2831, 7
        %v2951 = vsel %vm578, %v2949, %v2950
        %v2952 = vrot.slane %v2950, 4
        %v2953 = vrot.slane %v2832, 7
        %v2954 = vsel %vm578, %v2952, %v2953
        %v2955 = vrot.slane %v2953, 4
        %v2956 = vrot.slane %v2833, 7
        %v2957 = vsel %vm578, %v2955, %v2956
        %v2958 = vrot.slane %v2956, 4
        %v2959 = vrot.slane %v2834, 7
        %v2960 = vsel %vm578, %v2958, %v2959
        %v2961 = vrot.slane %v2959, 4
        %v2962 = vrot.slane %v2835, 7
        %v2963 = vsel %vm578, %v2961, %v2962
        %v2964 = vrot.slane %v2962, 4
        %v2965 = vrot.slane %v2836, 7
        %v2966 = vsel %vm578, %v2964, %v2965
        %v2967 = vrot.slane %v2965, 4
        %v2968 = vrot.slane %v2837, 7
        %v2969 = vsel %vm578, %v2967, %v2968
        %v2970 = vld [vmem:[#allocation2 + $0x40] sm:$0xf]
        %v2971 = vld [vmem:[#allocation2 + $0x88] sm:$0xf]
        %v2973 = vshrl.u32 %v2804, 16
        %v2975 = vrot.slane %v2973, 7
        %v2976 = vrot.slane %v2975, 4
        %v2978 = vshrl.u32 %v2805, 16
        %v2980 = vrot.slane %v2978, 7
        %v2981 = vshll.u32 %v2805, 16
        %v2983 = vor.u32 %v2980, %v2981
        %v2984 = vsel %vm681, %v2976, %v2983
        %v2985 = vrot.slane %v2980, 4
        %v2987 = vshrl.u32 %v2806, 16
        %v2989 = vrot.slane %v2987, 7
        %v2990 = vshll.u32 %v2806, 16
        %v2992 = vor.u32 %v2989, %v2990
        %v2993 = vsel %vm681, %v2985, %v2992
        %v2994 = vrot.slane %v2989, 4
        %v2996 = vshrl.u32 %v2807, 16
        %v2998 = vrot.slane %v2996, 7
        %v2999 = vshll.u32 %v2807, 16
        %v3001 = vor.u32 %v2998, %v2999
        %v3002 = vsel %vm681, %v2994, %v3001
        %v3003 = vrot.slane %v2998, 4
        %v3005 = vshrl.u32 %v2808, 16
        %v3007 = vrot.slane %v3005, 7
        %v3008 = vshll.u32 %v2808, 16
        %v3010 = vor.u32 %v3007, %v3008
        %v3011 = vsel %vm681, %v3003, %v3010
        %v3012 = vrot.slane %v3007, 4
        %v3014 = vshrl.u32 %v2809, 16
        %v3016 = vrot.slane %v3014, 7
        %v3017 = vshll.u32 %v2809, 16
        %v3019 = vor.u32 %v3016, %v3017
        %v3020 = vsel %vm681, %v3012, %v3019
        %v3021 = vrot.slane %v3016, 4
        %v3023 = vshrl.u32 %v2810, 16
        %v3025 = vrot.slane %v3023, 7
        %v3026 = vshll.u32 %v2810, 16
        %v3028 = vor.u32 %v3025, %v3026
        %v3029 = vsel %vm681, %v3021, %v3028
        %v3030 = vrot.slane %v3025, 4
        %v3032 = vshrl.u32 %v2811, 16
        %v3034 = vrot.slane %v3032, 7
        %v3035 = vshll.u32 %v2811, 16
        %v3037 = vor.u32 %v3034, %v3035
        %v3038 = vsel %vm681, %v3030, %v3037
        %v3039 = vrot.slane %v3034, 4
        %v3041 = vshrl.u32 %v2812, 16
        %v3043 = vrot.slane %v3041, 7
        %v3044 = vshll.u32 %v2812, 16
        %v3046 = vor.u32 %v3043, %v3044
        %v3047 = vsel %vm681, %v3039, %v3046
        %v3048 = vrot.slane %v3043, 4
        %v3050 = vshrl.u32 %v2813, 16
        %v3052 = vrot.slane %v3050, 7
        %v3053 = vshll.u32 %v2813, 16
        %v3055 = vor.u32 %v3052, %v3053
        %v3056 = vsel %vm681, %v3048, %v3055
        %v3057 = vrot.slane %v3052, 4
        %v3059 = vshrl.u32 %v2814, 16
        %v3061 = vrot.slane %v3059, 7
        %v3062 = vshll.u32 %v2814, 16
        %v3064 = vor.u32 %v3061, %v3062
        %v3065 = vsel %vm681, %v3057, %v3064
        %v3066 = vrot.slane %v3061, 4
        %v3068 = vshrl.u32 %v2815, 16
        %v3070 = vrot.slane %v3068, 7
        %v3071 = vshll.u32 %v2815, 16
        %v3073 = vor.u32 %v3070, %v3071
        %v3074 = vsel %vm681, %v3066, %v3073
        %v3075 = vrot.slane %v3070, 4
        %v3077 = vshrl.u32 %v2816, 16
        %v3079 = vrot.slane %v3077, 7
        %v3080 = vshll.u32 %v2816, 16
        %v3082 = vor.u32 %v3079, %v3080
        %v3083 = vsel %vm681, %v3075, %v3082
        %v3084 = vrot.slane %v3079, 4
        %v3086 = vshrl.u32 %v2817, 16
        %v3088 = vrot.slane %v3086, 7
        %v3089 = vshll.u32 %v2817, 16
        %v3091 = vor.u32 %v3088, %v3089
        %v3092 = vsel %vm681, %v3084, %v3091
        %v3093 = vrot.slane %v3088, 4
        %v3095 = vshrl.u32 %v2818, 16
        %v3097 = vrot.slane %v3095, 7
        %v3098 = vshll.u32 %v2818, 16
        %v3100 = vor.u32 %v3097, %v3098
        %v3101 = vsel %vm681, %v3093, %v3100
        %v3102 = vrot.slane %v3097, 4
        %v3104 = vshrl.u32 %v2819, 16
        %v3106 = vrot.slane %v3104, 7
        %v3107 = vshll.u32 %v2819, 16
        %v3109 = vor.u32 %v3106, %v3107
        %v3110 = vsel %vm681, %v3102, %v3109
        %v3111 = vrot.slane %v3106, 4
        %v3113 = vshrl.u32 %v2970, 16
        %v3115 = vrot.slane %v3113, 7
        %v3116 = vshll.u32 %v2970, 16
        %v3118 = vor.u32 %v3115, %v3116
        %v3119 = vsel %vm681, %v3111, %v3118
        %v3121 = vshrl.u32 %v2821, 16
        %v3123 = vrot.slane %v3121, 7
        %v3124 = vrot.slane %v3123, 4
        %v3126 = vshrl.u32 %v2822, 16
        %v3128 = vrot.slane %v3126, 7
        %v3129 = vshll.u32 %v2822, 16
        %v3131 = vor.u32 %v3128, %v3129
        %v3132 = vsel %vm681, %v3124, %v3131
        %v3133 = vrot.slane %v3128, 4
        %v3135 = vshrl.u32 %v2823, 16
        %v3137 = vrot.slane %v3135, 7
        %v3138 = vshll.u32 %v2823, 16
        %v3140 = vor.u32 %v3137, %v3138
        %v3141 = vsel %vm681, %v3133, %v3140
        %v3142 = vrot.slane %v3137, 4
        %v3144 = vshrl.u32 %v2824, 16
        %v3146 = vrot.slane %v3144, 7
        %v3147 = vshll.u32 %v2824, 16
        %v3149 = vor.u32 %v3146, %v3147
        %v3150 = vsel %vm681, %v3142, %v3149
        %v3151 = vrot.slane %v3146, 4
        %v3153 = vshrl.u32 %v2825, 16
        %v3155 = vrot.slane %v3153, 7
        %v3156 = vshll.u32 %v2825, 16
        %v3158 = vor.u32 %v3155, %v3156
        %v3159 = vsel %vm681, %v3151, %v3158
        %v3160 = vrot.slane %v3155, 4
        %v3162 = vshrl.u32 %v2826, 16
        %v3164 = vrot.slane %v3162, 7
        %v3165 = vshll.u32 %v2826, 16
        %v3167 = vor.u32 %v3164, %v3165
        %v3168 = vsel %vm681, %v3160, %v3167
        %v3169 = vrot.slane %v3164, 4
        %v3171 = vshrl.u32 %v2827, 16
        %v3173 = vrot.slane %v3171, 7
        %v3174 = vshll.u32 %v2827, 16
        %v3176 = vor.u32 %v3173, %v3174
        %v3177 = vsel %vm681, %v3169, %v3176
        %v3178 = vrot.slane %v3173, 4
        %v3180 = vshrl.u32 %v2828, 16
        %v3182 = vrot.slane %v3180, 7
        %v3183 = vshll.u32 %v2828, 16
        %v3185 = vor.u32 %v3182, %v3183
        %v3186 = vsel %vm681, %v3178, %v3185
        %v3187 = vrot.slane %v3182, 4
        %v3189 = vshrl.u32 %v2829, 16
        %v3191 = vrot.slane %v3189, 7
        %v3192 = vshll.u32 %v2829, 16
        %v3194 = vor.u32 %v3191, %v3192
        %v3195 = vsel %vm681, %v3187, %v3194
        %v3196 = vrot.slane %v3191, 4
        %v3198 = vshrl.u32 %v2830, 16
        %v3200 = vrot.slane %v3198, 7
        %v3201 = vshll.u32 %v2830, 16
        %v3203 = vor.u32 %v3200, %v3201
        %v3204 = vsel %vm681, %v3196, %v3203
        %v3205 = vrot.slane %v3200, 4
        %v3207 = vshrl.u32 %v2831, 16
        %v3209 = vrot.slane %v3207, 7
        %v3210 = vshll.u32 %v2831, 16
        %v3212 = vor.u32 %v3209, %v3210
        %v3213 = vsel %vm681, %v3205, %v3212
        %v3214 = vrot.slane %v3209, 4
        %v3216 = vshrl.u32 %v2832, 16
        %v3218 = vrot.slane %v3216, 7
        %v3219 = vshll.u32 %v2832, 16
        %v3221 = vor.u32 %v3218, %v3219
        %v3222 = vsel %vm681, %v3214, %v3221
        %v3223 = vrot.slane %v3218, 4
        %v3225 = vshrl.u32 %v2833, 16
        %v3227 = vrot.slane %v3225, 7
        %v3228 = vshll.u32 %v2833, 16
        %v3230 = vor.u32 %v3227, %v3228
        %v3231 = vsel %vm681, %v3223, %v3230
        %v3232 = vrot.slane %v3227, 4
        %v3234 = vshrl.u32 %v2834, 16
        %v3236 = vrot.slane %v3234, 7
        %v3237 = vshll.u32 %v2834, 16
        %v3239 = vor.u32 %v3236, %v3237
        %v3240 = vsel %vm681, %v3232, %v3239
        %v3241 = vrot.slane %v3236, 4
        %v3243 = vshrl.u32 %v2835, 16
        %v3245 = vrot.slane %v3243, 7
        %v3246 = vshll.u32 %v2835, 16
        %v3248 = vor.u32 %v3245, %v3246
        %v3249 = vsel %vm681, %v3241, %v3248
        %v3250 = vrot.slane %v3245, 4
        %v3252 = vshrl.u32 %v2836, 16
        %v3254 = vrot.slane %v3252, 7
        %v3255 = vshll.u32 %v2836, 16
        %v3257 = vor.u32 %v3254, %v3255
        %v3258 = vsel %vm681, %v3250, %v3257
        %v3259 = vrot.slane %v3254, 4
        %v3261 = vshrl.u32 %v2971, 16
        %v3263 = vrot.slane %v3261, 7
        %v3264 = vshll.u32 %v2971, 16
        %v3266 = vor.u32 %v3263, %v3264
        %v3267 = vsel %vm681, %v3259, %v3266
        %v3268 = vld [vmem:[#allocation2 + $0x4] sm:$0xf]
        %v3269 = vld [vmem:[#allocation2 + $0x8] sm:$0xf]
        %v3270 = vld [vmem:[#allocation2 + $0xc] sm:$0xf]
        %v3271 = vld [vmem:[#allocation2 + $0x10] sm:$0xf]
        %v3272 = vld [vmem:[#allocation2 + $0x14] sm:$0xf]
        %v3273 = vld [vmem:[#allocation2 + $0x18] sm:$0xf]
        %v3274 = vld [vmem:[#allocation2 + $0x1c] sm:$0xf]
        %v3275 = vld [vmem:[#allocation2 + $0x20] sm:$0xf]
        %v3276 = vld [vmem:[#allocation2 + $0x24] sm:$0xf]
        %v3277 = vld [vmem:[#allocation2 + $0x28] sm:$0xf]
        %v3278 = vld [vmem:[#allocation2 + $0x2c] sm:$0xf]
        %v3279 = vld [vmem:[#allocation2 + $0x30] sm:$0xf]
        %v3280 = vld [vmem:[#allocation2 + $0x34] sm:$0xf]
        %v3281 = vld [vmem:[#allocation2 + $0x38] sm:$0xf]
        %v3282 = vld [vmem:[#allocation2 + $0x3c] sm:$0xf]
        %v3283 = vld [vmem:[#allocation2 + $0x40] sm:$0xf]
        %v3284 = vld [vmem:[#allocation2 + $0x44] sm:$0x1]
        %v3285 = vld [vmem:[#allocation2 + $0x4c] sm:$0xf]
        %v3286 = vld [vmem:[#allocation2 + $0x50] sm:$0xf]
        %v3287 = vld [vmem:[#allocation2 + $0x54] sm:$0xf]
        %v3288 = vld [vmem:[#allocation2 + $0x58] sm:$0xf]
        %v3289 = vld [vmem:[#allocation2 + $0x5c] sm:$0xf]
        %v3290 = vld [vmem:[#allocation2 + $0x60] sm:$0xf]
        %v3291 = vld [vmem:[#allocation2 + $0x64] sm:$0xf]
        %v3292 = vld [vmem:[#allocation2 + $0x68] sm:$0xf]
        %v3293 = vld [vmem:[#allocation2 + $0x6c] sm:$0xf]
        %v3294 = vld [vmem:[#allocation2 + $0x70] sm:$0xf]
        %v3295 = vld [vmem:[#allocation2 + $0x74] sm:$0xf]
        %v3296 = vld [vmem:[#allocation2 + $0x78] sm:$0xf]
        %v3297 = vld [vmem:[#allocation2 + $0x7c] sm:$0xf]
        %v3298 = vld [vmem:[#allocation2 + $0x80] sm:$0xf]
        %v3299 = vld [vmem:[#allocation2 + $0x84] sm:$0xf]
        %v3300 = vld [vmem:[#allocation2 + $0x88] sm:$0xf]
        %v3301 = vld [vmem:[#allocation2 + $0x8c] sm:$0x1]
        %v3303 = vshrl.u32 %v3268, 16
        %v3305 = vrot.slane %v3303, 4
        %v3306 = vshll.u32 %v3268, 16
        %v3308 = vrot.slane %v3306, 5
        %v3309 = vor.u32 %v3305, %v3308
        %v3310 = vrot.slane %v3309, 4
        %v3312 = vshll.u32 %v3269, 16
        %v3314 = vrot.slane %v3312, 5
        %v3315 = vsel %vm1014, %v3310, %v3314
        %v3316 = vshrl.u32 %v3269, 16
        %v3318 = vrot.slane %v3316, 4
        %v3319 = vor.u32 %v3318, %v3314
        %v3320 = vrot.slane %v3319, 4
        %v3322 = vshll.u32 %v3270, 16
        %v3324 = vrot.slane %v3322, 5
        %v3325 = vsel %vm1014, %v3320, %v3324
        %v3326 = vshrl.u32 %v3270, 16
        %v3328 = vrot.slane %v3326, 4
        %v3329 = vor.u32 %v3328, %v3324
        %v3330 = vrot.slane %v3329, 4
        %v3332 = vshll.u32 %v3271, 16
        %v3334 = vrot.slane %v3332, 5
        %v3335 = vsel %vm1014, %v3330, %v3334
        %v3336 = vshrl.u32 %v3271, 16
        %v3338 = vrot.slane %v3336, 4
        %v3339 = vor.u32 %v3338, %v3334
        %v3340 = vrot.slane %v3339, 4
        %v3342 = vshll.u32 %v3272, 16
        %v3344 = vrot.slane %v3342, 5
        %v3345 = vsel %vm1014, %v3340, %v3344
        %v3346 = vshrl.u32 %v3272, 16
        %v3348 = vrot.slane %v3346, 4
        %v3349 = vor.u32 %v3348, %v3344
        %v3350 = vrot.slane %v3349, 4
        %v3352 = vshll.u32 %v3273, 16
        %v3354 = vrot.slane %v3352, 5
        %v3355 = vsel %vm1014, %v3350, %v3354
        %v3356 = vshrl.u32 %v3273, 16
        %v3358 = vrot.slane %v3356, 4
        %v3359 = vor.u32 %v3358, %v3354
        %v3360 = vrot.slane %v3359, 4
        %v3362 = vshll.u32 %v3274, 16
        %v3364 = vrot.slane %v3362, 5
        %v3365 = vsel %vm1014, %v3360, %v3364
        %v3366 = vshrl.u32 %v3274, 16
        %v3368 = vrot.slane %v3366, 4
        %v3369 = vor.u32 %v3368, %v3364
        %v3370 = vrot.slane %v3369, 4
        %v3372 = vshll.u32 %v3275, 16
        %v3374 = vrot.slane %v3372, 5
        %v3375 = vsel %vm1014, %v3370, %v3374
        %v3376 = vshrl.u32 %v3275, 16
        %v3378 = vrot.slane %v3376, 4
        %v3379 = vor.u32 %v3378, %v3374
        %v3380 = vrot.slane %v3379, 4
        %v3382 = vshll.u32 %v3276, 16
        %v3384 = vrot.slane %v3382, 5
        %v3385 = vsel %vm1014, %v3380, %v3384
        %v3386 = vshrl.u32 %v3276, 16
        %v3388 = vrot.slane %v3386, 4
        %v3389 = vor.u32 %v3388, %v3384
        %v3390 = vrot.slane %v3389, 4
        %v3392 = vshll.u32 %v3277, 16
        %v3394 = vrot.slane %v3392, 5
        %v3395 = vsel %vm1014, %v3390, %v3394
        %v3396 = vshrl.u32 %v3277, 16
        %v3398 = vrot.slane %v3396, 4
        %v3399 = vor.u32 %v3398, %v3394
        %v3400 = vrot.slane %v3399, 4
        %v3402 = vshll.u32 %v3278, 16
        %v3404 = vrot.slane %v3402, 5
        %v3405 = vsel %vm1014, %v3400, %v3404
        %v3406 = vshrl.u32 %v3278, 16
        %v3408 = vrot.slane %v3406, 4
        %v3409 = vor.u32 %v3408, %v3404
        %v3410 = vrot.slane %v3409, 4
        %v3412 = vshll.u32 %v3279, 16
        %v3414 = vrot.slane %v3412, 5
        %v3415 = vsel %vm1014, %v3410, %v3414
        %v3416 = vshrl.u32 %v3279, 16
        %v3418 = vrot.slane %v3416, 4
        %v3419 = vor.u32 %v3418, %v3414
        %v3420 = vrot.slane %v3419, 4
        %v3422 = vshll.u32 %v3280, 16
        %v3424 = vrot.slane %v3422, 5
        %v3425 = vsel %vm1014, %v3420, %v3424
        %v3426 = vshrl.u32 %v3280, 16
        %v3428 = vrot.slane %v3426, 4
        %v3429 = vor.u32 %v3428, %v3424
        %v3430 = vrot.slane %v3429, 4
        %v3432 = vshll.u32 %v3281, 16
        %v3434 = vrot.slane %v3432, 5
        %v3435 = vsel %vm1014, %v3430, %v3434
        %v3436 = vshrl.u32 %v3281, 16
        %v3438 = vrot.slane %v3436, 4
        %v3439 = vor.u32 %v3438, %v3434
        %v3440 = vrot.slane %v3439, 4
        %v3442 = vshll.u32 %v3282, 16
        %v3444 = vrot.slane %v3442, 5
        %v3445 = vsel %vm1014, %v3440, %v3444
        %v3446 = vshrl.u32 %v3282, 16
        %v3448 = vrot.slane %v3446, 4
        %v3449 = vor.u32 %v3448, %v3444
        %v3450 = vrot.slane %v3449, 4
        %v3452 = vshll.u32 %v3283, 16
        %v3454 = vrot.slane %v3452, 5
        %v3455 = vsel %vm1014, %v3450, %v3454
        %v3456 = vshrl.u32 %v3283, 16
        %v3458 = vrot.slane %v3456, 4
        %v3459 = vor.u32 %v3458, %v3454
        %v3460 = vrot.slane %v3459, 4
        %v3462 = vshll.u32 %v3284, 16
        %v3464 = vrot.slane %v3462, 5
        %v3465 = vsel %vm1014, %v3460, %v3464
        %v3467 = vshrl.u32 %v3285, 16
        %v3469 = vrot.slane %v3467, 4
        %v3470 = vshll.u32 %v3285, 16
        %v3472 = vrot.slane %v3470, 5
        %v3473 = vor.u32 %v3469, %v3472
        %v3474 = vrot.slane %v3473, 4
        %v3476 = vshll.u32 %v3286, 16
        %v3478 = vrot.slane %v3476, 5
        %v3479 = vsel %vm1014, %v3474, %v3478
        %v3480 = vshrl.u32 %v3286, 16
        %v3482 = vrot.slane %v3480, 4
        %v3483 = vor.u32 %v3482, %v3478
        %v3484 = vrot.slane %v3483, 4
        %v3486 = vshll.u32 %v3287, 16
        %v3488 = vrot.slane %v3486, 5
        %v3489 = vsel %vm1014, %v3484, %v3488
        %v3490 = vshrl.u32 %v3287, 16
        %v3492 = vrot.slane %v3490, 4
        %v3493 = vor.u32 %v3492, %v3488
        %v3494 = vrot.slane %v3493, 4
        %v3496 = vshll.u32 %v3288, 16
        %v3498 = vrot.slane %v3496, 5
        %v3499 = vsel %vm1014, %v3494, %v3498
        %v3500 = vshrl.u32 %v3288, 16
        %v3502 = vrot.slane %v3500, 4
        %v3503 = vor.u32 %v3502, %v3498
        %v3504 = vrot.slane %v3503, 4
        %v3506 = vshll.u32 %v3289, 16
        %v3508 = vrot.slane %v3506, 5
        %v3509 = vsel %vm1014, %v3504, %v3508
        %v3510 = vshrl.u32 %v3289, 16
        %v3512 = vrot.slane %v3510, 4
        %v3513 = vor.u32 %v3512, %v3508
        %v3514 = vrot.slane %v3513, 4
        %v3516 = vshll.u32 %v3290, 16
        %v3518 = vrot.slane %v3516, 5
        %v3519 = vsel %vm1014, %v3514, %v3518
        %v3520 = vshrl.u32 %v3290, 16
        %v3522 = vrot.slane %v3520, 4
        %v3523 = vor.u32 %v3522, %v3518
        %v3524 = vrot.slane %v3523, 4
        %v3526 = vshll.u32 %v3291, 16
        %v3528 = vrot.slane %v3526, 5
        %v3529 = vsel %vm1014, %v3524, %v3528
        %v3530 = vshrl.u32 %v3291, 16
        %v3532 = vrot.slane %v3530, 4
        %v3533 = vor.u32 %v3532, %v3528
        %v3534 = vrot.slane %v3533, 4
        %v3536 = vshll.u32 %v3292, 16
        %v3538 = vrot.slane %v3536, 5
        %v3539 = vsel %vm1014, %v3534, %v3538
        %v3540 = vshrl.u32 %v3292, 16
        %v3542 = vrot.slane %v3540, 4
        %v3543 = vor.u32 %v3542, %v3538
        %v3544 = vrot.slane %v3543, 4
        %v3546 = vshll.u32 %v3293, 16
        %v3548 = vrot.slane %v3546, 5
        %v3549 = vsel %vm1014, %v3544, %v3548
        %v3550 = vshrl.u32 %v3293, 16
        %v3552 = vrot.slane %v3550, 4
        %v3553 = vor.u32 %v3552, %v3548
        %v3554 = vrot.slane %v3553, 4
        %v3556 = vshll.u32 %v3294, 16
        %v3558 = vrot.slane %v3556, 5
        %v3559 = vsel %vm1014, %v3554, %v3558
        %v3560 = vshrl.u32 %v3294, 16
        %v3562 = vrot.slane %v3560, 4
        %v3563 = vor.u32 %v3562, %v3558
        %v3564 = vrot.slane %v3563, 4
        %v3566 = vshll.u32 %v3295, 16
        %v3568 = vrot.slane %v3566, 5
        %v3569 = vsel %vm1014, %v3564, %v3568
        %v3570 = vshrl.u32 %v3295, 16
        %v3572 = vrot.slane %v3570, 4
        %v3573 = vor.u32 %v3572, %v3568
        %v3574 = vrot.slane %v3573, 4
        %v3576 = vshll.u32 %v3296, 16
        %v3578 = vrot.slane %v3576, 5
        %v3579 = vsel %vm1014, %v3574, %v3578
        %v3580 = vshrl.u32 %v3296, 16
        %v3582 = vrot.slane %v3580, 4
        %v3583 = vor.u32 %v3582, %v3578
        %v3584 = vrot.slane %v3583, 4
        %v3586 = vshll.u32 %v3297, 16
        %v3588 = vrot.slane %v3586, 5
        %v3589 = vsel %vm1014, %v3584, %v3588
        %v3590 = vshrl.u32 %v3297, 16
        %v3592 = vrot.slane %v3590, 4
        %v3593 = vor.u32 %v3592, %v3588
        %v3594 = vrot.slane %v3593, 4
        %v3596 = vshll.u32 %v3298, 16
        %v3598 = vrot.slane %v3596, 5
        %v3599 = vsel %vm1014, %v3594, %v3598
        %v3600 = vshrl.u32 %v3298, 16
        %v3602 = vrot.slane %v3600, 4
        %v3603 = vor.u32 %v3602, %v3598
        %v3604 = vrot.slane %v3603, 4
        %v3606 = vshll.u32 %v3299, 16
        %v3608 = vrot.slane %v3606, 5
        %v3609 = vsel %vm1014, %v3604, %v3608
        %v3610 = vshrl.u32 %v3299, 16
        %v3612 = vrot.slane %v3610, 4
        %v3613 = vor.u32 %v3612, %v3608
        %v3614 = vrot.slane %v3613, 4
        %v3616 = vshll.u32 %v3300, 16
        %v3618 = vrot.slane %v3616, 5
        %v3619 = vsel %vm1014, %v3614, %v3618
        %v3620 = vshrl.u32 %v3300, 16
        %v3622 = vrot.slane %v3620, 4
        %v3623 = vor.u32 %v3622, %v3618
        %v3624 = vrot.slane %v3623, 4
        %v3626 = vshll.u32 %v3301, 16
        %v3628 = vrot.slane %v3626, 5
        %v3629 = vsel %vm1014, %v3624, %v3628
        %v3630 = vld [vmem:[#allocation2 + $0x4] sm:$0xe]
        %v3631 = vld [vmem:[#allocation2 + $0x4c] sm:$0xe]
        %v3666 = vrot.slane %v3630, 5
        %v3667 = vrot.slane %v3666, 4
        %v3668 = vrot.slane %v3269, 5
        %v3669 = vsel %vm1381, %v3667, %v3668
        %v3670 = vrot.slane %v3668, 4
        %v3671 = vrot.slane %v3270, 5
        %v3672 = vsel %vm1381, %v3670, %v3671
        %v3673 = vrot.slane %v3671, 4
        %v3674 = vrot.slane %v3271, 5
        %v3675 = vsel %vm1381, %v3673, %v3674
        %v3676 = vrot.slane %v3674, 4
        %v3677 = vrot.slane %v3272, 5
        %v3678 = vsel %vm1381, %v3676, %v3677
        %v3679 = vrot.slane %v3677, 4
        %v3680 = vrot.slane %v3273, 5
        %v3681 = vsel %vm1381, %v3679, %v3680
        %v3682 = vrot.slane %v3680, 4
        %v3683 = vrot.slane %v3274, 5
        %v3684 = vsel %vm1381, %v3682, %v3683
        %v3685 = vrot.slane %v3683, 4
        %v3686 = vrot.slane %v3275, 5
        %v3687 = vsel %vm1381, %v3685, %v3686
        %v3688 = vrot.slane %v3686, 4
        %v3689 = vrot.slane %v3276, 5
        %v3690 = vsel %vm1381, %v3688, %v3689
        %v3691 = vrot.slane %v3689, 4
        %v3692 = vrot.slane %v3277, 5
        %v3693 = vsel %vm1381, %v3691, %v3692
        %v3694 = vrot.slane %v3692, 4
        %v3695 = vrot.slane %v3278, 5
        %v3696 = vsel %vm1381, %v3694, %v3695
        %v3697 = vrot.slane %v3695, 4
        %v3698 = vrot.slane %v3279, 5
        %v3699 = vsel %vm1381, %v3697, %v3698
        %v3700 = vrot.slane %v3698, 4
        %v3701 = vrot.slane %v3280, 5
        %v3702 = vsel %vm1381, %v3700, %v3701
        %v3703 = vrot.slane %v3701, 4
        %v3704 = vrot.slane %v3281, 5
        %v3705 = vsel %vm1381, %v3703, %v3704
        %v3706 = vrot.slane %v3704, 4
        %v3707 = vrot.slane %v3282, 5
        %v3708 = vsel %vm1381, %v3706, %v3707
        %v3709 = vrot.slane %v3707, 4
        %v3710 = vrot.slane %v3283, 5
        %v3711 = vsel %vm1381, %v3709, %v3710
        %v3712 = vrot.slane %v3710, 4
        %v3713 = vrot.slane %v3284, 5
        %v3714 = vsel %vm1381, %v3712, %v3713
        %v3715 = vrot.slane %v3631, 5
        %v3716 = vrot.slane %v3715, 4
        %v3717 = vrot.slane %v3286, 5
        %v3718 = vsel %vm1381, %v3716, %v3717
        %v3719 = vrot.slane %v3717, 4
        %v3720 = vrot.slane %v3287, 5
        %v3721 = vsel %vm1381, %v3719, %v3720
        %v3722 = vrot.slane %v3720, 4
        %v3723 = vrot.slane %v3288, 5
        %v3724 = vsel %vm1381, %v3722, %v3723
        %v3725 = vrot.slane %v3723, 4
        %v3726 = vrot.slane %v3289, 5
        %v3727 = vsel %vm1381, %v3725, %v3726
        %v3728 = vrot.slane %v3726, 4
        %v3729 = vrot.slane %v3290, 5
        %v3730 = vsel %vm1381, %v3728, %v3729
        %v3731 = vrot.slane %v3729, 4
        %v3732 = vrot.slane %v3291, 5
        %v3733 = vsel %vm1381, %v3731, %v3732
        %v3734 = vrot.slane %v3732, 4
        %v3735 = vrot.slane %v3292, 5
        %v3736 = vsel %vm1381, %v3734, %v3735
        %v3737 = vrot.slane %v3735, 4
        %v3738 = vrot.slane %v3293, 5
        %v3739 = vsel %vm1381, %v3737, %v3738
        %v3740 = vrot.slane %v3738, 4
        %v3741 = vrot.slane %v3294, 5
        %v3742 = vsel %vm1381, %v3740, %v3741
        %v3743 = vrot.slane %v3741, 4
        %v3744 = vrot.slane %v3295, 5
        %v3745 = vsel %vm1381, %v3743, %v3744
        %v3746 = vrot.slane %v3744, 4
        %v3747 = vrot.slane %v3296, 5
        %v3748 = vsel %vm1381, %v3746, %v3747
        %v3749 = vrot.slane %v3747, 4
        %v3750 = vrot.slane %v3297, 5
        %v3751 = vsel %vm1381, %v3749, %v3750
        %v3752 = vrot.slane %v3750, 4
        %v3753 = vrot.slane %v3298, 5
        %v3754 = vsel %vm1381, %v3752, %v3753
        %v3755 = vrot.slane %v3753, 4
        %v3756 = vrot.slane %v3299, 5
        %v3757 = vsel %vm1381, %v3755, %v3756
        %v3758 = vrot.slane %v3756, 4
        %v3759 = vrot.slane %v3300, 5
        %v3760 = vsel %vm1381, %v3758, %v3759
        %v3761 = vrot.slane %v3759, 4
        %v3762 = vrot.slane %v3301, 5
        %v3763 = vsel %vm1381, %v3761, %v3762
        %v3764 = vunpack.c.l.b16 %v2875
        %v3765 = vunpack.c.l.b16 %v2878
        %v3766 = vunpack.c.l.b16 %v2881
        %v3767 = vunpack.c.l.b16 %v2884
        %v3768 = vunpack.c.l.b16 %v2887
        %v3769 = vunpack.c.l.b16 %v2890
        %v3770 = vunpack.c.l.b16 %v2893
        %v3771 = vunpack.c.l.b16 %v2896
        %v3772 = vunpack.c.l.b16 %v2899
        %v3773 = vunpack.c.l.b16 %v2902
        %v3774 = vunpack.c.l.b16 %v2905
        %v3775 = vunpack.c.l.b16 %v2908
        %v3776 = vunpack.c.l.b16 %v2911
        %v3777 = vunpack.c.l.b16 %v2914
        %v3778 = vunpack.c.l.b16 %v2917
        %v3779 = vunpack.c.l.b16 %v2920
        %v3780 = vunpack.c.l.b16 %v2924
        %v3781 = vunpack.c.l.b16 %v2927
        %v3782 = vunpack.c.l.b16 %v2930
        %v3783 = vunpack.c.l.b16 %v2933
        %v3784 = vunpack.c.l.b16 %v2936
        %v3785 = vunpack.c.l.b16 %v2939
        %v3786 = vunpack.c.l.b16 %v2942
        %v3787 = vunpack.c.l.b16 %v2945
        %v3788 = vunpack.c.l.b16 %v2948
        %v3789 = vunpack.c.l.b16 %v2951
        %v3790 = vunpack.c.l.b16 %v2954
        %v3791 = vunpack.c.l.b16 %v2957
        %v3792 = vunpack.c.l.b16 %v2960
        %v3793 = vunpack.c.l.b16 %v2963
        %v3794 = vunpack.c.l.b16 %v2966
        %v3795 = vunpack.c.l.b16 %v2969
        %v3796 = vpack.c.b16 %v3765, %v3764
        %v3797 = vpack.c.b16 %v3767, %v3766
        %v3798 = vpack.c.b16 %v3769, %v3768
        %v3799 = vpack.c.b16 %v3771, %v3770
        %v3800 = vpack.c.b16 %v3773, %v3772
        %v3801 = vpack.c.b16 %v3775, %v3774
        %v3802 = vpack.c.b16 %v3777, %v3776
        %v3803 = vpack.c.b16 %v3779, %v3778
        %v3804 = vpack.c.b16 %v3781, %v3780
        %v3805 = vpack.c.b16 %v3783, %v3782
        %v3806 = vpack.c.b16 %v3785, %v3784
        %v3807 = vpack.c.b16 %v3787, %v3786
        %v3808 = vpack.c.b16 %v3789, %v3788
        %v3809 = vpack.c.b16 %v3791, %v3790
        %v3810 = vpack.c.b16 %v3793, %v3792
        %v3811 = vpack.c.b16 %v3795, %v3794
        %v3828 = vunpack.c.l.b16 %v2984
        %v3829 = vunpack.c.l.b16 %v2993
        %v3830 = vunpack.c.l.b16 %v3002
        %v3831 = vunpack.c.l.b16 %v3011
        %v3832 = vunpack.c.l.b16 %v3020
        %v3833 = vunpack.c.l.b16 %v3029
        %v3834 = vunpack.c.l.b16 %v3038
        %v3835 = vunpack.c.l.b16 %v3047
        %v3836 = vunpack.c.l.b16 %v3056
        %v3837 = vunpack.c.l.b16 %v3065
        %v3838 = vunpack.c.l.b16 %v3074
        %v3839 = vunpack.c.l.b16 %v3083
        %v3840 = vunpack.c.l.b16 %v3092
        %v3841 = vunpack.c.l.b16 %v3101
        %v3842 = vunpack.c.l.b16 %v3110
        %v3843 = vunpack.c.l.b16 %v3119
        %v3844 = vunpack.c.l.b16 %v3132
        %v3845 = vunpack.c.l.b16 %v3141
        %v3846 = vunpack.c.l.b16 %v3150
        %v3847 = vunpack.c.l.b16 %v3159
        %v3848 = vunpack.c.l.b16 %v3168
        %v3849 = vunpack.c.l.b16 %v3177
        %v3850 = vunpack.c.l.b16 %v3186
        %v3851 = vunpack.c.l.b16 %v3195
        %v3852 = vunpack.c.l.b16 %v3204
        %v3853 = vunpack.c.l.b16 %v3213
        %v3854 = vunpack.c.l.b16 %v3222
        %v3855 = vunpack.c.l.b16 %v3231
        %v3856 = vunpack.c.l.b16 %v3240
        %v3857 = vunpack.c.l.b16 %v3249
        %v3858 = vunpack.c.l.b16 %v3258
        %v3859 = vunpack.c.l.b16 %v3267
        %v3860 = vpack.c.b16 %v3829, %v3828
        %v3861 = vpack.c.b16 %v3831, %v3830
        %v3862 = vpack.c.b16 %v3833, %v3832
        %v3863 = vpack.c.b16 %v3835, %v3834
        %v3864 = vpack.c.b16 %v3837, %v3836
        %v3865 = vpack.c.b16 %v3839, %v3838
        %v3866 = vpack.c.b16 %v3841, %v3840
        %v3867 = vpack.c.b16 %v3843, %v3842
        %v3868 = vpack.c.b16 %v3845, %v3844
        %v3869 = vpack.c.b16 %v3847, %v3846
        %v3870 = vpack.c.b16 %v3849, %v3848
        %v3871 = vpack.c.b16 %v3851, %v3850
        %v3872 = vpack.c.b16 %v3853, %v3852
        %v3873 = vpack.c.b16 %v3855, %v3854
        %v3874 = vpack.c.b16 %v3857, %v3856
        %v3875 = vpack.c.b16 %v3859, %v3858
        %v3894 = vunpack.c.l.b16 %v2805
        %v3895 = vunpack.c.l.b16 %v2806
        %v3896 = vunpack.c.l.b16 %v2807
        %v3897 = vunpack.c.l.b16 %v2808
        %v3898 = vunpack.c.l.b16 %v2809
        %v3899 = vunpack.c.l.b16 %v2810
        %v3900 = vunpack.c.l.b16 %v2811
        %v3901 = vunpack.c.l.b16 %v2812
        %v3902 = vunpack.c.l.b16 %v2813
        %v3903 = vunpack.c.l.b16 %v2814
        %v3904 = vunpack.c.l.b16 %v2815
        %v3905 = vunpack.c.l.b16 %v2816
        %v3906 = vunpack.c.l.b16 %v2817
        %v3907 = vunpack.c.l.b16 %v2818
        %v3908 = vunpack.c.l.b16 %v2819
        %v3909 = vunpack.c.l.b16 %v2970
        %v3910 = vunpack.c.l.b16 %v2822
        %v3911 = vunpack.c.l.b16 %v2823
        %v3912 = vunpack.c.l.b16 %v2824
        %v3913 = vunpack.c.l.b16 %v2825
        %v3914 = vunpack.c.l.b16 %v2826
        %v3915 = vunpack.c.l.b16 %v2827
        %v3916 = vunpack.c.l.b16 %v2828
        %v3917 = vunpack.c.l.b16 %v2829
        %v3918 = vunpack.c.l.b16 %v2830
        %v3919 = vunpack.c.l.b16 %v2831
        %v3920 = vunpack.c.l.b16 %v2832
        %v3921 = vunpack.c.l.b16 %v2833
        %v3922 = vunpack.c.l.b16 %v2834
        %v3923 = vunpack.c.l.b16 %v2835
        %v3924 = vunpack.c.l.b16 %v2836
        %v3925 = vunpack.c.l.b16 %v2971
        %v3926 = vpack.c.b16 %v3895, %v3894
        %v3927 = vpack.c.b16 %v3897, %v3896
        %v3928 = vpack.c.b16 %v3899, %v3898
        %v3929 = vpack.c.b16 %v3901, %v3900
        %v3930 = vpack.c.b16 %v3903, %v3902
        %v3931 = vpack.c.b16 %v3905, %v3904
        %v3932 = vpack.c.b16 %v3907, %v3906
        %v3933 = vpack.c.b16 %v3909, %v3908
        %v3934 = vpack.c.b16 %v3911, %v3910
        %v3935 = vpack.c.b16 %v3913, %v3912
        %v3936 = vpack.c.b16 %v3915, %v3914
        %v3937 = vpack.c.b16 %v3917, %v3916
        %v3938 = vpack.c.b16 %v3919, %v3918
        %v3939 = vpack.c.b16 %v3921, %v3920
        %v3940 = vpack.c.b16 %v3923, %v3922
        %v3941 = vpack.c.b16 %v3925, %v3924
        %v3958 = vunpack.c.l.b16 %v3315
        %v3959 = vunpack.c.l.b16 %v3325
        %v3960 = vunpack.c.l.b16 %v3335
        %v3961 = vunpack.c.l.b16 %v3345
        %v3962 = vunpack.c.l.b16 %v3355
        %v3963 = vunpack.c.l.b16 %v3365
        %v3964 = vunpack.c.l.b16 %v3375
        %v3965 = vunpack.c.l.b16 %v3385
        %v3966 = vunpack.c.l.b16 %v3395
        %v3967 = vunpack.c.l.b16 %v3405
        %v3968 = vunpack.c.l.b16 %v3415
        %v3969 = vunpack.c.l.b16 %v3425
        %v3970 = vunpack.c.l.b16 %v3435
        %v3971 = vunpack.c.l.b16 %v3445
        %v3972 = vunpack.c.l.b16 %v3455
        %v3973 = vunpack.c.l.b16 %v3465
        %v3974 = vunpack.c.l.b16 %v3479
        %v3975 = vunpack.c.l.b16 %v3489
        %v3976 = vunpack.c.l.b16 %v3499
        %v3977 = vunpack.c.l.b16 %v3509
        %v3978 = vunpack.c.l.b16 %v3519
        %v3979 = vunpack.c.l.b16 %v3529
        %v3980 = vunpack.c.l.b16 %v3539
        %v3981 = vunpack.c.l.b16 %v3549
        %v3982 = vunpack.c.l.b16 %v3559
        %v3983 = vunpack.c.l.b16 %v3569
        %v3984 = vunpack.c.l.b16 %v3579
        %v3985 = vunpack.c.l.b16 %v3589
        %v3986 = vunpack.c.l.b16 %v3599
        %v3987 = vunpack.c.l.b16 %v3609
        %v3988 = vunpack.c.l.b16 %v3619
        %v3989 = vunpack.c.l.b16 %v3629
        %v3990 = vpack.c.b16 %v3959, %v3958
        %v3991 = vpack.c.b16 %v3961, %v3960
        %v3992 = vpack.c.b16 %v3963, %v3962
        %v3993 = vpack.c.b16 %v3965, %v3964
        %v3994 = vpack.c.b16 %v3967, %v3966
        %v3995 = vpack.c.b16 %v3969, %v3968
        %v3996 = vpack.c.b16 %v3971, %v3970
        %v3997 = vpack.c.b16 %v3973, %v3972
        %v3998 = vpack.c.b16 %v3975, %v3974
        %v3999 = vpack.c.b16 %v3977, %v3976
        %v4000 = vpack.c.b16 %v3979, %v3978
        %v4001 = vpack.c.b16 %v3981, %v3980
        %v4002 = vpack.c.b16 %v3983, %v3982
        %v4003 = vpack.c.b16 %v3985, %v3984
        %v4004 = vpack.c.b16 %v3987, %v3986
        %v4005 = vpack.c.b16 %v3989, %v3988
        %v4022 = vunpack.c.l.b16 %v3669
        %v4023 = vunpack.c.l.b16 %v3672
        %v4024 = vunpack.c.l.b16 %v3675
        %v4025 = vunpack.c.l.b16 %v3678
        %v4026 = vunpack.c.l.b16 %v3681
        %v4027 = vunpack.c.l.b16 %v3684
        %v4028 = vunpack.c.l.b16 %v3687
        %v4029 = vunpack.c.l.b16 %v3690
        %v4030 = vunpack.c.l.b16 %v3693
        %v4031 = vunpack.c.l.b16 %v3696
        %v4032 = vunpack.c.l.b16 %v3699
        %v4033 = vunpack.c.l.b16 %v3702
        %v4034 = vunpack.c.l.b16 %v3705
        %v4035 = vunpack.c.l.b16 %v3708
        %v4036 = vunpack.c.l.b16 %v3711
        %v4037 = vunpack.c.l.b16 %v3714
        %v4038 = vunpack.c.l.b16 %v3718
        %v4039 = vunpack.c.l.b16 %v3721
        %v4040 = vunpack.c.l.b16 %v3724
        %v4041 = vunpack.c.l.b16 %v3727
        %v4042 = vunpack.c.l.b16 %v3730
        %v4043 = vunpack.c.l.b16 %v3733
        %v4044 = vunpack.c.l.b16 %v3736
        %v4045 = vunpack.c.l.b16 %v3739
        %v4046 = vunpack.c.l.b16 %v3742
        %v4047 = vunpack.c.l.b16 %v3745
        %v4048 = vunpack.c.l.b16 %v3748
        %v4049 = vunpack.c.l.b16 %v3751
        %v4050 = vunpack.c.l.b16 %v3754
        %v4051 = vunpack.c.l.b16 %v3757
        %v4052 = vunpack.c.l.b16 %v3760
        %v4053 = vunpack.c.l.b16 %v3763
        %v4054 = vpack.c.b16 %v4023, %v4022
        %v4055 = vpack.c.b16 %v4025, %v4024
        %v4056 = vpack.c.b16 %v4027, %v4026
        %v4057 = vpack.c.b16 %v4029, %v4028
        %v4058 = vpack.c.b16 %v4031, %v4030
        %v4059 = vpack.c.b16 %v4033, %v4032
        %v4060 = vpack.c.b16 %v4035, %v4034
        %v4061 = vpack.c.b16 %v4037, %v4036
        %v4062 = vpack.c.b16 %v4039, %v4038
        %v4063 = vpack.c.b16 %v4041, %v4040
        %v4064 = vpack.c.b16 %v4043, %v4042
        %v4065 = vpack.c.b16 %v4045, %v4044
        %v4066 = vpack.c.b16 %v4047, %v4046
        %v4067 = vpack.c.b16 %v4049, %v4048
        %v4068 = vpack.c.b16 %v4051, %v4050
        %v4069 = vpack.c.b16 %v4053, %v4052
        %v4086 = vld [vmem:[#allocation8] sm:$0xf]
        %v4087 = vld [vmem:[#allocation8 + $0x4] sm:$0xf]
        %v4088 = vld [vmem:[#allocation8 + $0x8] sm:$0xf]
        %v4089 = vld [vmem:[#allocation8 + $0xc] sm:$0xf]
        %v4090 = vld [vmem:[#allocation8 + $0x10] sm:$0xf]
        %v4091 = vld [vmem:[#allocation8 + $0x14] sm:$0xf]
        %v4092 = vld [vmem:[#allocation8 + $0x18] sm:$0xf]
        %v4093 = vld [vmem:[#allocation8 + $0x1c] sm:$0xf]
        %v4094 = vld [vmem:[#allocation8 + $0x20] sm:$0xf]
        %v4095 = vld [vmem:[#allocation8 + $0x24] sm:$0xf]
        %v4096 = vld [vmem:[#allocation8 + $0x28] sm:$0xf]
        %v4097 = vld [vmem:[#allocation8 + $0x2c] sm:$0xf]
        %v4098 = vld [vmem:[#allocation8 + $0x30] sm:$0xf]
        %v4099 = vld [vmem:[#allocation8 + $0x34] sm:$0xf]
        %v4100 = vld [vmem:[#allocation8 + $0x38] sm:$0xf]
        %v4101 = vld [vmem:[#allocation8 + $0x3c] sm:$0xf]
        %v4102 = vld [vmem:[#allocation8 + $0x40] sm:$0xf]
        %v4103 = vld [vmem:[#allocation8 + $0x44] sm:$0xf]
        %v4104 = vld [vmem:[#allocation8 + $0x48] sm:$0xf]
        %v4105 = vld [vmem:[#allocation8 + $0x4c] sm:$0xf]
        %v4106 = vld [vmem:[#allocation8 + $0x50] sm:$0xf]
        %v4107 = vld [vmem:[#allocation8 + $0x54] sm:$0xf]
        %v4108 = vld [vmem:[#allocation8 + $0x58] sm:$0xf]
        %v4109 = vld [vmem:[#allocation8 + $0x5c] sm:$0xf]
        %v4110 = vld [vmem:[#allocation8 + $0x60] sm:$0xf]
        %v4111 = vld [vmem:[#allocation8 + $0x64] sm:$0xf]
        %v4112 = vld [vmem:[#allocation8 + $0x68] sm:$0xf]
        %v4113 = vld [vmem:[#allocation8 + $0x6c] sm:$0xf]
        %v4114 = vld [vmem:[#allocation8 + $0x70] sm:$0xf]
        %v4115 = vld [vmem:[#allocation8 + $0x74] sm:$0xf]
        %v4116 = vld [vmem:[#allocation8 + $0x78] sm:$0xf]
        %v4117 = vld [vmem:[#allocation8 + $0x7c] sm:$0xf]
        %v4118 = vld [vmem:[#allocation8 + $0x80] sm:$0xf]
        %v4119 = vld [vmem:[#allocation8 + $0x84] sm:$0xf]
        %v4120 = vld [vmem:[#allocation8 + $0x88] sm:$0xf]
        %v4121 = vld [vmem:[#allocation8 + $0x8c] sm:$0xf]
        %v4122 = vld [vmem:[#allocation8 + $0x90] sm:$0xf]
        %v4123 = vld [vmem:[#allocation8 + $0x94] sm:$0xf]
        %v4124 = vld [vmem:[#allocation8 + $0x98] sm:$0xf]
        %v4125 = vld [vmem:[#allocation8 + $0x9c] sm:$0xf]
        %v4126 = vld [vmem:[#allocation8 + $0xa0] sm:$0xf]
        %v4127 = vld [vmem:[#allocation8 + $0xa4] sm:$0xf]
        %v4128 = vld [vmem:[#allocation8 + $0xa8] sm:$0xf]
        %v4129 = vld [vmem:[#allocation8 + $0xac] sm:$0xf]
        %v4130 = vld [vmem:[#allocation8 + $0xb0] sm:$0xf]
        %v4131 = vld [vmem:[#allocation8 + $0xb4] sm:$0xf]
        %v4132 = vld [vmem:[#allocation8 + $0xb8] sm:$0xf]
        %v4133 = vld [vmem:[#allocation8 + $0xbc] sm:$0xf]
        %v4134 = vld [vmem:[#allocation8 + $0xc0] sm:$0xf]
        %v4135 = vld [vmem:[#allocation8 + $0xc4] sm:$0xf]
        %v4136 = vld [vmem:[#allocation8 + $0xc8] sm:$0xf]
        %v4137 = vld [vmem:[#allocation8 + $0xcc] sm:$0xf]
        %v4138 = vld [vmem:[#allocation8 + $0xd0] sm:$0xf]
        %v4139 = vld [vmem:[#allocation8 + $0xd4] sm:$0xf]
        %v4140 = vld [vmem:[#allocation8 + $0xd8] sm:$0xf]
        %v4141 = vld [vmem:[#allocation8 + $0xdc] sm:$0xf]
        %v4142 = vld [vmem:[#allocation8 + $0xe0] sm:$0xf]
        %v4143 = vld [vmem:[#allocation8 + $0xe4] sm:$0xf]
        %v4144 = vld [vmem:[#allocation8 + $0xe8] sm:$0xf]
        %v4145 = vld [vmem:[#allocation8 + $0xec] sm:$0xf]
        %v4146 = vld [vmem:[#allocation8 + $0xf0] sm:$0xf]
        %v4147 = vld [vmem:[#allocation8 + $0xf4] sm:$0xf]
        %v4148 = vld [vmem:[#allocation8 + $0xf8] sm:$0xf]
        %v4149 = vld [vmem:[#allocation8 + $0xfc] sm:$0xf]
        %v4150 = vld [vmem:[#allocation8 + $0x100] sm:$0xf]
        %v4151 = vld [vmem:[#allocation8 + $0x104] sm:$0xf]
        %v4152 = vld [vmem:[#allocation8 + $0x108] sm:$0xf]
        %v4153 = vld [vmem:[#allocation8 + $0x10c] sm:$0xf]
        %v4154 = vld [vmem:[#allocation8 + $0x110] sm:$0xf]
        %v4155 = vld [vmem:[#allocation8 + $0x114] sm:$0xf]
        %v4156 = vld [vmem:[#allocation8 + $0x118] sm:$0xf]
        %v4157 = vld [vmem:[#allocation8 + $0x11c] sm:$0xf]
        %v4158 = vld [vmem:[#allocation8 + $0x120] sm:$0xf]
        %v4159 = vld [vmem:[#allocation8 + $0x124] sm:$0xf]
        %v4160 = vld [vmem:[#allocation8 + $0x128] sm:$0xf]
        %v4161 = vld [vmem:[#allocation8 + $0x12c] sm:$0xf]
        %v4162 = vld [vmem:[#allocation8 + $0x130] sm:$0xf]
        %v4163 = vld [vmem:[#allocation8 + $0x134] sm:$0xf]
        %v4164 = vld [vmem:[#allocation8 + $0x138] sm:$0xf]
        %v4165 = vld [vmem:[#allocation8 + $0x13c] sm:$0xf]
        %v4166 = vld [vmem:[%s4] sm:$0x1]
        %v4168 = vlaneseq
        %v4169 = vshrl.u32 %v4168, 7
        %v4170 = vsub.s32 0, %v4169
        %v4171 = vrot.slane %v4166, %v4170
        %v4253 = vunpack.c.l.b16 %v4086
        %v4254 = vunpack.c.l.b16 %v4087
        %v4255 = vunpack.c.l.b16 %v4088
        %v4256 = vunpack.c.l.b16 %v4089
        %v4257 = vunpack.c.l.b16 %v4090
        %v4258 = vunpack.c.l.b16 %v4091
        %v4259 = vunpack.c.l.b16 %v4092
        %v4260 = vunpack.c.l.b16 %v4093
        %v4261 = vunpack.c.l.b16 %v4094
        %v4262 = vunpack.c.l.b16 %v4095
        %v4263 = vunpack.c.l.b16 %v4096
        %v4264 = vunpack.c.l.b16 %v4097
        %v4265 = vunpack.c.l.b16 %v4098
        %v4266 = vunpack.c.l.b16 %v4099
        %v4267 = vunpack.c.l.b16 %v4100
        %v4268 = vunpack.c.l.b16 %v4101
        %v4269 = vunpack.c.l.b16 %v4102
        %v4270 = vunpack.c.l.b16 %v4103
        %v4271 = vunpack.c.l.b16 %v4104
        %v4272 = vunpack.c.l.b16 %v4105
        %v4273 = vunpack.c.l.b16 %v4106
        %v4274 = vunpack.c.l.b16 %v4107
        %v4275 = vunpack.c.l.b16 %v4108
        %v4276 = vunpack.c.l.b16 %v4109
        %v4277 = vunpack.c.l.b16 %v4110
        %v4278 = vunpack.c.l.b16 %v4111
        %v4279 = vunpack.c.l.b16 %v4112
        %v4280 = vunpack.c.l.b16 %v4113
        %v4281 = vunpack.c.l.b16 %v4114
        %v4282 = vunpack.c.l.b16 %v4115
        %v4283 = vunpack.c.l.b16 %v4116
        %v4284 = vunpack.c.l.b16 %v4117
        %v4285 = vunpack.c.l.b16 %v4118
        %v4286 = vunpack.c.l.b16 %v4119
        %v4287 = vunpack.c.l.b16 %v4120
        %v4288 = vunpack.c.l.b16 %v4121
        %v4289 = vunpack.c.l.b16 %v4122
        %v4290 = vunpack.c.l.b16 %v4123
        %v4291 = vunpack.c.l.b16 %v4124
        %v4292 = vunpack.c.l.b16 %v4125
        %v4293 = vunpack.c.l.b16 %v4126
        %v4294 = vunpack.c.l.b16 %v4127
        %v4295 = vunpack.c.l.b16 %v4128
        %v4296 = vunpack.c.l.b16 %v4129
        %v4297 = vunpack.c.l.b16 %v4130
        %v4298 = vunpack.c.l.b16 %v4131
        %v4299 = vunpack.c.l.b16 %v4132
        %v4300 = vunpack.c.l.b16 %v4133
        %v4301 = vunpack.c.l.b16 %v4134
        %v4302 = vunpack.c.l.b16 %v4135
        %v4303 = vunpack.c.l.b16 %v4136
        %v4304 = vunpack.c.l.b16 %v4137
        %v4305 = vunpack.c.l.b16 %v4138
        %v4306 = vunpack.c.l.b16 %v4139
        %v4307 = vunpack.c.l.b16 %v4140
        %v4308 = vunpack.c.l.b16 %v4141
        %v4309 = vunpack.c.l.b16 %v4142
        %v4310 = vunpack.c.l.b16 %v4143
        %v4311 = vunpack.c.l.b16 %v4144
        %v4312 = vunpack.c.l.b16 %v4145
        %v4313 = vunpack.c.l.b16 %v4146
        %v4314 = vunpack.c.l.b16 %v4147
        %v4315 = vunpack.c.l.b16 %v4148
        %v4316 = vunpack.c.l.b16 %v4149
        %v4317 = vunpack.c.l.b16 %v4150
        %v4318 = vunpack.c.l.b16 %v4151
        %v4319 = vunpack.c.l.b16 %v4152
        %v4320 = vunpack.c.l.b16 %v4153
        %v4321 = vunpack.c.l.b16 %v4154
        %v4322 = vunpack.c.l.b16 %v4155
        %v4323 = vunpack.c.l.b16 %v4156
        %v4324 = vunpack.c.l.b16 %v4157
        %v4325 = vunpack.c.l.b16 %v4158
        %v4326 = vunpack.c.l.b16 %v4159
        %v4327 = vunpack.c.l.b16 %v4160
        %v4328 = vunpack.c.l.b16 %v4161
        %v4329 = vunpack.c.l.b16 %v4162
        %v4330 = vunpack.c.l.b16 %v4163
        %v4331 = vunpack.c.l.b16 %v4164
        %v4332 = vunpack.c.l.b16 %v4165
        %v4333 = vpack.c.b16 %v4254, %v4253
        %v4334 = vpack.c.b16 %v4256, %v4255
        %v4335 = vpack.c.b16 %v4258, %v4257
        %v4336 = vpack.c.b16 %v4260, %v4259
        %v4337 = vpack.c.b16 %v4262, %v4261
        %v4338 = vpack.c.b16 %v4264, %v4263
        %v4339 = vpack.c.b16 %v4266, %v4265
        %v4340 = vpack.c.b16 %v4268, %v4267
        %v4341 = vpack.c.b16 %v4270, %v4269
        %v4342 = vpack.c.b16 %v4272, %v4271
        %v4343 = vpack.c.b16 %v4274, %v4273
        %v4344 = vpack.c.b16 %v4276, %v4275
        %v4345 = vpack.c.b16 %v4278, %v4277
        %v4346 = vpack.c.b16 %v4280, %v4279
        %v4347 = vpack.c.b16 %v4282, %v4281
        %v4348 = vpack.c.b16 %v4284, %v4283
        %v4349 = vpack.c.b16 %v4286, %v4285
        %v4350 = vpack.c.b16 %v4288, %v4287
        %v4351 = vpack.c.b16 %v4290, %v4289
        %v4352 = vpack.c.b16 %v4292, %v4291
        %v4353 = vpack.c.b16 %v4294, %v4293
        %v4354 = vpack.c.b16 %v4296, %v4295
        %v4355 = vpack.c.b16 %v4298, %v4297
        %v4356 = vpack.c.b16 %v4300, %v4299
        %v4357 = vpack.c.b16 %v4302, %v4301
        %v4358 = vpack.c.b16 %v4304, %v4303
        %v4359 = vpack.c.b16 %v4306, %v4305
        %v4360 = vpack.c.b16 %v4308, %v4307
        %v4361 = vpack.c.b16 %v4310, %v4309
        %v4362 = vpack.c.b16 %v4312, %v4311
        %v4363 = vpack.c.b16 %v4314, %v4313
        %v4364 = vpack.c.b16 %v4316, %v4315
        %v4365 = vpack.c.b16 %v4318, %v4317
        %v4366 = vpack.c.b16 %v4320, %v4319
        %v4367 = vpack.c.b16 %v4322, %v4321
        %v4368 = vpack.c.b16 %v4324, %v4323
        %v4369 = vpack.c.b16 %v4326, %v4325
        %v4370 = vpack.c.b16 %v4328, %v4327
        %v4371 = vpack.c.b16 %v4330, %v4329
        %v4372 = vpack.c.b16 %v4332, %v4331
        %4413 = vmatprep.subr.bf16.mxu0 0
        %4414 = vmatpush1.bf16.msra.mxu0 %v4340
        %4415 = vmatprep.subr.bf16.mxu0 0
        %4416 = vmatpush1.bf16.msra.mxu0 %v4339
        %4417 = vmatprep.subr.bf16.mxu0 0
        %4418 = vmatpush1.bf16.msra.mxu0 %v4338
        %4419 = vmatprep.subr.bf16.mxu0 0
        %4420 = vmatpush1.bf16.msra.mxu0 %v4337
        %4421 = vmatprep.subr.bf16.mxu0 0
        %4422 = vmatpush1.bf16.msra.mxu0 %v4336
        %4423 = vmatprep.subr.bf16.mxu0 0
        %4424 = vmatpush1.bf16.msra.mxu0 %v4335
        %4425 = vmatprep.subr.bf16.mxu0 0
        %4426 = vmatpush1.bf16.msra.mxu0 %v4334
        %4427 = vmatprep.subr.bf16.mxu0 0
        %4428 = vmatpush1.bf16.msra.mxu0 %v4333
        %4429 = vmatprep.subr.bf16.mxu0 0
        %4430 = vmatpush2.bf16.msra.mxu0 %v4348
        %4431 = vmatprep.subr.bf16.mxu0 0
        %4432 = vmatpush2.bf16.msra.mxu0 %v4347
        %4433 = vmatprep.subr.bf16.mxu0 0
        %4434 = vmatpush2.bf16.msra.mxu0 %v4346
        %4435 = vmatprep.subr.bf16.mxu0 0
        %4436 = vmatpush2.bf16.msra.mxu0 %v4345
        %4437 = vmatprep.subr.bf16.mxu0 0
        %4438 = vmatpush2.bf16.msra.mxu0 %v4344
        %4439 = vmatprep.subr.bf16.mxu0 0
        %4440 = vmatpush2.bf16.msra.mxu0 %v4343
        %4441 = vmatprep.subr.bf16.mxu0 0
        %4442 = vmatpush2.bf16.msra.mxu0 %v4342
        %4443 = vmatprep.subr.bf16.mxu0 0
        %4444 = vmatpush2.bf16.msra.mxu0 %v4341
        %4445 = vmatprep.mubr.bf16.mxu0 %v3860
        %4446 = vmatmul.mubr.bf16.gmra.mxu0 %v3796
        %v4447 = vpop.f32.mrf.mxu0
        %v4448 = vadd.f32 %v4171, %v4447
        %v4449 = vpop.f32.mrf.mxu0
        %v4450 = vpop.f32.mrf.mxu0
        %v4451 = vadd.f32 %v4171, %v4450
        %v4452 = vpop.f32.mrf.mxu0
        %4453 = vmatprep.mubr.bf16.mxu0 %v3861
        %4454 = vmatmul.mubr.bf16.gmra.mxu0 %v3797
        %v4455 = vpop.f32.mrf.mxu0
        %v4456 = vadd.f32 %v4171, %v4455
        %v4457 = vpop.f32.mrf.mxu0
        %v4458 = vpop.f32.mrf.mxu0
        %v4459 = vadd.f32 %v4171, %v4458
        %v4460 = vpop.f32.mrf.mxu0
        %4461 = vmatprep.mubr.bf16.mxu0 %v3862
        %4462 = vmatmul.mubr.bf16.gmra.mxu0 %v3798
        %v4463 = vpop.f32.mrf.mxu0
        %v4464 = vadd.f32 %v4171, %v4463
        %v4465 = vpop.f32.mrf.mxu0
        %v4466 = vpop.f32.mrf.mxu0
        %v4467 = vadd.f32 %v4171, %v4466
        %v4468 = vpop.f32.mrf.mxu0
        %4469 = vmatprep.mubr.bf16.mxu0 %v3863
        %4470 = vmatmul.mubr.bf16.gmra.mxu0 %v3799
        %v4471 = vpop.f32.mrf.mxu0
        %v4472 = vadd.f32 %v4171, %v4471
        %v4473 = vpop.f32.mrf.mxu0
        %v4474 = vpop.f32.mrf.mxu0
        %v4475 = vadd.f32 %v4171, %v4474
        %v4476 = vpop.f32.mrf.mxu0
        %4477 = vmatprep.mubr.bf16.mxu0 %v3864
        %4478 = vmatmul.mubr.bf16.gmra.mxu0 %v3800
        %v4479 = vpop.f32.mrf.mxu0
        %v4480 = vadd.f32 %v4171, %v4479
        %v4481 = vpop.f32.mrf.mxu0
        %v4482 = vpop.f32.mrf.mxu0
        %v4483 = vadd.f32 %v4171, %v4482
        %v4484 = vpop.f32.mrf.mxu0
        %4485 = vmatprep.mubr.bf16.mxu0 %v3865
        %4486 = vmatmul.mubr.bf16.gmra.mxu0 %v3801
        %v4487 = vpop.f32.mrf.mxu0
        %v4488 = vadd.f32 %v4171, %v4487
        %v4489 = vpop.f32.mrf.mxu0
        %v4490 = vpop.f32.mrf.mxu0
        %v4491 = vadd.f32 %v4171, %v4490
        %v4492 = vpop.f32.mrf.mxu0
        %4493 = vmatprep.mubr.bf16.mxu0 %v3866
        %4494 = vmatmul.mubr.bf16.gmra.mxu0 %v3802
        %v4495 = vpop.f32.mrf.mxu0
        %v4496 = vadd.f32 %v4171, %v4495
        %v4497 = vpop.f32.mrf.mxu0
        %v4498 = vpop.f32.mrf.mxu0
        %v4499 = vadd.f32 %v4171, %v4498
        %v4500 = vpop.f32.mrf.mxu0
        %4501 = vmatprep.mubr.bf16.mxu0 %v3867
        %4502 = vmatmul.mubr.bf16.gmra.mxu0 %v3803
        %v4503 = vpop.f32.mrf.mxu0
        %v4504 = vadd.f32 %v4171, %v4503
        %v4505 = vpop.f32.mrf.mxu0
        %v4506 = vpop.f32.mrf.mxu0
        %v4507 = vadd.f32 %v4171, %v4506
        %v4508 = vpop.f32.mrf.mxu0
        %4509 = vmatprep.mubr.bf16.mxu0 %v3868
        %4510 = vmatmul.mubr.bf16.gmra.mxu0 %v3804
        %v4511 = vpop.f32.mrf.mxu0
        %v4512 = vadd.f32 %v4171, %v4511
        %v4513 = vpop.f32.mrf.mxu0
        %v4514 = vpop.f32.mrf.mxu0
        %v4515 = vadd.f32 %v4171, %v4514
        %v4516 = vpop.f32.mrf.mxu0
        %4517 = vmatprep.mubr.bf16.mxu0 %v3869
        %4518 = vmatmul.mubr.bf16.gmra.mxu0 %v3805
        %v4519 = vpop.f32.mrf.mxu0
        %v4520 = vadd.f32 %v4171, %v4519
        %v4521 = vpop.f32.mrf.mxu0
        %v4522 = vpop.f32.mrf.mxu0
        %v4523 = vadd.f32 %v4171, %v4522
        %v4524 = vpop.f32.mrf.mxu0
        %4525 = vmatprep.mubr.bf16.mxu0 %v3870
        %4526 = vmatmul.mubr.bf16.gmra.mxu0 %v3806
        %v4527 = vpop.f32.mrf.mxu0
        %v4528 = vadd.f32 %v4171, %v4527
        %v4529 = vpop.f32.mrf.mxu0
        %v4530 = vpop.f32.mrf.mxu0
        %v4531 = vadd.f32 %v4171, %v4530
        %v4532 = vpop.f32.mrf.mxu0
        %4533 = vmatprep.mubr.bf16.mxu0 %v3871
        %4534 = vmatmul.mubr.bf16.gmra.mxu0 %v3807
        %v4535 = vpop.f32.mrf.mxu0
        %v4536 = vadd.f32 %v4171, %v4535
        %v4537 = vpop.f32.mrf.mxu0
        %v4538 = vpop.f32.mrf.mxu0
        %v4539 = vadd.f32 %v4171, %v4538
        %v4540 = vpop.f32.mrf.mxu0
        %4541 = vmatprep.mubr.bf16.mxu0 %v3872
        %4542 = vmatmul.mubr.bf16.gmra.mxu0 %v3808
        %v4543 = vpop.f32.mrf.mxu0
        %v4544 = vadd.f32 %v4171, %v4543
        %v4545 = vpop.f32.mrf.mxu0
        %v4546 = vpop.f32.mrf.mxu0
        %v4547 = vadd.f32 %v4171, %v4546
        %v4548 = vpop.f32.mrf.mxu0
        %4549 = vmatprep.mubr.bf16.mxu0 %v3873
        %4550 = vmatmul.mubr.bf16.gmra.mxu0 %v3809
        %v4551 = vpop.f32.mrf.mxu0
        %v4552 = vadd.f32 %v4171, %v4551
        %v4553 = vpop.f32.mrf.mxu0
        %v4554 = vpop.f32.mrf.mxu0
        %v4555 = vadd.f32 %v4171, %v4554
        %v4556 = vpop.f32.mrf.mxu0
        %4557 = vmatprep.mubr.bf16.mxu0 %v3874
        %4558 = vmatmul.mubr.bf16.gmra.mxu0 %v3810
        %v4559 = vpop.f32.mrf.mxu0
        %v4560 = vadd.f32 %v4171, %v4559
        %v4561 = vpop.f32.mrf.mxu0
        %v4562 = vpop.f32.mrf.mxu0
        %v4563 = vadd.f32 %v4171, %v4562
        %v4564 = vpop.f32.mrf.mxu0
        %4565 = vmatprep.mubr.bf16.mxu0 %v3875
        %4566 = vmatmul.mubr.bf16.gmra.mxu0 %v3811
        %v4567 = vpop.f32.mrf.mxu0
        %v4568 = vadd.f32 %v4171, %v4567
        %v4569 = vpop.f32.mrf.mxu0
        %v4570 = vpop.f32.mrf.mxu0
        %v4571 = vadd.f32 %v4171, %v4570
        %v4572 = vpop.f32.mrf.mxu0
        %4573 = vdwg.mxu0
        %4574 = vmatprep.subr.bf16.mxu0 0
        %4575 = vmatpush1.bf16.msra.mxu0 %v4356
        %4576 = vmatprep.subr.bf16.mxu0 0
        %4577 = vmatpush1.bf16.msra.mxu0 %v4355
        %4578 = vmatprep.subr.bf16.mxu0 0
        %4579 = vmatpush1.bf16.msra.mxu0 %v4354
        %4580 = vmatprep.subr.bf16.mxu0 0
        %4581 = vmatpush1.bf16.msra.mxu0 %v4353
        %4582 = vmatprep.subr.bf16.mxu0 0
        %4583 = vmatpush1.bf16.msra.mxu0 %v4352
        %4584 = vmatprep.subr.bf16.mxu0 0
        %4585 = vmatpush1.bf16.msra.mxu0 %v4351
        %4586 = vmatprep.subr.bf16.mxu0 0
        %4587 = vmatpush1.bf16.msra.mxu0 %v4350
        %4588 = vmatprep.subr.bf16.mxu0 0
        %4589 = vmatpush1.bf16.msra.mxu0 %v4349
        %4590 = vmatprep.subr.bf16.mxu0 0
        %4591 = vmatpush2.bf16.msra.mxu0 %v4364
        %4592 = vmatprep.subr.bf16.mxu0 0
        %4593 = vmatpush2.bf16.msra.mxu0 %v4363
        %4594 = vmatprep.subr.bf16.mxu0 0
        %4595 = vmatpush2.bf16.msra.mxu0 %v4362
        %4596 = vmatprep.subr.bf16.mxu0 0
        %4597 = vmatpush2.bf16.msra.mxu0 %v4361
        %4598 = vmatprep.subr.bf16.mxu0 0
        %4599 = vmatpush2.bf16.msra.mxu0 %v4360
        %4600 = vmatprep.subr.bf16.mxu0 0
        %4601 = vmatpush2.bf16.msra.mxu0 %v4359
        %4602 = vmatprep.subr.bf16.mxu0 0
        %4603 = vmatpush2.bf16.msra.mxu0 %v4358
        %4604 = vmatprep.subr.bf16.mxu0 0
        %4605 = vmatpush2.bf16.msra.mxu0 %v4357
        %4606 = vmatprep.mubr.bf16.mxu0 %v3990
        %4607 = vmatmul.mubr.bf16.gmra.mxu0 %v3926
        %v4608 = vpop.f32.mrf.mxu0
        %v4609 = vadd.f32 %v4448, %v4608
        %v4610 = vpop.f32.mrf.mxu0
        %v4611 = vpop.f32.mrf.mxu0
        %v4612 = vadd.f32 %v4451, %v4611
        %v4613 = vpop.f32.mrf.mxu0
        %4614 = vmatprep.mubr.bf16.mxu0 %v3991
        %4615 = vmatmul.mubr.bf16.gmra.mxu0 %v3927
        %v4616 = vpop.f32.mrf.mxu0
        %v4617 = vadd.f32 %v4456, %v4616
        %v4618 = vpop.f32.mrf.mxu0
        %v4619 = vpop.f32.mrf.mxu0
        %v4620 = vadd.f32 %v4459, %v4619
        %v4621 = vpop.f32.mrf.mxu0
        %4622 = vmatprep.mubr.bf16.mxu0 %v3992
        %4623 = vmatmul.mubr.bf16.gmra.mxu0 %v3928
        %v4624 = vpop.f32.mrf.mxu0
        %v4625 = vadd.f32 %v4464, %v4624
        %v4626 = vpop.f32.mrf.mxu0
        %v4627 = vpop.f32.mrf.mxu0
        %v4628 = vadd.f32 %v4467, %v4627
        %v4629 = vpop.f32.mrf.mxu0
        %4630 = vmatprep.mubr.bf16.mxu0 %v3993
        %4631 = vmatmul.mubr.bf16.gmra.mxu0 %v3929
        %v4632 = vpop.f32.mrf.mxu0
        %v4633 = vadd.f32 %v4472, %v4632
        %v4634 = vpop.f32.mrf.mxu0
        %v4635 = vpop.f32.mrf.mxu0
        %v4636 = vadd.f32 %v4475, %v4635
        %v4637 = vpop.f32.mrf.mxu0
        %4638 = vmatprep.mubr.bf16.mxu0 %v3994
        %4639 = vmatmul.mubr.bf16.gmra.mxu0 %v3930
        %v4640 = vpop.f32.mrf.mxu0
        %v4641 = vadd.f32 %v4480, %v4640
        %v4642 = vpop.f32.mrf.mxu0
        %v4643 = vpop.f32.mrf.mxu0
        %v4644 = vadd.f32 %v4483, %v4643
        %v4645 = vpop.f32.mrf.mxu0
        %4646 = vmatprep.mubr.bf16.mxu0 %v3995
        %4647 = vmatmul.mubr.bf16.gmra.mxu0 %v3931
        %v4648 = vpop.f32.mrf.mxu0
        %v4649 = vadd.f32 %v4488, %v4648
        %v4650 = vpop.f32.mrf.mxu0
        %v4651 = vpop.f32.mrf.mxu0
        %v4652 = vadd.f32 %v4491, %v4651
        %v4653 = vpop.f32.mrf.mxu0
        %4654 = vmatprep.mubr.bf16.mxu0 %v3996
        %4655 = vmatmul.mubr.bf16.gmra.mxu0 %v3932
        %v4656 = vpop.f32.mrf.mxu0
        %v4657 = vadd.f32 %v4496, %v4656
        %v4658 = vpop.f32.mrf.mxu0
        %v4659 = vpop.f32.mrf.mxu0
        %v4660 = vadd.f32 %v4499, %v4659
        %v4661 = vpop.f32.mrf.mxu0
        %4662 = vmatprep.mubr.bf16.mxu0 %v3997
        %4663 = vmatmul.mubr.bf16.gmra.mxu0 %v3933
        %v4664 = vpop.f32.mrf.mxu0
        %v4665 = vadd.f32 %v4504, %v4664
        %v4666 = vpop.f32.mrf.mxu0
        %v4667 = vpop.f32.mrf.mxu0
        %v4668 = vadd.f32 %v4507, %v4667
        %v4669 = vpop.f32.mrf.mxu0
        %4670 = vmatprep.mubr.bf16.mxu0 %v3998
        %4671 = vmatmul.mubr.bf16.gmra.mxu0 %v3934
        %v4672 = vpop.f32.mrf.mxu0
        %v4673 = vadd.f32 %v4512, %v4672
        %v4674 = vpop.f32.mrf.mxu0
        %v4675 = vpop.f32.mrf.mxu0
        %v4676 = vadd.f32 %v4515, %v4675
        %v4677 = vpop.f32.mrf.mxu0
        %4678 = vmatprep.mubr.bf16.mxu0 %v3999
        %4679 = vmatmul.mubr.bf16.gmra.mxu0 %v3935
        %v4680 = vpop.f32.mrf.mxu0
        %v4681 = vadd.f32 %v4520, %v4680
        %v4682 = vpop.f32.mrf.mxu0
        %v4683 = vpop.f32.mrf.mxu0
        %v4684 = vadd.f32 %v4523, %v4683
        %v4685 = vpop.f32.mrf.mxu0
        %4686 = vmatprep.mubr.bf16.mxu0 %v4000
        %4687 = vmatmul.mubr.bf16.gmra.mxu0 %v3936
        %v4688 = vpop.f32.mrf.mxu0
        %v4689 = vadd.f32 %v4528, %v4688
        %v4690 = vpop.f32.mrf.mxu0
        %v4691 = vpop.f32.mrf.mxu0
        %v4692 = vadd.f32 %v4531, %v4691
        %v4693 = vpop.f32.mrf.mxu0
        %4694 = vmatprep.mubr.bf16.mxu0 %v4001
        %4695 = vmatmul.mubr.bf16.gmra.mxu0 %v3937
        %v4696 = vpop.f32.mrf.mxu0
        %v4697 = vadd.f32 %v4536, %v4696
        %v4698 = vpop.f32.mrf.mxu0
        %v4699 = vpop.f32.mrf.mxu0
        %v4700 = vadd.f32 %v4539, %v4699
        %v4701 = vpop.f32.mrf.mxu0
        %4702 = vmatprep.mubr.bf16.mxu0 %v4002
        %4703 = vmatmul.mubr.bf16.gmra.mxu0 %v3938
        %v4704 = vpop.f32.mrf.mxu0
        %v4705 = vadd.f32 %v4544, %v4704
        %v4706 = vpop.f32.mrf.mxu0
        %v4707 = vpop.f32.mrf.mxu0
        %v4708 = vadd.f32 %v4547, %v4707
        %v4709 = vpop.f32.mrf.mxu0
        %4710 = vmatprep.mubr.bf16.mxu0 %v4003
        %4711 = vmatmul.mubr.bf16.gmra.mxu0 %v3939
        %v4712 = vpop.f32.mrf.mxu0
        %v4713 = vadd.f32 %v4552, %v4712
        %v4714 = vpop.f32.mrf.mxu0
        %v4715 = vpop.f32.mrf.mxu0
        %v4716 = vadd.f32 %v4555, %v4715
        %v4717 = vpop.f32.mrf.mxu0
        %4718 = vmatprep.mubr.bf16.mxu0 %v4004
        %4719 = vmatmul.mubr.bf16.gmra.mxu0 %v3940
        %v4720 = vpop.f32.mrf.mxu0
        %v4721 = vadd.f32 %v4560, %v4720
        %v4722 = vpop.f32.mrf.mxu0
        %v4723 = vpop.f32.mrf.mxu0
        %v4724 = vadd.f32 %v4563, %v4723
        %v4725 = vpop.f32.mrf.mxu0
        %4726 = vmatprep.mubr.bf16.mxu0 %v4005
        %4727 = vmatmul.mubr.bf16.gmra.mxu0 %v3941
        %v4728 = vpop.f32.mrf.mxu0
        %v4729 = vadd.f32 %v4568, %v4728
        %v4730 = vpop.f32.mrf.mxu0
        %v4731 = vpop.f32.mrf.mxu0
        %v4732 = vadd.f32 %v4571, %v4731
        %v4733 = vpop.f32.mrf.mxu0
        %4734 = vdwg.mxu0
        %4735 = vmatprep.subr.bf16.mxu0 0
        %4736 = vmatpush1.bf16.msra.mxu0 %v4372
        %4737 = vmatprep.subr.bf16.mxu0 0
        %4738 = vmatpush1.bf16.msra.mxu0 %v4371
        %4739 = vmatprep.subr.bf16.mxu0 0
        %4740 = vmatpush1.bf16.msra.mxu0 %v4370
        %4741 = vmatprep.subr.bf16.mxu0 0
        %4742 = vmatpush1.bf16.msra.mxu0 %v4369
        %4743 = vmatprep.subr.bf16.mxu0 0
        %4744 = vmatpush1.bf16.msra.mxu0 %v4368
        %4745 = vmatprep.subr.bf16.mxu0 0
        %4746 = vmatpush1.bf16.msra.mxu0 %v4367
        %4747 = vmatprep.subr.bf16.mxu0 0
        %4748 = vmatpush1.bf16.msra.mxu0 %v4366
        %4749 = vmatprep.subr.bf16.mxu0 0
        %4750 = vmatpush1.bf16.msra.mxu0 %v4365
        %4751 = vmatprep.subr.bf16.mxu0 0
        %4752 = vmatpush2.bf16.msra.mxu0 0
        %4753 = vmatprep.subr.bf16.mxu0 0
        %4754 = vmatpush2.bf16.msra.mxu0 0
        %4755 = vmatprep.subr.bf16.mxu0 0
        %4756 = vmatpush2.bf16.msra.mxu0 0
        %4757 = vmatprep.subr.bf16.mxu0 0
        %4758 = vmatpush2.bf16.msra.mxu0 0
        %4759 = vmatprep.subr.bf16.mxu0 0
        %4760 = vmatpush2.bf16.msra.mxu0 0
        %4761 = vmatprep.subr.bf16.mxu0 0
        %4762 = vmatpush2.bf16.msra.mxu0 0
        %4763 = vmatprep.subr.bf16.mxu0 0
        %4764 = vmatpush2.bf16.msra.mxu0 0
        %4765 = vmatprep.subr.bf16.mxu0 0
        %4766 = vmatpush2.bf16.msra.mxu0 0
        %4767 = vmatprep.mubr.bf16.mxu0 0
        %4768 = vmatmul.mubr.bf16.gmra.mxu0 %v4054
        %v4769 = vpop.f32.mrf.mxu0
        %v4770 = vadd.f32 %v4609, %v4769
        %v4771 = vpop.f32.mrf.mxu0
        %v4772 = vpop.f32.mrf.mxu0
        %v4773 = vadd.f32 %v4612, %v4772
        %v4774 = vpop.f32.mrf.mxu0
        %4775 = vmatprep.mubr.bf16.mxu0 0
        %4776 = vmatmul.mubr.bf16.gmra.mxu0 %v4055
        %v4777 = vpop.f32.mrf.mxu0
        %v4778 = vadd.f32 %v4617, %v4777
        %v4779 = vpop.f32.mrf.mxu0
        %v4780 = vpop.f32.mrf.mxu0
        %v4781 = vadd.f32 %v4620, %v4780
        %v4782 = vpop.f32.mrf.mxu0
        %4783 = vmatprep.mubr.bf16.mxu0 0
        %4784 = vmatmul.mubr.bf16.gmra.mxu0 %v4056
        %v4785 = vpop.f32.mrf.mxu0
        %v4786 = vadd.f32 %v4625, %v4785
        %v4787 = vpop.f32.mrf.mxu0
        %v4788 = vpop.f32.mrf.mxu0
        %v4789 = vadd.f32 %v4628, %v4788
        %v4790 = vpop.f32.mrf.mxu0
        %4791 = vmatprep.mubr.bf16.mxu0 0
        %4792 = vmatmul.mubr.bf16.gmra.mxu0 %v4057
        %v4793 = vpop.f32.mrf.mxu0
        %v4794 = vadd.f32 %v4633, %v4793
        %v4795 = vpop.f32.mrf.mxu0
        %v4796 = vpop.f32.mrf.mxu0
        %v4797 = vadd.f32 %v4636, %v4796
        %v4798 = vpop.f32.mrf.mxu0
        %4799 = vmatprep.mubr.bf16.mxu0 0
        %4800 = vmatmul.mubr.bf16.gmra.mxu0 %v4058
        %v4801 = vpop.f32.mrf.mxu0
        %v4802 = vadd.f32 %v4641, %v4801
        %v4803 = vpop.f32.mrf.mxu0
        %v4804 = vpop.f32.mrf.mxu0
        %v4805 = vadd.f32 %v4644, %v4804
        %v4806 = vpop.f32.mrf.mxu0
        %4807 = vmatprep.mubr.bf16.mxu0 0
        %4808 = vmatmul.mubr.bf16.gmra.mxu0 %v4059
        %v4809 = vpop.f32.mrf.mxu0
        %v4810 = vadd.f32 %v4649, %v4809
        %v4811 = vpop.f32.mrf.mxu0
        %v4812 = vpop.f32.mrf.mxu0
        %v4813 = vadd.f32 %v4652, %v4812
        %v4814 = vpop.f32.mrf.mxu0
        %4815 = vmatprep.mubr.bf16.mxu0 0
        %4816 = vmatmul.mubr.bf16.gmra.mxu0 %v4060
        %v4817 = vpop.f32.mrf.mxu0
        %v4818 = vadd.f32 %v4657, %v4817
        %v4819 = vpop.f32.mrf.mxu0
        %v4820 = vpop.f32.mrf.mxu0
        %v4821 = vadd.f32 %v4660, %v4820
        %v4822 = vpop.f32.mrf.mxu0
        %4823 = vmatprep.mubr.bf16.mxu0 0
        %4824 = vmatmul.mubr.bf16.gmra.mxu0 %v4061
        %v4825 = vpop.f32.mrf.mxu0
        %v4826 = vadd.f32 %v4665, %v4825
        %v4827 = vpop.f32.mrf.mxu0
        %v4828 = vpop.f32.mrf.mxu0
        %v4829 = vadd.f32 %v4668, %v4828
        %v4830 = vpop.f32.mrf.mxu0
        %4831 = vmatprep.mubr.bf16.mxu0 0
        %4832 = vmatmul.mubr.bf16.gmra.mxu0 %v4062
        %v4833 = vpop.f32.mrf.mxu0
        %v4834 = vadd.f32 %v4673, %v4833
        %v4835 = vpop.f32.mrf.mxu0
        %v4836 = vpop.f32.mrf.mxu0
        %v4837 = vadd.f32 %v4676, %v4836
        %v4838 = vpop.f32.mrf.mxu0
        %4839 = vmatprep.mubr.bf16.mxu0 0
        %4840 = vmatmul.mubr.bf16.gmra.mxu0 %v4063
        %v4841 = vpop.f32.mrf.mxu0
        %v4842 = vadd.f32 %v4681, %v4841
        %v4843 = vpop.f32.mrf.mxu0
        %v4844 = vpop.f32.mrf.mxu0
        %v4845 = vadd.f32 %v4684, %v4844
        %v4846 = vpop.f32.mrf.mxu0
        %4847 = vmatprep.mubr.bf16.mxu0 0
        %4848 = vmatmul.mubr.bf16.gmra.mxu0 %v4064
        %v4849 = vpop.f32.mrf.mxu0
        %v4850 = vadd.f32 %v4689, %v4849
        %v4851 = vpop.f32.mrf.mxu0
        %v4852 = vpop.f32.mrf.mxu0
        %v4853 = vadd.f32 %v4692, %v4852
        %v4854 = vpop.f32.mrf.mxu0
        %4855 = vmatprep.mubr.bf16.mxu0 0
        %4856 = vmatmul.mubr.bf16.gmra.mxu0 %v4065
        %v4857 = vpop.f32.mrf.mxu0
        %v4858 = vadd.f32 %v4697, %v4857
        %v4859 = vpop.f32.mrf.mxu0
        %v4860 = vpop.f32.mrf.mxu0
        %v4861 = vadd.f32 %v4700, %v4860
        %v4862 = vpop.f32.mrf.mxu0
        %4863 = vmatprep.mubr.bf16.mxu0 0
        %4864 = vmatmul.mubr.bf16.gmra.mxu0 %v4066
        %v4865 = vpop.f32.mrf.mxu0
        %v4866 = vadd.f32 %v4705, %v4865
        %v4867 = vpop.f32.mrf.mxu0
        %v4868 = vpop.f32.mrf.mxu0
        %v4869 = vadd.f32 %v4708, %v4868
        %v4870 = vpop.f32.mrf.mxu0
        %4871 = vmatprep.mubr.bf16.mxu0 0
        %4872 = vmatmul.mubr.bf16.gmra.mxu0 %v4067
        %v4873 = vpop.f32.mrf.mxu0
        %v4874 = vadd.f32 %v4713, %v4873
        %v4875 = vpop.f32.mrf.mxu0
        %v4876 = vpop.f32.mrf.mxu0
        %v4877 = vadd.f32 %v4716, %v4876
        %v4878 = vpop.f32.mrf.mxu0
        %4879 = vmatprep.mubr.bf16.mxu0 0
        %4880 = vmatmul.mubr.bf16.gmra.mxu0 %v4068
        %v4881 = vpop.f32.mrf.mxu0
        %v4882 = vadd.f32 %v4721, %v4881
        %v4883 = vpop.f32.mrf.mxu0
        %v4884 = vpop.f32.mrf.mxu0
        %v4885 = vadd.f32 %v4724, %v4884
        %v4886 = vpop.f32.mrf.mxu0
        %4887 = vmatprep.mubr.bf16.mxu0 0
        %4888 = vmatmul.mubr.bf16.gmra.mxu0 %v4069
        %v4889 = vpop.f32.mrf.mxu0
        %v4890 = vadd.f32 %v4729, %v4889
        %v4891 = vpop.f32.mrf.mxu0
        %v4892 = vpop.f32.mrf.mxu0
        %v4893 = vadd.f32 %v4732, %v4892
        %v4894 = vpop.f32.mrf.mxu0
        %4895 = vdwg.mxu0
        %v4896 = vld [vmem:[%s238] sm:$0xff]
        %v4897 = vld [vmem:[%s238 + $0x8] sm:$0xff]
        %v4898 = vld [vmem:[%s238 + $0x10] sm:$0xff]
        %v4899 = vld [vmem:[%s238 + $0x18] sm:$0xff]
        %v4900 = vld [vmem:[%s238 + $0x20] sm:$0xff]
        %v4901 = vld [vmem:[%s238 + $0x28] sm:$0xff]
        %v4902 = vld [vmem:[%s238 + $0x30] sm:$0xff]
        %v4903 = vld [vmem:[%s238 + $0x38] sm:$0xff]
        %v4904 = vld [vmem:[%s238 + $0x40] sm:$0xff]
        %v4905 = vld [vmem:[%s238 + $0x48] sm:$0xff]
        %v4906 = vld [vmem:[%s238 + $0x50] sm:$0xff]
        %v4907 = vld [vmem:[%s238 + $0x58] sm:$0xff]
        %v4908 = vld [vmem:[%s238 + $0x60] sm:$0xff]
        %v4909 = vld [vmem:[%s238 + $0x68] sm:$0xff]
        %v4910 = vld [vmem:[%s238 + $0x70] sm:$0xff]
        %v4911 = vld [vmem:[%s238 + $0x78] sm:$0xff]
        %v4912 = vld [vmem:[%s238 + $0x80] sm:$0xff]
        %v4913 = vld [vmem:[%s238 + $0x88] sm:$0xff]
        %v4914 = vld [vmem:[%s238 + $0x90] sm:$0xff]
        %v4915 = vld [vmem:[%s238 + $0x98] sm:$0xff]
        %v4916 = vld [vmem:[%s238 + $0xa0] sm:$0xff]
        %v4917 = vld [vmem:[%s238 + $0xa8] sm:$0xff]
        %v4918 = vld [vmem:[%s238 + $0xb0] sm:$0xff]
        %v4919 = vld [vmem:[%s238 + $0xb8] sm:$0xff]
        %v4920 = vld [vmem:[%s238 + $0xc0] sm:$0xff]
        %v4921 = vld [vmem:[%s238 + $0xc8] sm:$0xff]
        %v4922 = vld [vmem:[%s238 + $0xd0] sm:$0xff]
        %v4923 = vld [vmem:[%s238 + $0xd8] sm:$0xff]
        %v4924 = vld [vmem:[%s238 + $0xe0] sm:$0xff]
        %v4925 = vld [vmem:[%s238 + $0xe8] sm:$0xff]
        %v4926 = vld [vmem:[%s238 + $0xf0] sm:$0xff]
        %v4927 = vld [vmem:[%s238 + $0xf8] sm:$0xff]
        %v4928 = vmul.f32 %v4770, 0.3
        %v4929 = vmul.f32 %v4773, 0.3
        %v4930 = vmul.f32 %v4778, 0.3
        %v4931 = vmul.f32 %v4781, 0.3
        %v4932 = vmul.f32 %v4786, 0.3
        %v4933 = vmul.f32 %v4789, 0.3
        %v4934 = vmul.f32 %v4794, 0.3
        %v4935 = vmul.f32 %v4797, 0.3
        %v4936 = vmul.f32 %v4802, 0.3
        %v4937 = vmul.f32 %v4805, 0.3
        %v4938 = vmul.f32 %v4810, 0.3
        %v4939 = vmul.f32 %v4813, 0.3
        %v4940 = vmul.f32 %v4818, 0.3
        %v4941 = vmul.f32 %v4821, 0.3
        %v4942 = vmul.f32 %v4826, 0.3
        %v4943 = vmul.f32 %v4829, 0.3
        %v4944 = vmul.f32 %v4834, 0.3
        %v4945 = vmul.f32 %v4837, 0.3
        %v4946 = vmul.f32 %v4842, 0.3
        %v4947 = vmul.f32 %v4845, 0.3
        %v4948 = vmul.f32 %v4850, 0.3
        %v4949 = vmul.f32 %v4853, 0.3
        %v4950 = vmul.f32 %v4858, 0.3
        %v4951 = vmul.f32 %v4861, 0.3
        %v4952 = vmul.f32 %v4866, 0.3
        %v4953 = vmul.f32 %v4869, 0.3
        %v4954 = vmul.f32 %v4874, 0.3
        %v4955 = vmul.f32 %v4877, 0.3
        %v4956 = vmul.f32 %v4882, 0.3
        %v4957 = vmul.f32 %v4885, 0.3
        %v4958 = vmul.f32 %v4890, 0.3
        %v4959 = vmul.f32 %v4893, 0.3
        %v4960 = vadd.f32 %v4896, %v4928
        %v4961 = vadd.f32 %v4897, %v4929
        %v4962 = vadd.f32 %v4898, %v4930
        %v4963 = vadd.f32 %v4899, %v4931
        %v4964 = vadd.f32 %v4900, %v4932
        %v4965 = vadd.f32 %v4901, %v4933
        %v4966 = vadd.f32 %v4902, %v4934
        %v4967 = vadd.f32 %v4903, %v4935
        %v4968 = vadd.f32 %v4904, %v4936
        %v4969 = vadd.f32 %v4905, %v4937
        %v4970 = vadd.f32 %v4906, %v4938
        %v4971 = vadd.f32 %v4907, %v4939
        %v4972 = vadd.f32 %v4908, %v4940
        %v4973 = vadd.f32 %v4909, %v4941
        %v4974 = vadd.f32 %v4910, %v4942
        %v4975 = vadd.f32 %v4911, %v4943
        %v4976 = vadd.f32 %v4912, %v4944
        %v4977 = vadd.f32 %v4913, %v4945
        %v4978 = vadd.f32 %v4914, %v4946
        %v4979 = vadd.f32 %v4915, %v4947
        %v4980 = vadd.f32 %v4916, %v4948
        %v4981 = vadd.f32 %v4917, %v4949
        %v4982 = vadd.f32 %v4918, %v4950
        %v4983 = vadd.f32 %v4919, %v4951
        %v4984 = vadd.f32 %v4920, %v4952
        %v4985 = vadd.f32 %v4921, %v4953
        %v4986 = vadd.f32 %v4922, %v4954
        %v4987 = vadd.f32 %v4923, %v4955
        %v4988 = vadd.f32 %v4924, %v4956
        %v4989 = vadd.f32 %v4925, %v4957
        %v4990 = vadd.f32 %v4926, %v4958
        %v4991 = vadd.f32 %v4927, %v4959
        %4992 = vst [vmem:[%s272] sm:$0xff] %v4960
        %4993 = vst [vmem:[%s272 + $0x8] sm:$0xff] %v4961
        %4994 = vst [vmem:[%s272 + $0x10] sm:$0xff] %v4962
        %4995 = vst [vmem:[%s272 + $0x18] sm:$0xff] %v4963
        %4996 = vst [vmem:[%s272 + $0x20] sm:$0xff] %v4964
        %4997 = vst [vmem:[%s272 + $0x28] sm:$0xff] %v4965
        %4998 = vst [vmem:[%s272 + $0x30] sm:$0xff] %v4966
        %4999 = vst [vmem:[%s272 + $0x38] sm:$0xff] %v4967
        %5000 = vst [vmem:[%s272 + $0x40] sm:$0xff] %v4968
        %5001 = vst [vmem:[%s272 + $0x48] sm:$0xff] %v4969
        %5002 = vst [vmem:[%s272 + $0x50] sm:$0xff] %v4970
        %5003 = vst [vmem:[%s272 + $0x58] sm:$0xff] %v4971
        %5004 = vst [vmem:[%s272 + $0x60] sm:$0xff] %v4972
        %5005 = vst [vmem:[%s272 + $0x68] sm:$0xff] %v4973
        %5006 = vst [vmem:[%s272 + $0x70] sm:$0xff] %v4974
        %5007 = vst [vmem:[%s272 + $0x78] sm:$0xff] %v4975
        %5008 = vst [vmem:[%s272 + $0x80] sm:$0xff] %v4976
        %5009 = vst [vmem:[%s272 + $0x88] sm:$0xff] %v4977
        %5010 = vst [vmem:[%s272 + $0x90] sm:$0xff] %v4978
        %5011 = vst [vmem:[%s272 + $0x98] sm:$0xff] %v4979
        %5012 = vst [vmem:[%s272 + $0xa0] sm:$0xff] %v4980
        %5013 = vst [vmem:[%s272 + $0xa8] sm:$0xff] %v4981
        %5014 = vst [vmem:[%s272 + $0xb0] sm:$0xff] %v4982
        %5015 = vst [vmem:[%s272 + $0xb8] sm:$0xff] %v4983
        %5016 = vst [vmem:[%s272 + $0xc0] sm:$0xff] %v4984
        %5017 = vst [vmem:[%s272 + $0xc8] sm:$0xff] %v4985
        %5018 = vst [vmem:[%s272 + $0xd0] sm:$0xff] %v4986
        %5019 = vst [vmem:[%s272 + $0xd8] sm:$0xff] %v4987
        %5020 = vst [vmem:[%s272 + $0xe0] sm:$0xff] %v4988
        %5021 = vst [vmem:[%s272 + $0xe8] sm:$0xff] %v4989
        %5022 = vst [vmem:[%s272 + $0xf0] sm:$0xff] %v4990
        %5023 = vst [vmem:[%s272 + $0xf8] sm:$0xff] %v4991
        %s5024 = sand.u32 %s141, 1
        %s5025 = scalar_lea.sflag [#allocation5], %s5024
        %s5026 = sand.u32 %s141, 1
        %s5027 = smul.addr %s5026, 256
        %s5028 = scalar_lea.vmem [#allocation9], %s5027
        // Predicated region
        $region57: #{tpu_custom_call.1} parent=39 // pred_check
          %p5029 = pneg %p151
        $region58: #{tpu_custom_call.1} parent=39 // pred_check_branch
          %5031 = sbr.rel (%p5029) target = $region60
        $region59: #{tpu_custom_call.1} parent=39 // pred_region
          %s5032 = smul.u32 2, %s23
          %s5034 = ssub.s32 4096, 4096
          %5035 = vsyncadd %s5025, %s5034
          %s5036 = smul.addr %s5032, 16
          %s5037 = smul.addr %s5036, 128
          %s5038 = scalar_lea.hbm %s5, %s5037
          %s5039 = sshll.u32 %s5028, 4
          %s5040 = int_to_ptr.vmem [resolvable:$true] %s5039
          %5045 = dma.vmem_to_hbm [thread:$0]  %s5040, 4096, %s5038, %s5025, 128, 128, 8
        $region60: #{tpu_custom_call.1} parent=39 // pred_fallthru
          _
      $region40: #{tpu_custom_call.1} parent=5 // pred_fallthru
        _
      %p5046 = scmp.le.s32.totalorder 2, %s18
      // Predicated region
      $region61: #{tpu_custom_call.1} parent=5 // pred_check
        %p5047 = pneg %p5046
      $region62: #{tpu_custom_call.1} parent=5 // pred_check_branch
        %5049 = sbr.rel (%p5047) target = $region64
      $region63: #{tpu_custom_call.1} parent=5 // pred_region
        %s5050 = ssub.s32 %s18, 2
        // Predicated region
        $region65: #{tpu_custom_call.1} parent=63 // pred_check
          %p5051 = pneg %p157
        $region66: #{tpu_custom_call.1} parent=63 // pred_check_branch
          %5053 = sbr.rel (%p5051) target = $region68
        $region67: #{tpu_custom_call.1} parent=63 // pred_region
          %s5054 = sand.u32 %s142, 1
          %s5055 = scalar_lea.sflag [#allocation5], %s5054
          %s5056 = sand.u32 %s142, 1
          %s5057 = smul.addr %s5056, 256
          %s5058 = scalar_lea.vmem [#allocation9], %s5057
          %5059 = dma.done %s5055, 4096
        $region68: #{tpu_custom_call.1} parent=63 // pred_fallthru
          _
      $region64: #{tpu_custom_call.1} parent=5 // pred_fallthru
        _
    $region6: #{tpu_custom_call.1} parent=1 // loop_footer
      %s22 = sadd.s32 1, %s18
    $region7: #{tpu_custom_call.1} parent=1 // loop_footer_branch
      %17 = sbr.rel target = $region3
    $region8: #{tpu_custom_call.1} parent=1 // loop_exit
      _
    %5060 = vsyncpa [#allocation4], 1
    %s5061 = scalar_lea.sflag [#allocation4], 1
    %5062 = vsyncpa %s5061, 1
    %5063 = vsyncpa [#allocation7], 1
    %5064 = vsyncpa [#allocation5], 1
    %s5065 = scalar_lea.sflag [#allocation5], 1
    %5066 = vsyncpa %s5065, 1

</llo_original>
